<compile_context>
chip_gen: v7x
topology: tpu7x:2x2x1
jax: 0.10.0
libtpu: 0.0.40
codegen_flags: <defaults>
</compile_context>

<pallas_src>
import functools

import jax
import jax.numpy as jnp
from jax.experimental import pallas as pl
from jax.experimental.pallas import tpu as pltpu


# --------------------------- fused LSTM + FC kernel ---------------------------
def _fused_lstm_fc_kernel(L, T, B, M, *refs):
    """All layers, all time steps, and the FC head in one kernel; state in VMEM."""
    if L > 1:
        (proj0_ref, w_hh_ref, w_ih_rest_ref, b_rest_ref,
         fc_w_ref, fc_b_ref, out_ref, ybuf, h_sc, c_sc) = refs
    else:
        (proj0_ref, w_hh_ref, fc_w_ref, fc_b_ref,
         out_ref, ybuf, h_sc, c_sc) = refs
        w_ih_rest_ref = b_rest_ref = None

    G = 4 * M
    # Full-width gate activation: tanh on the g-gate lanes, sigmoid elsewhere,
    # selected with an iota mask (2 EUP passes at 100% lane occupancy instead of
    # four 32-lane passes).
    lane = jax.lax.broadcasted_iota(jnp.int32, (B, G), 1)
    g_lane = (lane >= 2 * M) & (lane < 3 * M)

    def cell(gates, c):
        act = jnp.where(g_lane, jnp.tanh(gates), jax.nn.sigmoid(gates))
        i_g = act[:, 0 * M:1 * M]
        f_g = act[:, 1 * M:2 * M]
        g_g = act[:, 2 * M:3 * M]
        o_g = act[:, 3 * M:4 * M]
        c_new = f_g * c + i_g * g_g
        h_new = o_g * jnp.tanh(c_new)
        return h_new, c_new

    for layer in range(L):                        # static, small
        h_sc[...] = jnp.zeros_like(h_sc)
        c_sc[...] = jnp.zeros_like(c_sc)
        w_hh = w_hh_ref[layer]                    # (M, 4M), static index
        if layer > 0:
            w_ih = w_ih_rest_ref[layer - 1]       # (M, 4M)
            b_l = b_rest_ref[layer - 1]           # (1, 4M)
        is_last = layer == L - 1

        def step(t, carry):
            h = h_sc[...]
            c = c_sc[...]
            if layer == 0:
                # Input projection for layer 0 was hoisted out of the kernel.
                gates = proj0_ref[t] + jnp.dot(
                    h, w_hh, preferred_element_type=jnp.float32)
            else:
                gates = (
                    jnp.dot(ybuf[t], w_ih, preferred_element_type=jnp.float32)
                    + b_l
                    + jnp.dot(h, w_hh, preferred_element_type=jnp.float32))
            h_new, c_new = cell(gates, c)
            h_sc[...] = h_new
            c_sc[...] = c_new
            if not is_last:
                ybuf[t] = h_new                   # stays in VMEM for the next layer
            return carry

        jax.lax.fori_loop(0, T, step, 0, unroll=True)

    # FC head on the last hidden state of the last layer, fused into the kernel.
    out_ref[...] = (
        jnp.dot(h_sc[...], fc_w_ref[...], preferred_element_type=jnp.float32)
        + fc_b_ref[...]
    ).astype(out_ref.dtype)


def _fused_lstm_fc(proj0, w_hh, w_ih_rest, b_rest, fc_w, fc_b):
    """proj0: (T, B, 4M) precomputed layer-0 gates projection; returns (B, K)."""
    T, B, G = proj0.shape
    M = G // 4
    L = w_hh.shape[0]
    K = fc_w.shape[1]

    args = [proj0, w_hh]
    in_specs = [
        pl.BlockSpec(proj0.shape, lambda: (0, 0, 0)),
        pl.BlockSpec(w_hh.shape, lambda: (0, 0, 0)),
    ]
    if L > 1:
        args += [w_ih_rest, b_rest]
        in_specs += [
            pl.BlockSpec(w_ih_rest.shape, lambda: (0, 0, 0)),
            pl.BlockSpec(b_rest.shape, lambda: (0, 0, 0)),
        ]
    args += [fc_w, fc_b]
    in_specs += [
        pl.BlockSpec(fc_w.shape, lambda: (0, 0)),
        pl.BlockSpec(fc_b.shape, lambda: (0, 0)),
    ]

    kernel = functools.partial(_fused_lstm_fc_kernel, L, T, B, M)
    return pl.pallas_call(
        kernel,
        out_shape=jax.ShapeDtypeStruct((B, K), jnp.float32),
        in_specs=in_specs,
        out_specs=pl.BlockSpec((B, K), lambda: (0, 0)),
        scratch_shapes=[
            pltpu.VMEM((T, B, M), jnp.float32),   # inter-layer activations (never hit HBM)
            pltpu.VMEM((B, M), jnp.float32),      # h
            pltpu.VMEM((B, M), jnp.float32),      # c
        ],
    )(*args)


# --------------------------------- Full model ---------------------------------
def init_params(key, n_inputs, n_hidden, n_rnnlayers, n_outputs):
    """Deterministic synthetic parameters (same shapes as nn.LSTM + nn.Linear)."""
    params = {"layers": []}
    scale = 1.0 / jnp.sqrt(jnp.float32(n_hidden))
    for layer in range(n_rnnlayers):
        din = n_inputs if layer == 0 else n_hidden
        key, k1, k2, k3, k4 = jax.random.split(key, 5)
        # Stored pre-transposed as (in, 4M) for x @ W; bias = b_ih + b_hh folded.
        w_ih = jax.random.uniform(k1, (din, 4 * n_hidden), jnp.float32, -scale, scale)
        w_hh = jax.random.uniform(k2, (n_hidden, 4 * n_hidden), jnp.float32, -scale, scale)
        b_ih = jax.random.uniform(k3, (1, 4 * n_hidden), jnp.float32, -scale, scale)
        b_hh = jax.random.uniform(k4, (1, 4 * n_hidden), jnp.float32, -scale, scale)
        params["layers"].append({"w_ih": w_ih, "w_hh": w_hh, "b": b_ih + b_hh})
    key, k5, k6 = jax.random.split(key, 3)
    params["fc_w"] = jax.random.uniform(k5, (n_hidden, n_outputs), jnp.float32, -scale, scale)
    params["fc_b"] = jax.random.uniform(k6, (1, n_outputs), jnp.float32, -scale, scale)
    return params


@jax.jit
def rnn_forward(params, x_btd):
    """Equivalent of RNN.forward: LSTM over the sequence, fc on the last step."""
    layers = params["layers"]
    L = len(layers)
    # Hoisted full-sequence layer-0 input projection, fused with the
    # batch-first -> time-major transpose: one MXU-efficient (B*T, D)@(D, 4M) matmul
    # instead of T tiny per-step matmuls and per-step W_ih/X DMAs.
    proj0 = jnp.einsum(
        "btd,dg->tbg", x_btd, layers[0]["w_ih"],
        preferred_element_type=jnp.float32) + layers[0]["b"]          # (T, B, 4M)
    w_hh = jnp.stack([lyr["w_hh"] for lyr in layers])                  # (L, M, 4M)
    if L > 1:
        w_ih_rest = jnp.stack([lyr["w_ih"] for lyr in layers[1:]])     # (L-1, M, 4M)
        b_rest = jnp.stack([lyr["b"] for lyr in layers[1:]])           # (L-1, 1, 4M)
    else:
        w_ih_rest = b_rest = None
    return _fused_lstm_fc(proj0, w_hh, w_ih_rest, b_rest,
                          params["fc_w"], params["fc_b"])


# Pure-JAX reference for validation (same math, lax.scan).
def rnn_forward_ref(params, x_btd):
    x = jnp.transpose(x_btd, (1, 0, 2))
    for lyr in params["layers"]:
        M = lyr["w_hh"].shape[0]
        B = x.shape[1]

        def step(carry, xt):
            h, c = carry
            g = xt @ lyr["w_ih"] + h @ lyr["w_hh"] + lyr["b"]
            i = jax.nn.sigmoid(g[:, 0 * M:1 * M])
            f = jax.nn.sigmoid(g[:, 1 * M:2 * M])
            gg = jnp.tanh(g[:, 2 * M:3 * M])
            o = jax.nn.sigmoid(g[:, 3 * M:4 * M])
            c = f * c + i * gg
            h = o * jnp.tanh(c)
            return (h, c), h

        init = (jnp.zeros((B, M), jnp.float32), jnp.zeros((B, M), jnp.float32))
        _, ys = jax.lax.scan(step, init, x)
        x = ys
    return x[-1] @ params["fc_w"] + params["fc_b"]


if __name__ == "__main__":
    # Small shapes implied by the module: X is (batch, seq, n_inputs).
    B, T, D, M, L, K = 2, 8, 10, 32, 2, 4

    key = jax.random.PRNGKey(0)
    key, kx = jax.random.split(key)
    x = jax.random.normal(kx, (B, T, D), jnp.float32)
    params = init_params(key, D, M, L, K)

    out = jax.block_until_ready(rnn_forward(params, x))
    ref = rnn_forward_ref(params, x)
    assert out.shape == (B, K)
    assert jnp.allclose(out, ref, atol=5e-4, rtol=5e-4), float(jnp.max(jnp.abs(out - ref)))

    print("KERNEL_OK")
</pallas_src>

<mosaic_0001>
module attributes {stable_mosaic.version = 11 : i64} {
  func.func @_fused_lstm_fc_kernel(%arg0: memref<8x2x128xf32, #tpu.memory_space<vmem>>, %arg1: memref<2x32x128xf32, #tpu.memory_space<vmem>>, %arg2: memref<1x32x128xf32, #tpu.memory_space<vmem>>, %arg3: memref<1x1x128xf32, #tpu.memory_space<vmem>>, %arg4: memref<32x4xf32, #tpu.memory_space<vmem>>, %arg5: memref<1x4xf32, #tpu.memory_space<vmem>>, %arg6: memref<2x4xf32, #tpu.memory_space<vmem>>, %arg7: memref<8x2x32xf32, #tpu.memory_space<vmem>>, %arg8: memref<2x32xf32, #tpu.memory_space<vmem>>, %arg9: memref<2x32xf32, #tpu.memory_space<vmem>>) attributes {dimension_semantics = [], scalar_prefetch = 0 : i64, scratch_operands = 3 : i64, tpu.core_type = #tpu.core_type<tc>} {
    %0 = tpu.iota {dimensions = array<i32: 1>} : vector<2x128xi32>
    %c64_i32 = arith.constant 64 : i32
    %1 = vector.broadcast %c64_i32 : i32 to vector<2x128xi32>
    %2 = arith.cmpi sge, %0, %1 : vector<2x128xi32>
    %c96_i32 = arith.constant 96 : i32
    %3 = vector.broadcast %c96_i32 : i32 to vector<2x128xi32>
    %4 = arith.cmpi slt, %0, %3 : vector<2x128xi32>
    %5 = arith.andi %2, %4 : vector<2x128xi1>
    %cst = arith.constant 0.000000e+00 : f32
    %6 = vector.broadcast %cst : f32 to vector<2x32xf32>
    %c0 = arith.constant 0 : index
    %c0_0 = arith.constant 0 : index
    %7 = vector.load %arg8[%c0, %c0_0] : memref<2x32xf32, #tpu.memory_space<vmem>>, vector<2x32xf32>
    tpu.vector_store %arg8[%c0, %c0_0], %6 {strides = array<i32>} : memref<2x32xf32, #tpu.memory_space<vmem>>, vector<2x32xf32>,
    %cst_1 = arith.constant 0.000000e+00 : f32
    %8 = vector.broadcast %cst_1 : f32 to vector<2x32xf32>
    %c0_2 = arith.constant 0 : index
    %c0_3 = arith.constant 0 : index
    %9 = vector.load %arg9[%c0_2, %c0_3] : memref<2x32xf32, #tpu.memory_space<vmem>>, vector<2x32xf32>
    tpu.vector_store %arg9[%c0_2, %c0_3], %8 {strides = array<i32>} : memref<2x32xf32, #tpu.memory_space<vmem>>, vector<2x32xf32>,
    %c0_4 = arith.constant 0 : index
    %c0_5 = arith.constant 0 : index
    %c0_6 = arith.constant 0 : index
    %10 = vector.load %arg1[%c0_4, %c0_5, %c0_6] : memref<2x32x128xf32, #tpu.memory_space<vmem>>, vector<1x32x128xf32>
    %11 = vector.shape_cast %10 : vector<1x32x128xf32> to vector<32x128xf32>
    %c0_i32 = arith.constant 0 : i32
    %c0_7 = arith.constant 0 : index
    %c0_8 = arith.constant 0 : index
    %12 = vector.load %arg8[%c0_7, %c0_8] : memref<2x32xf32, #tpu.memory_space<vmem>>, vector<2x32xf32>
    %c0_9 = arith.constant 0 : index
    %c0_10 = arith.constant 0 : index
    %13 = vector.load %arg9[%c0_9, %c0_10] : memref<2x32xf32, #tpu.memory_space<vmem>>, vector<2x32xf32>
    %14 = arith.index_cast %c0_i32 : i32 to index
    %c0_11 = arith.constant 0 : index
    %c0_12 = arith.constant 0 : index
    %15 = vector.load %arg0[%14, %c0_11, %c0_12] : memref<8x2x128xf32, #tpu.memory_space<vmem>>, vector<1x2x128xf32>
    %16 = vector.shape_cast %15 : vector<1x2x128xf32> to vector<2x128xf32>
    %cst_13 = arith.constant dense<0.000000e+00> : vector<2x128xf32>
    %17 = tpu.matmul %12, %11, %cst_13 {dimension_numbers = #tpu.dot_dimension_numbers<[1], [0], [0], [1], [0, 0, 1, 1], [], []>} : vector<2x32xf32>, vector<32x128xf32>, vector<2x128xf32> -> vector<2x128xf32>
    %18 = arith.addf %16, %17 : vector<2x128xf32>
    %19 = math.tanh %18 : vector<2x128xf32>
    %20 = arith.negf %18 : vector<2x128xf32>
    %21 = math.exp %20 : vector<2x128xf32>
    %cst_14 = arith.constant 1.000000e+00 : f32
    %22 = vector.broadcast %cst_14 : f32 to vector<2x128xf32>
    %23 = arith.addf %22, %21 : vector<2x128xf32>
    %24 = arith.divf %22, %23 : vector<2x128xf32>
    %25 = arith.select %5, %19, %24 : vector<2x128xi1>, vector<2x128xf32>
    %26 = vector.extract_strided_slice %25 {offsets = [0, 0], sizes = [2, 32], strides = [1, 1]} : vector<2x128xf32> to vector<2x32xf32>
    %27 = vector.extract_strided_slice %25 {offsets = [0, 32], sizes = [2, 32], strides = [1, 1]} : vector<2x128xf32> to vector<2x32xf32>
    %28 = vector.extract_strided_slice %25 {offsets = [0, 64], sizes = [2, 32], strides = [1, 1]} : vector<2x128xf32> to vector<2x32xf32>
    %29 = vector.extract_strided_slice %25 {offsets = [0, 96], sizes = [2, 32], strides = [1, 1]} : vector<2x128xf32> to vector<2x32xf32>
    %30 = arith.mulf %27, %13 : vector<2x32xf32>
    %31 = arith.mulf %26, %28 : vector<2x32xf32>
    %32 = arith.addf %30, %31 : vector<2x32xf32>
    %33 = math.tanh %32 : vector<2x32xf32>
    %34 = arith.mulf %29, %33 : vector<2x32xf32>
    %c0_15 = arith.constant 0 : index
    %c0_16 = arith.constant 0 : index
    %35 = vector.load %arg8[%c0_15, %c0_16] : memref<2x32xf32, #tpu.memory_space<vmem>>, vector<2x32xf32>
    tpu.vector_store %arg8[%c0_15, %c0_16], %34 {strides = array<i32>} : memref<2x32xf32, #tpu.memory_space<vmem>>, vector<2x32xf32>,
    %c0_17 = arith.constant 0 : index
    %c0_18 = arith.constant 0 : index
    %36 = vector.load %arg9[%c0_17, %c0_18] : memref<2x32xf32, #tpu.memory_space<vmem>>, vector<2x32xf32>
    tpu.vector_store %arg9[%c0_17, %c0_18], %32 {strides = array<i32>} : memref<2x32xf32, #tpu.memory_space<vmem>>, vector<2x32xf32>,
    %37 = arith.index_cast %c0_i32 : i32 to index
    %c0_19 = arith.constant 0 : index
    %c0_20 = arith.constant 0 : index
    %38 = vector.load %arg7[%37, %c0_19, %c0_20] : memref<8x2x32xf32, #tpu.memory_space<vmem>>, vector<1x2x32xf32>
    %39 = vector.shape_cast %38 : vector<1x2x32xf32> to vector<2x32xf32>
    %40 = vector.shape_cast %34 : vector<2x32xf32> to vector<1x2x32xf32>
    tpu.vector_store %arg7[%37, %c0_19, %c0_20], %40 {strides = array<i32>} : memref<8x2x32xf32, #tpu.memory_space<vmem>>, vector<1x2x32xf32>,
    %c1_i32 = arith.constant 1 : i32
    %c0_21 = arith.constant 0 : index
    %c0_22 = arith.constant 0 : index
    %41 = vector.load %arg8[%c0_21, %c0_22] : memref<2x32xf32, #tpu.memory_space<vmem>>, vector<2x32xf32>
    %c0_23 = arith.constant 0 : index
    %c0_24 = arith.constant 0 : index
    %42 = vector.load %arg9[%c0_23, %c0_24] : memref<2x32xf32, #tpu.memory_space<vmem>>, vector<2x32xf32>
    %43 = arith.index_cast %c1_i32 : i32 to index
    %c0_25 = arith.constant 0 : index
    %c0_26 = arith.constant 0 : index
    %44 = vector.load %arg0[%43, %c0_25, %c0_26] : memref<8x2x128xf32, #tpu.memory_space<vmem>>, vector<1x2x128xf32>
    %45 = vector.shape_cast %44 : vector<1x2x128xf32> to vector<2x128xf32>
    %cst_27 = arith.constant dense<0.000000e+00> : vector<2x128xf32>
    %46 = tpu.matmul %41, %11, %cst_27 {dimension_numbers = #tpu.dot_dimension_numbers<[1], [0], [0], [1], [0, 0, 1, 1], [], []>} : vector<2x32xf32>, vector<32x128xf32>, vector<2x128xf32> -> vector<2x128xf32>
    %47 = arith.addf %45, %46 : vector<2x128xf32>
    %48 = math.tanh %47 : vector<2x128xf32>
    %49 = arith.negf %47 : vector<2x128xf32>
    %50 = math.exp %49 : vector<2x128xf32>
    %cst_28 = arith.constant 1.000000e+00 : f32
    %51 = vector.broadcast %cst_28 : f32 to vector<2x128xf32>
    %52 = arith.addf %51, %50 : vector<2x128xf32>
    %53 = arith.divf %51, %52 : vector<2x128xf32>
    %54 = arith.select %5, %48, %53 : vector<2x128xi1>, vector<2x128xf32>
    %55 = vector.extract_strided_slice %54 {offsets = [0, 0], sizes = [2, 32], strides = [1, 1]} : vector<2x128xf32> to vector<2x32xf32>
    %56 = vector.extract_strided_slice %54 {offsets = [0, 32], sizes = [2, 32], strides = [1, 1]} : vector<2x128xf32> to vector<2x32xf32>
    %57 = vector.extract_strided_slice %54 {offsets = [0, 64], sizes = [2, 32], strides = [1, 1]} : vector<2x128xf32> to vector<2x32xf32>
    %58 = vector.extract_strided_slice %54 {offsets = [0, 96], sizes = [2, 32], strides = [1, 1]} : vector<2x128xf32> to vector<2x32xf32>
    %59 = arith.mulf %56, %42 : vector<2x32xf32>
    %60 = arith.mulf %55, %57 : vector<2x32xf32>
    %61 = arith.addf %59, %60 : vector<2x32xf32>
    %62 = math.tanh %61 : vector<2x32xf32>
    %63 = arith.mulf %58, %62 : vector<2x32xf32>
    %c0_29 = arith.constant 0 : index
    %c0_30 = arith.constant 0 : index
    %64 = vector.load %arg8[%c0_29, %c0_30] : memref<2x32xf32, #tpu.memory_space<vmem>>, vector<2x32xf32>
    tpu.vector_store %arg8[%c0_29, %c0_30], %63 {strides = array<i32>} : memref<2x32xf32, #tpu.memory_space<vmem>>, vector<2x32xf32>,
    %c0_31 = arith.constant 0 : index
    %c0_32 = arith.constant 0 : index
    %65 = vector.load %arg9[%c0_31, %c0_32] : memref<2x32xf32, #tpu.memory_space<vmem>>, vector<2x32xf32>
    tpu.vector_store %arg9[%c0_31, %c0_32], %61 {strides = array<i32>} : memref<2x32xf32, #tpu.memory_space<vmem>>, vector<2x32xf32>,
    %66 = arith.index_cast %c1_i32 : i32 to index
    %c0_33 = arith.constant 0 : index
    %c0_34 = arith.constant 0 : index
    %67 = vector.load %arg7[%66, %c0_33, %c0_34] : memref<8x2x32xf32, #tpu.memory_space<vmem>>, vector<1x2x32xf32>
    %68 = vector.shape_cast %67 : vector<1x2x32xf32> to vector<2x32xf32>
    %69 = vector.shape_cast %63 : vector<2x32xf32> to vector<1x2x32xf32>
    tpu.vector_store %arg7[%66, %c0_33, %c0_34], %69 {strides = array<i32>} : memref<8x2x32xf32, #tpu.memory_space<vmem>>, vector<1x2x32xf32>,
    %c2_i32 = arith.constant 2 : i32
    %c0_35 = arith.constant 0 : index
    %c0_36 = arith.constant 0 : index
    %70 = vector.load %arg8[%c0_35, %c0_36] : memref<2x32xf32, #tpu.memory_space<vmem>>, vector<2x32xf32>
    %c0_37 = arith.constant 0 : index
    %c0_38 = arith.constant 0 : index
    %71 = vector.load %arg9[%c0_37, %c0_38] : memref<2x32xf32, #tpu.memory_space<vmem>>, vector<2x32xf32>
    %72 = arith.index_cast %c2_i32 : i32 to index
    %c0_39 = arith.constant 0 : index
    %c0_40 = arith.constant 0 : index
    %73 = vector.load %arg0[%72, %c0_39, %c0_40] : memref<8x2x128xf32, #tpu.memory_space<vmem>>, vector<1x2x128xf32>
    %74 = vector.shape_cast %73 : vector<1x2x128xf32> to vector<2x128xf32>
    %cst_41 = arith.constant dense<0.000000e+00> : vector<2x128xf32>
    %75 = tpu.matmul %70, %11, %cst_41 {dimension_numbers = #tpu.dot_dimension_numbers<[1], [0], [0], [1], [0, 0, 1, 1], [], []>} : vector<2x32xf32>, vector<32x128xf32>, vector<2x128xf32> -> vector<2x128xf32>
    %76 = arith.addf %74, %75 : vector<2x128xf32>
    %77 = math.tanh %76 : vector<2x128xf32>
    %78 = arith.negf %76 : vector<2x128xf32>
    %79 = math.exp %78 : vector<2x128xf32>
    %cst_42 = arith.constant 1.000000e+00 : f32
    %80 = vector.broadcast %cst_42 : f32 to vector<2x128xf32>
    %81 = arith.addf %80, %79 : vector<2x128xf32>
    %82 = arith.divf %80, %81 : vector<2x128xf32>
    %83 = arith.select %5, %77, %82 : vector<2x128xi1>, vector<2x128xf32>
    %84 = vector.extract_strided_slice %83 {offsets = [0, 0], sizes = [2, 32], strides = [1, 1]} : vector<2x128xf32> to vector<2x32xf32>
    %85 = vector.extract_strided_slice %83 {offsets = [0, 32], sizes = [2, 32], strides = [1, 1]} : vector<2x128xf32> to vector<2x32xf32>
    %86 = vector.extract_strided_slice %83 {offsets = [0, 64], sizes = [2, 32], strides = [1, 1]} : vector<2x128xf32> to vector<2x32xf32>
    %87 = vector.extract_strided_slice %83 {offsets = [0, 96], sizes = [2, 32], strides = [1, 1]} : vector<2x128xf32> to vector<2x32xf32>
    %88 = arith.mulf %85, %71 : vector<2x32xf32>
    %89 = arith.mulf %84, %86 : vector<2x32xf32>
    %90 = arith.addf %88, %89 : vector<2x32xf32>
    %91 = math.tanh %90 : vector<2x32xf32>
    %92 = arith.mulf %87, %91 : vector<2x32xf32>
    %c0_43 = arith.constant 0 : index
    %c0_44 = arith.constant 0 : index
    %93 = vector.load %arg8[%c0_43, %c0_44] : memref<2x32xf32, #tpu.memory_space<vmem>>, vector<2x32xf32>
    tpu.vector_store %arg8[%c0_43, %c0_44], %92 {strides = array<i32>} : memref<2x32xf32, #tpu.memory_space<vmem>>, vector<2x32xf32>,
    %c0_45 = arith.constant 0 : index
    %c0_46 = arith.constant 0 : index
    %94 = vector.load %arg9[%c0_45, %c0_46] : memref<2x32xf32, #tpu.memory_space<vmem>>, vector<2x32xf32>
    tpu.vector_store %arg9[%c0_45, %c0_46], %90 {strides = array<i32>} : memref<2x32xf32, #tpu.memory_space<vmem>>, vector<2x32xf32>,
    %95 = arith.index_cast %c2_i32 : i32 to index
    %c0_47 = arith.constant 0 : index
    %c0_48 = arith.constant 0 : index
    %96 = vector.load %arg7[%95, %c0_47, %c0_48] : memref<8x2x32xf32, #tpu.memory_space<vmem>>, vector<1x2x32xf32>
    %97 = vector.shape_cast %96 : vector<1x2x32xf32> to vector<2x32xf32>
    %98 = vector.shape_cast %92 : vector<2x32xf32> to vector<1x2x32xf32>
    tpu.vector_store %arg7[%95, %c0_47, %c0_48], %98 {strides = array<i32>} : memref<8x2x32xf32, #tpu.memory_space<vmem>>, vector<1x2x32xf32>,
    %c3_i32 = arith.constant 3 : i32
    %c0_49 = arith.constant 0 : index
    %c0_50 = arith.constant 0 : index
    %99 = vector.load %arg8[%c0_49, %c0_50] : memref<2x32xf32, #tpu.memory_space<vmem>>, vector<2x32xf32>
    %c0_51 = arith.constant 0 : index
    %c0_52 = arith.constant 0 : index
    %100 = vector.load %arg9[%c0_51, %c0_52] : memref<2x32xf32, #tpu.memory_space<vmem>>, vector<2x32xf32>
    %101 = arith.index_cast %c3_i32 : i32 to index
    %c0_53 = arith.constant 0 : index
    %c0_54 = arith.constant 0 : index
    %102 = vector.load %arg0[%101, %c0_53, %c0_54] : memref<8x2x128xf32, #tpu.memory_space<vmem>>, vector<1x2x128xf32>
    %103 = vector.shape_cast %102 : vector<1x2x128xf32> to vector<2x128xf32>
    %cst_55 = arith.constant dense<0.000000e+00> : vector<2x128xf32>
    %104 = tpu.matmul %99, %11, %cst_55 {dimension_numbers = #tpu.dot_dimension_numbers<[1], [0], [0], [1], [0, 0, 1, 1], [], []>} : vector<2x32xf32>, vector<32x128xf32>, vector<2x128xf32> -> vector<2x128xf32>
    %105 = arith.addf %103, %104 : vector<2x128xf32>
    %106 = math.tanh %105 : vector<2x128xf32>
    %107 = arith.negf %105 : vector<2x128xf32>
    %108 = math.exp %107 : vector<2x128xf32>
    %cst_56 = arith.constant 1.000000e+00 : f32
    %109 = vector.broadcast %cst_56 : f32 to vector<2x128xf32>
    %110 = arith.addf %109, %108 : vector<2x128xf32>
    %111 = arith.divf %109, %110 : vector<2x128xf32>
    %112 = arith.select %5, %106, %111 : vector<2x128xi1>, vector<2x128xf32>
    %113 = vector.extract_strided_slice %112 {offsets = [0, 0], sizes = [2, 32], strides = [1, 1]} : vector<2x128xf32> to vector<2x32xf32>
    %114 = vector.extract_strided_slice %112 {offsets = [0, 32], sizes = [2, 32], strides = [1, 1]} : vector<2x128xf32> to vector<2x32xf32>
    %115 = vector.extract_strided_slice %112 {offsets = [0, 64], sizes = [2, 32], strides = [1, 1]} : vector<2x128xf32> to vector<2x32xf32>
    %116 = vector.extract_strided_slice %112 {offsets = [0, 96], sizes = [2, 32], strides = [1, 1]} : vector<2x128xf32> to vector<2x32xf32>
    %117 = arith.mulf %114, %100 : vector<2x32xf32>
    %118 = arith.mulf %113, %115 : vector<2x32xf32>
    %119 = arith.addf %117, %118 : vector<2x32xf32>
    %120 = math.tanh %119 : vector<2x32xf32>
    %121 = arith.mulf %116, %120 : vector<2x32xf32>
    %c0_57 = arith.constant 0 : index
    %c0_58 = arith.constant 0 : index
    %122 = vector.load %arg8[%c0_57, %c0_58] : memref<2x32xf32, #tpu.memory_space<vmem>>, vector<2x32xf32>
    tpu.vector_store %arg8[%c0_57, %c0_58], %121 {strides = array<i32>} : memref<2x32xf32, #tpu.memory_space<vmem>>, vector<2x32xf32>,
    %c0_59 = arith.constant 0 : index
    %c0_60 = arith.constant 0 : index
    %123 = vector.load %arg9[%c0_59, %c0_60] : memref<2x32xf32, #tpu.memory_space<vmem>>, vector<2x32xf32>
    tpu.vector_store %arg9[%c0_59, %c0_60], %119 {strides = array<i32>} : memref<2x32xf32, #tpu.memory_space<vmem>>, vector<2x32xf32>,
    %124 = arith.index_cast %c3_i32 : i32 to index
    %c0_61 = arith.constant 0 : index
    %c0_62 = arith.constant 0 : index
    %125 = vector.load %arg7[%124, %c0_61, %c0_62] : memref<8x2x32xf32, #tpu.memory_space<vmem>>, vector<1x2x32xf32>
    %126 = vector.shape_cast %125 : vector<1x2x32xf32> to vector<2x32xf32>
    %127 = vector.shape_cast %121 : vector<2x32xf32> to vector<1x2x32xf32>
    tpu.vector_store %arg7[%124, %c0_61, %c0_62], %127 {strides = array<i32>} : memref<8x2x32xf32, #tpu.memory_space<vmem>>, vector<1x2x32xf32>,
    %c4_i32 = arith.constant 4 : i32
    %c0_63 = arith.constant 0 : index
    %c0_64 = arith.constant 0 : index
    %128 = vector.load %arg8[%c0_63, %c0_64] : memref<2x32xf32, #tpu.memory_space<vmem>>, vector<2x32xf32>
    %c0_65 = arith.constant 0 : index
    %c0_66 = arith.constant 0 : index
    %129 = vector.load %arg9[%c0_65, %c0_66] : memref<2x32xf32, #tpu.memory_space<vmem>>, vector<2x32xf32>
    %130 = arith.index_cast %c4_i32 : i32 to index
    %c0_67 = arith.constant 0 : index
    %c0_68 = arith.constant 0 : index
    %131 = vector.load %arg0[%130, %c0_67, %c0_68] : memref<8x2x128xf32, #tpu.memory_space<vmem>>, vector<1x2x128xf32>
    %132 = vector.shape_cast %131 : vector<1x2x128xf32> to vector<2x128xf32>
    %cst_69 = arith.constant dense<0.000000e+00> : vector<2x128xf32>
    %133 = tpu.matmul %128, %11, %cst_69 {dimension_numbers = #tpu.dot_dimension_numbers<[1], [0], [0], [1], [0, 0, 1, 1], [], []>} : vector<2x32xf32>, vector<32x128xf32>, vector<2x128xf32> -> vector<2x128xf32>
    %134 = arith.addf %132, %133 : vector<2x128xf32>
    %135 = math.tanh %134 : vector<2x128xf32>
    %136 = arith.negf %134 : vector<2x128xf32>
    %137 = math.exp %136 : vector<2x128xf32>
    %cst_70 = arith.constant 1.000000e+00 : f32
    %138 = vector.broadcast %cst_70 : f32 to vector<2x128xf32>
    %139 = arith.addf %138, %137 : vector<2x128xf32>
    %140 = arith.divf %138, %139 : vector<2x128xf32>
    %141 = arith.select %5, %135, %140 : vector<2x128xi1>, vector<2x128xf32>
    %142 = vector.extract_strided_slice %141 {offsets = [0, 0], sizes = [2, 32], strides = [1, 1]} : vector<2x128xf32> to vector<2x32xf32>
    %143 = vector.extract_strided_slice %141 {offsets = [0, 32], sizes = [2, 32], strides = [1, 1]} : vector<2x128xf32> to vector<2x32xf32>
    %144 = vector.extract_strided_slice %141 {offsets = [0, 64], sizes = [2, 32], strides = [1, 1]} : vector<2x128xf32> to vector<2x32xf32>
    %145 = vector.extract_strided_slice %141 {offsets = [0, 96], sizes = [2, 32], strides = [1, 1]} : vector<2x128xf32> to vector<2x32xf32>
    %146 = arith.mulf %143, %129 : vector<2x32xf32>
    %147 = arith.mulf %142, %144 : vector<2x32xf32>
    %148 = arith.addf %146, %147 : vector<2x32xf32>
    %149 = math.tanh %148 : vector<2x32xf32>
    %150 = arith.mulf %145, %149 : vector<2x32xf32>
    %c0_71 = arith.constant 0 : index
    %c0_72 = arith.constant 0 : index
    %151 = vector.load %arg8[%c0_71, %c0_72] : memref<2x32xf32, #tpu.memory_space<vmem>>, vector<2x32xf32>
    tpu.vector_store %arg8[%c0_71, %c0_72], %150 {strides = array<i32>} : memref<2x32xf32, #tpu.memory_space<vmem>>, vector<2x32xf32>,
    %c0_73 = arith.constant 0 : index
    %c0_74 = arith.constant 0 : index
    %152 = vector.load %arg9[%c0_73, %c0_74] : memref<2x32xf32, #tpu.memory_space<vmem>>, vector<2x32xf32>
    tpu.vector_store %arg9[%c0_73, %c0_74], %148 {strides = array<i32>} : memref<2x32xf32, #tpu.memory_space<vmem>>, vector<2x32xf32>,
    %153 = arith.index_cast %c4_i32 : i32 to index
    %c0_75 = arith.constant 0 : index
    %c0_76 = arith.constant 0 : index
    %154 = vector.load %arg7[%153, %c0_75, %c0_76] : memref<8x2x32xf32, #tpu.memory_space<vmem>>, vector<1x2x32xf32>
    %155 = vector.shape_cast %154 : vector<1x2x32xf32> to vector<2x32xf32>
    %156 = vector.shape_cast %150 : vector<2x32xf32> to vector<1x2x32xf32>
    tpu.vector_store %arg7[%153, %c0_75, %c0_76], %156 {strides = array<i32>} : memref<8x2x32xf32, #tpu.memory_space<vmem>>, vector<1x2x32xf32>,
    %c5_i32 = arith.constant 5 : i32
    %c0_77 = arith.constant 0 : index
    %c0_78 = arith.constant 0 : index
    %157 = vector.load %arg8[%c0_77, %c0_78] : memref<2x32xf32, #tpu.memory_space<vmem>>, vector<2x32xf32>
    %c0_79 = arith.constant 0 : index
    %c0_80 = arith.constant 0 : index
    %158 = vector.load %arg9[%c0_79, %c0_80] : memref<2x32xf32, #tpu.memory_space<vmem>>, vector<2x32xf32>
    %159 = arith.index_cast %c5_i32 : i32 to index
    %c0_81 = arith.constant 0 : index
    %c0_82 = arith.constant 0 : index
    %160 = vector.load %arg0[%159, %c0_81, %c0_82] : memref<8x2x128xf32, #tpu.memory_space<vmem>>, vector<1x2x128xf32>
    %161 = vector.shape_cast %160 : vector<1x2x128xf32> to vector<2x128xf32>
    %cst_83 = arith.constant dense<0.000000e+00> : vector<2x128xf32>
    %162 = tpu.matmul %157, %11, %cst_83 {dimension_numbers = #tpu.dot_dimension_numbers<[1], [0], [0], [1], [0, 0, 1, 1], [], []>} : vector<2x32xf32>, vector<32x128xf32>, vector<2x128xf32> -> vector<2x128xf32>
    %163 = arith.addf %161, %162 : vector<2x128xf32>
    %164 = math.tanh %163 : vector<2x128xf32>
    %165 = arith.negf %163 : vector<2x128xf32>
    %166 = math.exp %165 : vector<2x128xf32>
    %cst_84 = arith.constant 1.000000e+00 : f32
    %167 = vector.broadcast %cst_84 : f32 to vector<2x128xf32>
    %168 = arith.addf %167, %166 : vector<2x128xf32>
    %169 = arith.divf %167, %168 : vector<2x128xf32>
    %170 = arith.select %5, %164, %169 : vector<2x128xi1>, vector<2x128xf32>
    %171 = vector.extract_strided_slice %170 {offsets = [0, 0], sizes = [2, 32], strides = [1, 1]} : vector<2x128xf32> to vector<2x32xf32>
    %172 = vector.extract_strided_slice %170 {offsets = [0, 32], sizes = [2, 32], strides = [1, 1]} : vector<2x128xf32> to vector<2x32xf32>
    %173 = vector.extract_strided_slice %170 {offsets = [0, 64], sizes = [2, 32], strides = [1, 1]} : vector<2x128xf32> to vector<2x32xf32>
    %174 = vector.extract_strided_slice %170 {offsets = [0, 96], sizes = [2, 32], strides = [1, 1]} : vector<2x128xf32> to vector<2x32xf32>
    %175 = arith.mulf %172, %158 : vector<2x32xf32>
    %176 = arith.mulf %171, %173 : vector<2x32xf32>
    %177 = arith.addf %175, %176 : vector<2x32xf32>
    %178 = math.tanh %177 : vector<2x32xf32>
    %179 = arith.mulf %174, %178 : vector<2x32xf32>
    %c0_85 = arith.constant 0 : index
    %c0_86 = arith.constant 0 : index
    %180 = vector.load %arg8[%c0_85, %c0_86] : memref<2x32xf32, #tpu.memory_space<vmem>>, vector<2x32xf32>
    tpu.vector_store %arg8[%c0_85, %c0_86], %179 {strides = array<i32>} : memref<2x32xf32, #tpu.memory_space<vmem>>, vector<2x32xf32>,
    %c0_87 = arith.constant 0 : index
    %c0_88 = arith.constant 0 : index
    %181 = vector.load %arg9[%c0_87, %c0_88] : memref<2x32xf32, #tpu.memory_space<vmem>>, vector<2x32xf32>
    tpu.vector_store %arg9[%c0_87, %c0_88], %177 {strides = array<i32>} : memref<2x32xf32, #tpu.memory_space<vmem>>, vector<2x32xf32>,
    %182 = arith.index_cast %c5_i32 : i32 to index
    %c0_89 = arith.constant 0 : index
    %c0_90 = arith.constant 0 : index
    %183 = vector.load %arg7[%182, %c0_89, %c0_90] : memref<8x2x32xf32, #tpu.memory_space<vmem>>, vector<1x2x32xf32>
    %184 = vector.shape_cast %183 : vector<1x2x32xf32> to vector<2x32xf32>
    %185 = vector.shape_cast %179 : vector<2x32xf32> to vector<1x2x32xf32>
    tpu.vector_store %arg7[%182, %c0_89, %c0_90], %185 {strides = array<i32>} : memref<8x2x32xf32, #tpu.memory_space<vmem>>, vector<1x2x32xf32>,
    %c6_i32 = arith.constant 6 : i32
    %c0_91 = arith.constant 0 : index
    %c0_92 = arith.constant 0 : index
    %186 = vector.load %arg8[%c0_91, %c0_92] : memref<2x32xf32, #tpu.memory_space<vmem>>, vector<2x32xf32>
    %c0_93 = arith.constant 0 : index
    %c0_94 = arith.constant 0 : index
    %187 = vector.load %arg9[%c0_93, %c0_94] : memref<2x32xf32, #tpu.memory_space<vmem>>, vector<2x32xf32>
    %188 = arith.index_cast %c6_i32 : i32 to index
    %c0_95 = arith.constant 0 : index
    %c0_96 = arith.constant 0 : index
    %189 = vector.load %arg0[%188, %c0_95, %c0_96] : memref<8x2x128xf32, #tpu.memory_space<vmem>>, vector<1x2x128xf32>
    %190 = vector.shape_cast %189 : vector<1x2x128xf32> to vector<2x128xf32>
    %cst_97 = arith.constant dense<0.000000e+00> : vector<2x128xf32>
    %191 = tpu.matmul %186, %11, %cst_97 {dimension_numbers = #tpu.dot_dimension_numbers<[1], [0], [0], [1], [0, 0, 1, 1], [], []>} : vector<2x32xf32>, vector<32x128xf32>, vector<2x128xf32> -> vector<2x128xf32>
    %192 = arith.addf %190, %191 : vector<2x128xf32>
    %193 = math.tanh %192 : vector<2x128xf32>
    %194 = arith.negf %192 : vector<2x128xf32>
    %195 = math.exp %194 : vector<2x128xf32>
    %cst_98 = arith.constant 1.000000e+00 : f32
    %196 = vector.broadcast %cst_98 : f32 to vector<2x128xf32>
    %197 = arith.addf %196, %195 : vector<2x128xf32>
    %198 = arith.divf %196, %197 : vector<2x128xf32>
    %199 = arith.select %5, %193, %198 : vector<2x128xi1>, vector<2x128xf32>
    %200 = vector.extract_strided_slice %199 {offsets = [0, 0], sizes = [2, 32], strides = [1, 1]} : vector<2x128xf32> to vector<2x32xf32>
    %201 = vector.extract_strided_slice %199 {offsets = [0, 32], sizes = [2, 32], strides = [1, 1]} : vector<2x128xf32> to vector<2x32xf32>
    %202 = vector.extract_strided_slice %199 {offsets = [0, 64], sizes = [2, 32], strides = [1, 1]} : vector<2x128xf32> to vector<2x32xf32>
    %203 = vector.extract_strided_slice %199 {offsets = [0, 96], sizes = [2, 32], strides = [1, 1]} : vector<2x128xf32> to vector<2x32xf32>
    %204 = arith.mulf %201, %187 : vector<2x32xf32>
    %205 = arith.mulf %200, %202 : vector<2x32xf32>
    %206 = arith.addf %204, %205 : vector<2x32xf32>
    %207 = math.tanh %206 : vector<2x32xf32>
    %208 = arith.mulf %203, %207 : vector<2x32xf32>
    %c0_99 = arith.constant 0 : index
    %c0_100 = arith.constant 0 : index
    %209 = vector.load %arg8[%c0_99, %c0_100] : memref<2x32xf32, #tpu.memory_space<vmem>>, vector<2x32xf32>
    tpu.vector_store %arg8[%c0_99, %c0_100], %208 {strides = array<i32>} : memref<2x32xf32, #tpu.memory_space<vmem>>, vector<2x32xf32>,
    %c0_101 = arith.constant 0 : index
    %c0_102 = arith.constant 0 : index
    %210 = vector.load %arg9[%c0_101, %c0_102] : memref<2x32xf32, #tpu.memory_space<vmem>>, vector<2x32xf32>
    tpu.vector_store %arg9[%c0_101, %c0_102], %206 {strides = array<i32>} : memref<2x32xf32, #tpu.memory_space<vmem>>, vector<2x32xf32>,
    %211 = arith.index_cast %c6_i32 : i32 to index
    %c0_103 = arith.constant 0 : index
    %c0_104 = arith.constant 0 : index
    %212 = vector.load %arg7[%211, %c0_103, %c0_104] : memref<8x2x32xf32, #tpu.memory_space<vmem>>, vector<1x2x32xf32>
    %213 = vector.shape_cast %212 : vector<1x2x32xf32> to vector<2x32xf32>
    %214 = vector.shape_cast %208 : vector<2x32xf32> to vector<1x2x32xf32>
    tpu.vector_store %arg7[%211, %c0_103, %c0_104], %214 {strides = array<i32>} : memref<8x2x32xf32, #tpu.memory_space<vmem>>, vector<1x2x32xf32>,
    %c7_i32 = arith.constant 7 : i32
    %c0_105 = arith.constant 0 : index
    %c0_106 = arith.constant 0 : index
    %215 = vector.load %arg8[%c0_105, %c0_106] : memref<2x32xf32, #tpu.memory_space<vmem>>, vector<2x32xf32>
    %c0_107 = arith.constant 0 : index
    %c0_108 = arith.constant 0 : index
    %216 = vector.load %arg9[%c0_107, %c0_108] : memref<2x32xf32, #tpu.memory_space<vmem>>, vector<2x32xf32>
    %217 = arith.index_cast %c7_i32 : i32 to index
    %c0_109 = arith.constant 0 : index
    %c0_110 = arith.constant 0 : index
    %218 = vector.load %arg0[%217, %c0_109, %c0_110] : memref<8x2x128xf32, #tpu.memory_space<vmem>>, vector<1x2x128xf32>
    %219 = vector.shape_cast %218 : vector<1x2x128xf32> to vector<2x128xf32>
    %cst_111 = arith.constant dense<0.000000e+00> : vector<2x128xf32>
    %220 = tpu.matmul %215, %11, %cst_111 {dimension_numbers = #tpu.dot_dimension_numbers<[1], [0], [0], [1], [0, 0, 1, 1], [], []>} : vector<2x32xf32>, vector<32x128xf32>, vector<2x128xf32> -> vector<2x128xf32>
    %221 = arith.addf %219, %220 : vector<2x128xf32>
    %222 = math.tanh %221 : vector<2x128xf32>
    %223 = arith.negf %221 : vector<2x128xf32>
    %224 = math.exp %223 : vector<2x128xf32>
    %cst_112 = arith.constant 1.000000e+00 : f32
    %225 = vector.broadcast %cst_112 : f32 to vector<2x128xf32>
    %226 = arith.addf %225, %224 : vector<2x128xf32>
    %227 = arith.divf %225, %226 : vector<2x128xf32>
    %228 = arith.select %5, %222, %227 : vector<2x128xi1>, vector<2x128xf32>
    %229 = vector.extract_strided_slice %228 {offsets = [0, 0], sizes = [2, 32], strides = [1, 1]} : vector<2x128xf32> to vector<2x32xf32>
    %230 = vector.extract_strided_slice %228 {offsets = [0, 32], sizes = [2, 32], strides = [1, 1]} : vector<2x128xf32> to vector<2x32xf32>
    %231 = vector.extract_strided_slice %228 {offsets = [0, 64], sizes = [2, 32], strides = [1, 1]} : vector<2x128xf32> to vector<2x32xf32>
    %232 = vector.extract_strided_slice %228 {offsets = [0, 96], sizes = [2, 32], strides = [1, 1]} : vector<2x128xf32> to vector<2x32xf32>
    %233 = arith.mulf %230, %216 : vector<2x32xf32>
    %234 = arith.mulf %229, %231 : vector<2x32xf32>
    %235 = arith.addf %233, %234 : vector<2x32xf32>
    %236 = math.tanh %235 : vector<2x32xf32>
    %237 = arith.mulf %232, %236 : vector<2x32xf32>
    %c0_113 = arith.constant 0 : index
    %c0_114 = arith.constant 0 : index
    %238 = vector.load %arg8[%c0_113, %c0_114] : memref<2x32xf32, #tpu.memory_space<vmem>>, vector<2x32xf32>
    tpu.vector_store %arg8[%c0_113, %c0_114], %237 {strides = array<i32>} : memref<2x32xf32, #tpu.memory_space<vmem>>, vector<2x32xf32>,
    %c0_115 = arith.constant 0 : index
    %c0_116 = arith.constant 0 : index
    %239 = vector.load %arg9[%c0_115, %c0_116] : memref<2x32xf32, #tpu.memory_space<vmem>>, vector<2x32xf32>
    tpu.vector_store %arg9[%c0_115, %c0_116], %235 {strides = array<i32>} : memref<2x32xf32, #tpu.memory_space<vmem>>, vector<2x32xf32>,
    %240 = arith.index_cast %c7_i32 : i32 to index
    %c0_117 = arith.constant 0 : index
    %c0_118 = arith.constant 0 : index
    %241 = vector.load %arg7[%240, %c0_117, %c0_118] : memref<8x2x32xf32, #tpu.memory_space<vmem>>, vector<1x2x32xf32>
    %242 = vector.shape_cast %241 : vector<1x2x32xf32> to vector<2x32xf32>
    %243 = vector.shape_cast %237 : vector<2x32xf32> to vector<1x2x32xf32>
    tpu.vector_store %arg7[%240, %c0_117, %c0_118], %243 {strides = array<i32>} : memref<8x2x32xf32, #tpu.memory_space<vmem>>, vector<1x2x32xf32>,
    %c8_i32 = arith.constant 8 : i32
    %cst_119 = arith.constant 0.000000e+00 : f32
    %244 = vector.broadcast %cst_119 : f32 to vector<2x32xf32>
    %c0_120 = arith.constant 0 : index
    %c0_121 = arith.constant 0 : index
    %245 = vector.load %arg8[%c0_120, %c0_121] : memref<2x32xf32, #tpu.memory_space<vmem>>, vector<2x32xf32>
    tpu.vector_store %arg8[%c0_120, %c0_121], %244 {strides = array<i32>} : memref<2x32xf32, #tpu.memory_space<vmem>>, vector<2x32xf32>,
    %cst_122 = arith.constant 0.000000e+00 : f32
    %246 = vector.broadcast %cst_122 : f32 to vector<2x32xf32>
    %c0_123 = arith.constant 0 : index
    %c0_124 = arith.constant 0 : index
    %247 = vector.load %arg9[%c0_123, %c0_124] : memref<2x32xf32, #tpu.memory_space<vmem>>, vector<2x32xf32>
    tpu.vector_store %arg9[%c0_123, %c0_124], %246 {strides = array<i32>} : memref<2x32xf32, #tpu.memory_space<vmem>>, vector<2x32xf32>,
    %c1 = arith.constant 1 : index
    %c0_125 = arith.constant 0 : index
    %c0_126 = arith.constant 0 : index
    %248 = vector.load %arg1[%c1, %c0_125, %c0_126] : memref<2x32x128xf32, #tpu.memory_space<vmem>>, vector<1x32x128xf32>
    %249 = vector.shape_cast %248 : vector<1x32x128xf32> to vector<32x128xf32>
    %c0_127 = arith.constant 0 : index
    %c0_128 = arith.constant 0 : index
    %c0_129 = arith.constant 0 : index
    %250 = vector.load %arg2[%c0_127, %c0_128, %c0_129] : memref<1x32x128xf32, #tpu.memory_space<vmem>>, vector<1x32x128xf32>
    %251 = vector.shape_cast %250 : vector<1x32x128xf32> to vector<32x128xf32>
    %c0_130 = arith.constant 0 : index
    %c0_131 = arith.constant 0 : index
    %c0_132 = arith.constant 0 : index
    %252 = vector.load %arg3[%c0_130, %c0_131, %c0_132] : memref<1x1x128xf32, #tpu.memory_space<vmem>>, vector<1x1x128xf32>
    %253 = vector.shape_cast %252 : vector<1x1x128xf32> to vector<1x128xf32>
    %c0_i32_133 = arith.constant 0 : i32
    %c0_134 = arith.constant 0 : index
    %c0_135 = arith.constant 0 : index
    %254 = vector.load %arg8[%c0_134, %c0_135] : memref<2x32xf32, #tpu.memory_space<vmem>>, vector<2x32xf32>
    %c0_136 = arith.constant 0 : index
    %c0_137 = arith.constant 0 : index
    %255 = vector.load %arg9[%c0_136, %c0_137] : memref<2x32xf32, #tpu.memory_space<vmem>>, vector<2x32xf32>
    %256 = arith.index_cast %c0_i32_133 : i32 to index
    %c0_138 = arith.constant 0 : index
    %c0_139 = arith.constant 0 : index
    %257 = vector.load %arg7[%256, %c0_138, %c0_139] : memref<8x2x32xf32, #tpu.memory_space<vmem>>, vector<1x2x32xf32>
    %258 = vector.shape_cast %257 : vector<1x2x32xf32> to vector<2x32xf32>
    %cst_140 = arith.constant dense<0.000000e+00> : vector<2x128xf32>
    %259 = tpu.matmul %258, %251, %cst_140 {dimension_numbers = #tpu.dot_dimension_numbers<[1], [0], [0], [1], [0, 0, 1, 1], [], []>} : vector<2x32xf32>, vector<32x128xf32>, vector<2x128xf32> -> vector<2x128xf32>
    %260 = vector.broadcast %253 : vector<1x128xf32> to vector<2x128xf32>
    %261 = arith.addf %259, %260 : vector<2x128xf32>
    %cst_141 = arith.constant dense<0.000000e+00> : vector<2x128xf32>
    %262 = tpu.matmul %254, %249, %cst_141 {dimension_numbers = #tpu.dot_dimension_numbers<[1], [0], [0], [1], [0, 0, 1, 1], [], []>} : vector<2x32xf32>, vector<32x128xf32>, vector<2x128xf32> -> vector<2x128xf32>
    %263 = arith.addf %261, %262 : vector<2x128xf32>
    %264 = math.tanh %263 : vector<2x128xf32>
    %265 = arith.negf %263 : vector<2x128xf32>
    %266 = math.exp %265 : vector<2x128xf32>
    %cst_142 = arith.constant 1.000000e+00 : f32
    %267 = vector.broadcast %cst_142 : f32 to vector<2x128xf32>
    %268 = arith.addf %267, %266 : vector<2x128xf32>
    %269 = arith.divf %267, %268 : vector<2x128xf32>
    %270 = arith.select %5, %264, %269 : vector<2x128xi1>, vector<2x128xf32>
    %271 = vector.extract_strided_slice %270 {offsets = [0, 0], sizes = [2, 32], strides = [1, 1]} : vector<2x128xf32> to vector<2x32xf32>
    %272 = vector.extract_strided_slice %270 {offsets = [0, 32], sizes = [2, 32], strides = [1, 1]} : vector<2x128xf32> to vector<2x32xf32>
    %273 = vector.extract_strided_slice %270 {offsets = [0, 64], sizes = [2, 32], strides = [1, 1]} : vector<2x128xf32> to vector<2x32xf32>
    %274 = vector.extract_strided_slice %270 {offsets = [0, 96], sizes = [2, 32], strides = [1, 1]} : vector<2x128xf32> to vector<2x32xf32>
    %275 = arith.mulf %272, %255 : vector<2x32xf32>
    %276 = arith.mulf %271, %273 : vector<2x32xf32>
    %277 = arith.addf %275, %276 : vector<2x32xf32>
    %278 = math.tanh %277 : vector<2x32xf32>
    %279 = arith.mulf %274, %278 : vector<2x32xf32>
    %c0_143 = arith.constant 0 : index
    %c0_144 = arith.constant 0 : index
    %280 = vector.load %arg8[%c0_143, %c0_144] : memref<2x32xf32, #tpu.memory_space<vmem>>, vector<2x32xf32>
    tpu.vector_store %arg8[%c0_143, %c0_144], %279 {strides = array<i32>} : memref<2x32xf32, #tpu.memory_space<vmem>>, vector<2x32xf32>,
    %c0_145 = arith.constant 0 : index
    %c0_146 = arith.constant 0 : index
    %281 = vector.load %arg9[%c0_145, %c0_146] : memref<2x32xf32, #tpu.memory_space<vmem>>, vector<2x32xf32>
    tpu.vector_store %arg9[%c0_145, %c0_146], %277 {strides = array<i32>} : memref<2x32xf32, #tpu.memory_space<vmem>>, vector<2x32xf32>,
    %c1_i32_147 = arith.constant 1 : i32
    %c0_148 = arith.constant 0 : index
    %c0_149 = arith.constant 0 : index
    %282 = vector.load %arg8[%c0_148, %c0_149] : memref<2x32xf32, #tpu.memory_space<vmem>>, vector<2x32xf32>
    %c0_150 = arith.constant 0 : index
    %c0_151 = arith.constant 0 : index
    %283 = vector.load %arg9[%c0_150, %c0_151] : memref<2x32xf32, #tpu.memory_space<vmem>>, vector<2x32xf32>
    %284 = arith.index_cast %c1_i32_147 : i32 to index
    %c0_152 = arith.constant 0 : index
    %c0_153 = arith.constant 0 : index
    %285 = vector.load %arg7[%284, %c0_152, %c0_153] : memref<8x2x32xf32, #tpu.memory_space<vmem>>, vector<1x2x32xf32>
    %286 = vector.shape_cast %285 : vector<1x2x32xf32> to vector<2x32xf32>
    %cst_154 = arith.constant dense<0.000000e+00> : vector<2x128xf32>
    %287 = tpu.matmul %286, %251, %cst_154 {dimension_numbers = #tpu.dot_dimension_numbers<[1], [0], [0], [1], [0, 0, 1, 1], [], []>} : vector<2x32xf32>, vector<32x128xf32>, vector<2x128xf32> -> vector<2x128xf32>
    %288 = vector.broadcast %253 : vector<1x128xf32> to vector<2x128xf32>
    %289 = arith.addf %287, %288 : vector<2x128xf32>
    %cst_155 = arith.constant dense<0.000000e+00> : vector<2x128xf32>
    %290 = tpu.matmul %282, %249, %cst_155 {dimension_numbers = #tpu.dot_dimension_numbers<[1], [0], [0], [1], [0, 0, 1, 1], [], []>} : vector<2x32xf32>, vector<32x128xf32>, vector<2x128xf32> -> vector<2x128xf32>
    %291 = arith.addf %289, %290 : vector<2x128xf32>
    %292 = math.tanh %291 : vector<2x128xf32>
    %293 = arith.negf %291 : vector<2x128xf32>
    %294 = math.exp %293 : vector<2x128xf32>
    %cst_156 = arith.constant 1.000000e+00 : f32
    %295 = vector.broadcast %cst_156 : f32 to vector<2x128xf32>
    %296 = arith.addf %295, %294 : vector<2x128xf32>
    %297 = arith.divf %295, %296 : vector<2x128xf32>
    %298 = arith.select %5, %292, %297 : vector<2x128xi1>, vector<2x128xf32>
    %299 = vector.extract_strided_slice %298 {offsets = [0, 0], sizes = [2, 32], strides = [1, 1]} : vector<2x128xf32> to vector<2x32xf32>
    %300 = vector.extract_strided_slice %298 {offsets = [0, 32], sizes = [2, 32], strides = [1, 1]} : vector<2x128xf32> to vector<2x32xf32>
    %301 = vector.extract_strided_slice %298 {offsets = [0, 64], sizes = [2, 32], strides = [1, 1]} : vector<2x128xf32> to vector<2x32xf32>
    %302 = vector.extract_strided_slice %298 {offsets = [0, 96], sizes = [2, 32], strides = [1, 1]} : vector<2x128xf32> to vector<2x32xf32>
    %303 = arith.mulf %300, %283 : vector<2x32xf32>
    %304 = arith.mulf %299, %301 : vector<2x32xf32>
    %305 = arith.addf %303, %304 : vector<2x32xf32>
    %306 = math.tanh %305 : vector<2x32xf32>
    %307 = arith.mulf %302, %306 : vector<2x32xf32>
    %c0_157 = arith.constant 0 : index
    %c0_158 = arith.constant 0 : index
    %308 = vector.load %arg8[%c0_157, %c0_158] : memref<2x32xf32, #tpu.memory_space<vmem>>, vector<2x32xf32>
    tpu.vector_store %arg8[%c0_157, %c0_158], %307 {strides = array<i32>} : memref<2x32xf32, #tpu.memory_space<vmem>>, vector<2x32xf32>,
    %c0_159 = arith.constant 0 : index
    %c0_160 = arith.constant 0 : index
    %309 = vector.load %arg9[%c0_159, %c0_160] : memref<2x32xf32, #tpu.memory_space<vmem>>, vector<2x32xf32>
    tpu.vector_store %arg9[%c0_159, %c0_160], %305 {strides = array<i32>} : memref<2x32xf32, #tpu.memory_space<vmem>>, vector<2x32xf32>,
    %c2_i32_161 = arith.constant 2 : i32
    %c0_162 = arith.constant 0 : index
    %c0_163 = arith.constant 0 : index
    %310 = vector.load %arg8[%c0_162, %c0_163] : memref<2x32xf32, #tpu.memory_space<vmem>>, vector<2x32xf32>
    %c0_164 = arith.constant 0 : index
    %c0_165 = arith.constant 0 : index
    %311 = vector.load %arg9[%c0_164, %c0_165] : memref<2x32xf32, #tpu.memory_space<vmem>>, vector<2x32xf32>
    %312 = arith.index_cast %c2_i32_161 : i32 to index
    %c0_166 = arith.constant 0 : index
    %c0_167 = arith.constant 0 : index
    %313 = vector.load %arg7[%312, %c0_166, %c0_167] : memref<8x2x32xf32, #tpu.memory_space<vmem>>, vector<1x2x32xf32>
    %314 = vector.shape_cast %313 : vector<1x2x32xf32> to vector<2x32xf32>
    %cst_168 = arith.constant dense<0.000000e+00> : vector<2x128xf32>
    %315 = tpu.matmul %314, %251, %cst_168 {dimension_numbers = #tpu.dot_dimension_numbers<[1], [0], [0], [1], [0, 0, 1, 1], [], []>} : vector<2x32xf32>, vector<32x128xf32>, vector<2x128xf32> -> vector<2x128xf32>
    %316 = vector.broadcast %253 : vector<1x128xf32> to vector<2x128xf32>
    %317 = arith.addf %315, %316 : vector<2x128xf32>
    %cst_169 = arith.constant dense<0.000000e+00> : vector<2x128xf32>
    %318 = tpu.matmul %310, %249, %cst_169 {dimension_numbers = #tpu.dot_dimension_numbers<[1], [0], [0], [1], [0, 0, 1, 1], [], []>} : vector<2x32xf32>, vector<32x128xf32>, vector<2x128xf32> -> vector<2x128xf32>
    %319 = arith.addf %317, %318 : vector<2x128xf32>
    %320 = math.tanh %319 : vector<2x128xf32>
    %321 = arith.negf %319 : vector<2x128xf32>
    %322 = math.exp %321 : vector<2x128xf32>
    %cst_170 = arith.constant 1.000000e+00 : f32
    %323 = vector.broadcast %cst_170 : f32 to vector<2x128xf32>
    %324 = arith.addf %323, %322 : vector<2x128xf32>
    %325 = arith.divf %323, %324 : vector<2x128xf32>
    %326 = arith.select %5, %320, %325 : vector<2x128xi1>, vector<2x128xf32>
    %327 = vector.extract_strided_slice %326 {offsets = [0, 0], sizes = [2, 32], strides = [1, 1]} : vector<2x128xf32> to vector<2x32xf32>
    %328 = vector.extract_strided_slice %326 {offsets = [0, 32], sizes = [2, 32], strides = [1, 1]} : vector<2x128xf32> to vector<2x32xf32>
    %329 = vector.extract_strided_slice %326 {offsets = [0, 64], sizes = [2, 32], strides = [1, 1]} : vector<2x128xf32> to vector<2x32xf32>
    %330 = vector.extract_strided_slice %326 {offsets = [0, 96], sizes = [2, 32], strides = [1, 1]} : vector<2x128xf32> to vector<2x32xf32>
    %331 = arith.mulf %328, %311 : vector<2x32xf32>
    %332 = arith.mulf %327, %329 : vector<2x32xf32>
    %333 = arith.addf %331, %332 : vector<2x32xf32>
    %334 = math.tanh %333 : vector<2x32xf32>
    %335 = arith.mulf %330, %334 : vector<2x32xf32>
    %c0_171 = arith.constant 0 : index
    %c0_172 = arith.constant 0 : index
    %336 = vector.load %arg8[%c0_171, %c0_172] : memref<2x32xf32, #tpu.memory_space<vmem>>, vector<2x32xf32>
    tpu.vector_store %arg8[%c0_171, %c0_172], %335 {strides = array<i32>} : memref<2x32xf32, #tpu.memory_space<vmem>>, vector<2x32xf32>,
    %c0_173 = arith.constant 0 : index
    %c0_174 = arith.constant 0 : index
    %337 = vector.load %arg9[%c0_173, %c0_174] : memref<2x32xf32, #tpu.memory_space<vmem>>, vector<2x32xf32>
    tpu.vector_store %arg9[%c0_173, %c0_174], %333 {strides = array<i32>} : memref<2x32xf32, #tpu.memory_space<vmem>>, vector<2x32xf32>,
    %c3_i32_175 = arith.constant 3 : i32
    %c0_176 = arith.constant 0 : index
    %c0_177 = arith.constant 0 : index
    %338 = vector.load %arg8[%c0_176, %c0_177] : memref<2x32xf32, #tpu.memory_space<vmem>>, vector<2x32xf32>
    %c0_178 = arith.constant 0 : index
    %c0_179 = arith.constant 0 : index
    %339 = vector.load %arg9[%c0_178, %c0_179] : memref<2x32xf32, #tpu.memory_space<vmem>>, vector<2x32xf32>
    %340 = arith.index_cast %c3_i32_175 : i32 to index
    %c0_180 = arith.constant 0 : index
    %c0_181 = arith.constant 0 : index
    %341 = vector.load %arg7[%340, %c0_180, %c0_181] : memref<8x2x32xf32, #tpu.memory_space<vmem>>, vector<1x2x32xf32>
    %342 = vector.shape_cast %341 : vector<1x2x32xf32> to vector<2x32xf32>
    %cst_182 = arith.constant dense<0.000000e+00> : vector<2x128xf32>
    %343 = tpu.matmul %342, %251, %cst_182 {dimension_numbers = #tpu.dot_dimension_numbers<[1], [0], [0], [1], [0, 0, 1, 1], [], []>} : vector<2x32xf32>, vector<32x128xf32>, vector<2x128xf32> -> vector<2x128xf32>
    %344 = vector.broadcast %253 : vector<1x128xf32> to vector<2x128xf32>
    %345 = arith.addf %343, %344 : vector<2x128xf32>
    %cst_183 = arith.constant dense<0.000000e+00> : vector<2x128xf32>
    %346 = tpu.matmul %338, %249, %cst_183 {dimension_numbers = #tpu.dot_dimension_numbers<[1], [0], [0], [1], [0, 0, 1, 1], [], []>} : vector<2x32xf32>, vector<32x128xf32>, vector<2x128xf32> -> vector<2x128xf32>
    %347 = arith.addf %345, %346 : vector<2x128xf32>
    %348 = math.tanh %347 : vector<2x128xf32>
    %349 = arith.negf %347 : vector<2x128xf32>
    %350 = math.exp %349 : vector<2x128xf32>
    %cst_184 = arith.constant 1.000000e+00 : f32
    %351 = vector.broadcast %cst_184 : f32 to vector<2x128xf32>
    %352 = arith.addf %351, %350 : vector<2x128xf32>
    %353 = arith.divf %351, %352 : vector<2x128xf32>
    %354 = arith.select %5, %348, %353 : vector<2x128xi1>, vector<2x128xf32>
    %355 = vector.extract_strided_slice %354 {offsets = [0, 0], sizes = [2, 32], strides = [1, 1]} : vector<2x128xf32> to vector<2x32xf32>
    %356 = vector.extract_strided_slice %354 {offsets = [0, 32], sizes = [2, 32], strides = [1, 1]} : vector<2x128xf32> to vector<2x32xf32>
    %357 = vector.extract_strided_slice %354 {offsets = [0, 64], sizes = [2, 32], strides = [1, 1]} : vector<2x128xf32> to vector<2x32xf32>
    %358 = vector.extract_strided_slice %354 {offsets = [0, 96], sizes = [2, 32], strides = [1, 1]} : vector<2x128xf32> to vector<2x32xf32>
    %359 = arith.mulf %356, %339 : vector<2x32xf32>
    %360 = arith.mulf %355, %357 : vector<2x32xf32>
    %361 = arith.addf %359, %360 : vector<2x32xf32>
    %362 = math.tanh %361 : vector<2x32xf32>
    %363 = arith.mulf %358, %362 : vector<2x32xf32>
    %c0_185 = arith.constant 0 : index
    %c0_186 = arith.constant 0 : index
    %364 = vector.load %arg8[%c0_185, %c0_186] : memref<2x32xf32, #tpu.memory_space<vmem>>, vector<2x32xf32>
    tpu.vector_store %arg8[%c0_185, %c0_186], %363 {strides = array<i32>} : memref<2x32xf32, #tpu.memory_space<vmem>>, vector<2x32xf32>,
    %c0_187 = arith.constant 0 : index
    %c0_188 = arith.constant 0 : index
    %365 = vector.load %arg9[%c0_187, %c0_188] : memref<2x32xf32, #tpu.memory_space<vmem>>, vector<2x32xf32>
    tpu.vector_store %arg9[%c0_187, %c0_188], %361 {strides = array<i32>} : memref<2x32xf32, #tpu.memory_space<vmem>>, vector<2x32xf32>,
    %c4_i32_189 = arith.constant 4 : i32
    %c0_190 = arith.constant 0 : index
    %c0_191 = arith.constant 0 : index
    %366 = vector.load %arg8[%c0_190, %c0_191] : memref<2x32xf32, #tpu.memory_space<vmem>>, vector<2x32xf32>
    %c0_192 = arith.constant 0 : index
    %c0_193 = arith.constant 0 : index
    %367 = vector.load %arg9[%c0_192, %c0_193] : memref<2x32xf32, #tpu.memory_space<vmem>>, vector<2x32xf32>
    %368 = arith.index_cast %c4_i32_189 : i32 to index
    %c0_194 = arith.constant 0 : index
    %c0_195 = arith.constant 0 : index
    %369 = vector.load %arg7[%368, %c0_194, %c0_195] : memref<8x2x32xf32, #tpu.memory_space<vmem>>, vector<1x2x32xf32>
    %370 = vector.shape_cast %369 : vector<1x2x32xf32> to vector<2x32xf32>
    %cst_196 = arith.constant dense<0.000000e+00> : vector<2x128xf32>
    %371 = tpu.matmul %370, %251, %cst_196 {dimension_numbers = #tpu.dot_dimension_numbers<[1], [0], [0], [1], [0, 0, 1, 1], [], []>} : vector<2x32xf32>, vector<32x128xf32>, vector<2x128xf32> -> vector<2x128xf32>
    %372 = vector.broadcast %253 : vector<1x128xf32> to vector<2x128xf32>
    %373 = arith.addf %371, %372 : vector<2x128xf32>
    %cst_197 = arith.constant dense<0.000000e+00> : vector<2x128xf32>
    %374 = tpu.matmul %366, %249, %cst_197 {dimension_numbers = #tpu.dot_dimension_numbers<[1], [0], [0], [1], [0, 0, 1, 1], [], []>} : vector<2x32xf32>, vector<32x128xf32>, vector<2x128xf32> -> vector<2x128xf32>
    %375 = arith.addf %373, %374 : vector<2x128xf32>
    %376 = math.tanh %375 : vector<2x128xf32>
    %377 = arith.negf %375 : vector<2x128xf32>
    %378 = math.exp %377 : vector<2x128xf32>
    %cst_198 = arith.constant 1.000000e+00 : f32
    %379 = vector.broadcast %cst_198 : f32 to vector<2x128xf32>
    %380 = arith.addf %379, %378 : vector<2x128xf32>
    %381 = arith.divf %379, %380 : vector<2x128xf32>
    %382 = arith.select %5, %376, %381 : vector<2x128xi1>, vector<2x128xf32>
    %383 = vector.extract_strided_slice %382 {offsets = [0, 0], sizes = [2, 32], strides = [1, 1]} : vector<2x128xf32> to vector<2x32xf32>
    %384 = vector.extract_strided_slice %382 {offsets = [0, 32], sizes = [2, 32], strides = [1, 1]} : vector<2x128xf32> to vector<2x32xf32>
    %385 = vector.extract_strided_slice %382 {offsets = [0, 64], sizes = [2, 32], strides = [1, 1]} : vector<2x128xf32> to vector<2x32xf32>
    %386 = vector.extract_strided_slice %382 {offsets = [0, 96], sizes = [2, 32], strides = [1, 1]} : vector<2x128xf32> to vector<2x32xf32>
    %387 = arith.mulf %384, %367 : vector<2x32xf32>
    %388 = arith.mulf %383, %385 : vector<2x32xf32>
    %389 = arith.addf %387, %388 : vector<2x32xf32>
    %390 = math.tanh %389 : vector<2x32xf32>
    %391 = arith.mulf %386, %390 : vector<2x32xf32>
    %c0_199 = arith.constant 0 : index
    %c0_200 = arith.constant 0 : index
    %392 = vector.load %arg8[%c0_199, %c0_200] : memref<2x32xf32, #tpu.memory_space<vmem>>, vector<2x32xf32>
    tpu.vector_store %arg8[%c0_199, %c0_200], %391 {strides = array<i32>} : memref<2x32xf32, #tpu.memory_space<vmem>>, vector<2x32xf32>,
    %c0_201 = arith.constant 0 : index
    %c0_202 = arith.constant 0 : index
    %393 = vector.load %arg9[%c0_201, %c0_202] : memref<2x32xf32, #tpu.memory_space<vmem>>, vector<2x32xf32>
    tpu.vector_store %arg9[%c0_201, %c0_202], %389 {strides = array<i32>} : memref<2x32xf32, #tpu.memory_space<vmem>>, vector<2x32xf32>,
    %c5_i32_203 = arith.constant 5 : i32
    %c0_204 = arith.constant 0 : index
    %c0_205 = arith.constant 0 : index
    %394 = vector.load %arg8[%c0_204, %c0_205] : memref<2x32xf32, #tpu.memory_space<vmem>>, vector<2x32xf32>
    %c0_206 = arith.constant 0 : index
    %c0_207 = arith.constant 0 : index
    %395 = vector.load %arg9[%c0_206, %c0_207] : memref<2x32xf32, #tpu.memory_space<vmem>>, vector<2x32xf32>
    %396 = arith.index_cast %c5_i32_203 : i32 to index
    %c0_208 = arith.constant 0 : index
    %c0_209 = arith.constant 0 : index
    %397 = vector.load %arg7[%396, %c0_208, %c0_209] : memref<8x2x32xf32, #tpu.memory_space<vmem>>, vector<1x2x32xf32>
    %398 = vector.shape_cast %397 : vector<1x2x32xf32> to vector<2x32xf32>
    %cst_210 = arith.constant dense<0.000000e+00> : vector<2x128xf32>
    %399 = tpu.matmul %398, %251, %cst_210 {dimension_numbers = #tpu.dot_dimension_numbers<[1], [0], [0], [1], [0, 0, 1, 1], [], []>} : vector<2x32xf32>, vector<32x128xf32>, vector<2x128xf32> -> vector<2x128xf32>
    %400 = vector.broadcast %253 : vector<1x128xf32> to vector<2x128xf32>
    %401 = arith.addf %399, %400 : vector<2x128xf32>
    %cst_211 = arith.constant dense<0.000000e+00> : vector<2x128xf32>
    %402 = tpu.matmul %394, %249, %cst_211 {dimension_numbers = #tpu.dot_dimension_numbers<[1], [0], [0], [1], [0, 0, 1, 1], [], []>} : vector<2x32xf32>, vector<32x128xf32>, vector<2x128xf32> -> vector<2x128xf32>
    %403 = arith.addf %401, %402 : vector<2x128xf32>
    %404 = math.tanh %403 : vector<2x128xf32>
    %405 = arith.negf %403 : vector<2x128xf32>
    %406 = math.exp %405 : vector<2x128xf32>
    %cst_212 = arith.constant 1.000000e+00 : f32
    %407 = vector.broadcast %cst_212 : f32 to vector<2x128xf32>
    %408 = arith.addf %407, %406 : vector<2x128xf32>
    %409 = arith.divf %407, %408 : vector<2x128xf32>
    %410 = arith.select %5, %404, %409 : vector<2x128xi1>, vector<2x128xf32>
    %411 = vector.extract_strided_slice %410 {offsets = [0, 0], sizes = [2, 32], strides = [1, 1]} : vector<2x128xf32> to vector<2x32xf32>
    %412 = vector.extract_strided_slice %410 {offsets = [0, 32], sizes = [2, 32], strides = [1, 1]} : vector<2x128xf32> to vector<2x32xf32>
    %413 = vector.extract_strided_slice %410 {offsets = [0, 64], sizes = [2, 32], strides = [1, 1]} : vector<2x128xf32> to vector<2x32xf32>
    %414 = vector.extract_strided_slice %410 {offsets = [0, 96], sizes = [2, 32], strides = [1, 1]} : vector<2x128xf32> to vector<2x32xf32>
    %415 = arith.mulf %412, %395 : vector<2x32xf32>
    %416 = arith.mulf %411, %413 : vector<2x32xf32>
    %417 = arith.addf %415, %416 : vector<2x32xf32>
    %418 = math.tanh %417 : vector<2x32xf32>
    %419 = arith.mulf %414, %418 : vector<2x32xf32>
    %c0_213 = arith.constant 0 : index
    %c0_214 = arith.constant 0 : index
    %420 = vector.load %arg8[%c0_213, %c0_214] : memref<2x32xf32, #tpu.memory_space<vmem>>, vector<2x32xf32>
    tpu.vector_store %arg8[%c0_213, %c0_214], %419 {strides = array<i32>} : memref<2x32xf32, #tpu.memory_space<vmem>>, vector<2x32xf32>,
    %c0_215 = arith.constant 0 : index
    %c0_216 = arith.constant 0 : index
    %421 = vector.load %arg9[%c0_215, %c0_216] : memref<2x32xf32, #tpu.memory_space<vmem>>, vector<2x32xf32>
    tpu.vector_store %arg9[%c0_215, %c0_216], %417 {strides = array<i32>} : memref<2x32xf32, #tpu.memory_space<vmem>>, vector<2x32xf32>,
    %c6_i32_217 = arith.constant 6 : i32
    %c0_218 = arith.constant 0 : index
    %c0_219 = arith.constant 0 : index
    %422 = vector.load %arg8[%c0_218, %c0_219] : memref<2x32xf32, #tpu.memory_space<vmem>>, vector<2x32xf32>
    %c0_220 = arith.constant 0 : index
    %c0_221 = arith.constant 0 : index
    %423 = vector.load %arg9[%c0_220, %c0_221] : memref<2x32xf32, #tpu.memory_space<vmem>>, vector<2x32xf32>
    %424 = arith.index_cast %c6_i32_217 : i32 to index
    %c0_222 = arith.constant 0 : index
    %c0_223 = arith.constant 0 : index
    %425 = vector.load %arg7[%424, %c0_222, %c0_223] : memref<8x2x32xf32, #tpu.memory_space<vmem>>, vector<1x2x32xf32>
    %426 = vector.shape_cast %425 : vector<1x2x32xf32> to vector<2x32xf32>
    %cst_224 = arith.constant dense<0.000000e+00> : vector<2x128xf32>
    %427 = tpu.matmul %426, %251, %cst_224 {dimension_numbers = #tpu.dot_dimension_numbers<[1], [0], [0], [1], [0, 0, 1, 1], [], []>} : vector<2x32xf32>, vector<32x128xf32>, vector<2x128xf32> -> vector<2x128xf32>
    %428 = vector.broadcast %253 : vector<1x128xf32> to vector<2x128xf32>
    %429 = arith.addf %427, %428 : vector<2x128xf32>
    %cst_225 = arith.constant dense<0.000000e+00> : vector<2x128xf32>
    %430 = tpu.matmul %422, %249, %cst_225 {dimension_numbers = #tpu.dot_dimension_numbers<[1], [0], [0], [1], [0, 0, 1, 1], [], []>} : vector<2x32xf32>, vector<32x128xf32>, vector<2x128xf32> -> vector<2x128xf32>
    %431 = arith.addf %429, %430 : vector<2x128xf32>
    %432 = math.tanh %431 : vector<2x128xf32>
    %433 = arith.negf %431 : vector<2x128xf32>
    %434 = math.exp %433 : vector<2x128xf32>
    %cst_226 = arith.constant 1.000000e+00 : f32
    %435 = vector.broadcast %cst_226 : f32 to vector<2x128xf32>
    %436 = arith.addf %435, %434 : vector<2x128xf32>
    %437 = arith.divf %435, %436 : vector<2x128xf32>
    %438 = arith.select %5, %432, %437 : vector<2x128xi1>, vector<2x128xf32>
    %439 = vector.extract_strided_slice %438 {offsets = [0, 0], sizes = [2, 32], strides = [1, 1]} : vector<2x128xf32> to vector<2x32xf32>
    %440 = vector.extract_strided_slice %438 {offsets = [0, 32], sizes = [2, 32], strides = [1, 1]} : vector<2x128xf32> to vector<2x32xf32>
    %441 = vector.extract_strided_slice %438 {offsets = [0, 64], sizes = [2, 32], strides = [1, 1]} : vector<2x128xf32> to vector<2x32xf32>
    %442 = vector.extract_strided_slice %438 {offsets = [0, 96], sizes = [2, 32], strides = [1, 1]} : vector<2x128xf32> to vector<2x32xf32>
    %443 = arith.mulf %440, %423 : vector<2x32xf32>
    %444 = arith.mulf %439, %441 : vector<2x32xf32>
    %445 = arith.addf %443, %444 : vector<2x32xf32>
    %446 = math.tanh %445 : vector<2x32xf32>
    %447 = arith.mulf %442, %446 : vector<2x32xf32>
    %c0_227 = arith.constant 0 : index
    %c0_228 = arith.constant 0 : index
    %448 = vector.load %arg8[%c0_227, %c0_228] : memref<2x32xf32, #tpu.memory_space<vmem>>, vector<2x32xf32>
    tpu.vector_store %arg8[%c0_227, %c0_228], %447 {strides = array<i32>} : memref<2x32xf32, #tpu.memory_space<vmem>>, vector<2x32xf32>,
    %c0_229 = arith.constant 0 : index
    %c0_230 = arith.constant 0 : index
    %449 = vector.load %arg9[%c0_229, %c0_230] : memref<2x32xf32, #tpu.memory_space<vmem>>, vector<2x32xf32>
    tpu.vector_store %arg9[%c0_229, %c0_230], %445 {strides = array<i32>} : memref<2x32xf32, #tpu.memory_space<vmem>>, vector<2x32xf32>,
    %c7_i32_231 = arith.constant 7 : i32
    %c0_232 = arith.constant 0 : index
    %c0_233 = arith.constant 0 : index
    %450 = vector.load %arg8[%c0_232, %c0_233] : memref<2x32xf32, #tpu.memory_space<vmem>>, vector<2x32xf32>
    %c0_234 = arith.constant 0 : index
    %c0_235 = arith.constant 0 : index
    %451 = vector.load %arg9[%c0_234, %c0_235] : memref<2x32xf32, #tpu.memory_space<vmem>>, vector<2x32xf32>
    %452 = arith.index_cast %c7_i32_231 : i32 to index
    %c0_236 = arith.constant 0 : index
    %c0_237 = arith.constant 0 : index
    %453 = vector.load %arg7[%452, %c0_236, %c0_237] : memref<8x2x32xf32, #tpu.memory_space<vmem>>, vector<1x2x32xf32>
    %454 = vector.shape_cast %453 : vector<1x2x32xf32> to vector<2x32xf32>
    %cst_238 = arith.constant dense<0.000000e+00> : vector<2x128xf32>
    %455 = tpu.matmul %454, %251, %cst_238 {dimension_numbers = #tpu.dot_dimension_numbers<[1], [0], [0], [1], [0, 0, 1, 1], [], []>} : vector<2x32xf32>, vector<32x128xf32>, vector<2x128xf32> -> vector<2x128xf32>
    %456 = vector.broadcast %253 : vector<1x128xf32> to vector<2x128xf32>
    %457 = arith.addf %455, %456 : vector<2x128xf32>
    %cst_239 = arith.constant dense<0.000000e+00> : vector<2x128xf32>
    %458 = tpu.matmul %450, %249, %cst_239 {dimension_numbers = #tpu.dot_dimension_numbers<[1], [0], [0], [1], [0, 0, 1, 1], [], []>} : vector<2x32xf32>, vector<32x128xf32>, vector<2x128xf32> -> vector<2x128xf32>
    %459 = arith.addf %457, %458 : vector<2x128xf32>
    %460 = math.tanh %459 : vector<2x128xf32>
    %461 = arith.negf %459 : vector<2x128xf32>
    %462 = math.exp %461 : vector<2x128xf32>
    %cst_240 = arith.constant 1.000000e+00 : f32
    %463 = vector.broadcast %cst_240 : f32 to vector<2x128xf32>
    %464 = arith.addf %463, %462 : vector<2x128xf32>
    %465 = arith.divf %463, %464 : vector<2x128xf32>
    %466 = arith.select %5, %460, %465 : vector<2x128xi1>, vector<2x128xf32>
    %467 = vector.extract_strided_slice %466 {offsets = [0, 0], sizes = [2, 32], strides = [1, 1]} : vector<2x128xf32> to vector<2x32xf32>
    %468 = vector.extract_strided_slice %466 {offsets = [0, 32], sizes = [2, 32], strides = [1, 1]} : vector<2x128xf32> to vector<2x32xf32>
    %469 = vector.extract_strided_slice %466 {offsets = [0, 64], sizes = [2, 32], strides = [1, 1]} : vector<2x128xf32> to vector<2x32xf32>
    %470 = vector.extract_strided_slice %466 {offsets = [0, 96], sizes = [2, 32], strides = [1, 1]} : vector<2x128xf32> to vector<2x32xf32>
    %471 = arith.mulf %468, %451 : vector<2x32xf32>
    %472 = arith.mulf %467, %469 : vector<2x32xf32>
    %473 = arith.addf %471, %472 : vector<2x32xf32>
    %474 = math.tanh %473 : vector<2x32xf32>
    %475 = arith.mulf %470, %474 : vector<2x32xf32>
    %c0_241 = arith.constant 0 : index
    %c0_242 = arith.constant 0 : index
    %476 = vector.load %arg8[%c0_241, %c0_242] : memref<2x32xf32, #tpu.memory_space<vmem>>, vector<2x32xf32>
    tpu.vector_store %arg8[%c0_241, %c0_242], %475 {strides = array<i32>} : memref<2x32xf32, #tpu.memory_space<vmem>>, vector<2x32xf32>,
    %c0_243 = arith.constant 0 : index
    %c0_244 = arith.constant 0 : index
    %477 = vector.load %arg9[%c0_243, %c0_244] : memref<2x32xf32, #tpu.memory_space<vmem>>, vector<2x32xf32>
    tpu.vector_store %arg9[%c0_243, %c0_244], %473 {strides = array<i32>} : memref<2x32xf32, #tpu.memory_space<vmem>>, vector<2x32xf32>,
    %c8_i32_245 = arith.constant 8 : i32
    %c0_246 = arith.constant 0 : index
    %c0_247 = arith.constant 0 : index
    %478 = vector.load %arg8[%c0_246, %c0_247] : memref<2x32xf32, #tpu.memory_space<vmem>>, vector<2x32xf32>
    %c0_248 = arith.constant 0 : index
    %c0_249 = arith.constant 0 : index
    %479 = vector.load %arg4[%c0_248, %c0_249] : memref<32x4xf32, #tpu.memory_space<vmem>>, vector<32x4xf32>
    %cst_250 = arith.constant dense<0.000000e+00> : vector<2x4xf32>
    %480 = tpu.matmul %478, %479, %cst_250 {dimension_numbers = #tpu.dot_dimension_numbers<[1], [0], [0], [1], [0, 0, 1, 1], [], []>} : vector<2x32xf32>, vector<32x4xf32>, vector<2x4xf32> -> vector<2x4xf32>
    %c0_251 = arith.constant 0 : index
    %c0_252 = arith.constant 0 : index
    %481 = vector.load %arg5[%c0_251, %c0_252] : memref<1x4xf32, #tpu.memory_space<vmem>>, vector<1x4xf32>
    %482 = vector.broadcast %481 : vector<1x4xf32> to vector<2x4xf32>
    %483 = arith.addf %480, %482 : vector<2x4xf32>
    %c0_253 = arith.constant 0 : index
    %c0_254 = arith.constant 0 : index
    %484 = vector.load %arg6[%c0_253, %c0_254] : memref<2x4xf32, #tpu.memory_space<vmem>>, vector<2x4xf32>
    tpu.vector_store %arg6[%c0_253, %c0_254], %483 {strides = array<i32>} : memref<2x4xf32, #tpu.memory_space<vmem>>, vector<2x4xf32>,
    return
  }
}

</mosaic_0001>

<llo_original>
// kernel: rnn_forward.1
$region0: #{rnn_forward.1}
  #allocation0 [shape = 'u32[]', space=smem, size = 0x4, offset = 0x4, fixed_abs, tag = 'smem constant byte address 0x4 - core index']
  #allocation1 [shape = 'u32[144,128]{1,0:T(1,128)}', space=vmem, size = 0x12000, scoped, tag = 'internal scratch']
  #allocation2 [shape = 'f32[8,2,32]{2,1,0:T(2,128)}', space=vmem, size = 0x2000, scoped, tag = 'scratch operand']
  #allocation3 [shape = 'f32[2,32]{1,0:T(2,128)}', space=vmem, size = 0x400, scoped, tag = 'scratch operand']
  #allocation4 [shape = 'f32[2,32]{1,0:T(2,128)}', space=vmem, size = 0x400, scoped, tag = 'scratch operand']
  %s0 = inlined_call_operand.vmem [shape: f32[8,2,128], index: 0, kind: input, shape index: {}]
  %s1 = inlined_call_operand.vmem [shape: f32[2,32,128], index: 1, kind: input, shape index: {}]
  %s2 = inlined_call_operand.vmem [shape: f32[1,32,128], index: 2, kind: input, shape index: {}]
  %s3 = inlined_call_operand.vmem [shape: f32[1,1,128], index: 3, kind: input, shape index: {}]
  %s4 = inlined_call_operand.vmem [shape: f32[32,4], index: 4, kind: input, shape index: {}]
  %s5 = inlined_call_operand.vmem [shape: f32[1,4], index: 5, kind: input, shape index: {}]
  %s6 = inlined_call_operand.hbm [shape: f32[2,4], index: 6, kind: output, shape index: {}]
  %s7 = sld [smem:[#allocation0]]
  $region34: #{rnn_forward.1} parent=0
    _
  %s9 = ssub.s32 1, %s7
  %s10 = scalar_select 0, %s9, %s7
  $region1: #{rnn_forward.1} parent=0
    #allocation5 [shape = 'u8[1024]{0}', space=vmem, size = 0x400, scoped, tag = 'output window, operand 0, single buffered']
    #allocation6 [shape = 's32[1]{0}', space=sflag, size = 0x4, scoped, tag = 'scoped memory for rnn_forward.1']
    %11 = vsyncpa [#allocation6], 0
    // Predicated region
    $region2: #{rnn_forward.1} parent=1 // pred_check
      _
    $region3: #{rnn_forward.1} parent=1 // pred_check_branch
      %13 = sbr.rel (0) target = $region5
    $region4: #{rnn_forward.1} parent=1 // pred_region
      _
    $region5: #{rnn_forward.1} parent=1 // pred_fallthru
      _
    // Predicated region
    $region6: #{rnn_forward.1} parent=1 // pred_check
      _
    $region7: #{rnn_forward.1} parent=1 // pred_check_branch
      %15 = sbr.rel (0) target = $region9
    $region8: #{rnn_forward.1} parent=1 // pred_region
      _
    $region9: #{rnn_forward.1} parent=1 // pred_fallthru
      _
    // Predicated region
    $region10: #{rnn_forward.1} parent=1 // pred_check
      _
    $region11: #{rnn_forward.1} parent=1 // pred_check_branch
      %17 = sbr.rel (0) target = $region13
    $region12: #{rnn_forward.1} parent=1 // pred_region
      _
    $region13: #{rnn_forward.1} parent=1 // pred_fallthru
      _
    // Predicated region
    $region14: #{rnn_forward.1} parent=1 // pred_check
      _
    $region15: #{rnn_forward.1} parent=1 // pred_check_branch
      %19 = sbr.rel (0) target = $region17
    $region16: #{rnn_forward.1} parent=1 // pred_region
      _
    $region17: #{rnn_forward.1} parent=1 // pred_fallthru
      _
    // Predicated region
    $region18: #{rnn_forward.1} parent=1 // pred_check
      _
    $region19: #{rnn_forward.1} parent=1 // pred_check_branch
      %21 = sbr.rel (0) target = $region21
    $region20: #{rnn_forward.1} parent=1 // pred_region
      _
    $region21: #{rnn_forward.1} parent=1 // pred_fallthru
      _
    // Predicated region
    $region22: #{rnn_forward.1} parent=1 // pred_check
      _
    $region23: #{rnn_forward.1} parent=1 // pred_check_branch
      %23 = sbr.rel (0) target = $region25
    $region24: #{rnn_forward.1} parent=1 // pred_region
      _
    $region25: #{rnn_forward.1} parent=1 // pred_fallthru
      _
    %v24 = vlaneseq
    %v25 = vand.u32 %v24, 127
    %vm26 = vcmp.ge.s32.totalorder %v25, 64
    %vm27 = vcmp.lt.s32.totalorder %v25, 96
    %vm28 = vmand %vm26, %vm27
    %vm29 = vcmask 254976
    %30 = vst.msk [vmem:[#allocation3] sm:$0x3] %vm29, 0.0
    %31 = vst.msk [vmem:[#allocation4] sm:$0x3] %vm29, 0.0
    %v32 = vld [vmem:[%s1] sm:$0xff]
    %v33 = vld [vmem:[%s1 + $0x8] sm:$0xff]
    %v34 = vld [vmem:[%s1 + $0x10] sm:$0xff]
    %v35 = vld [vmem:[%s1 + $0x18] sm:$0xff]
    %v36 = vld [vmem:[#allocation3] sm:$0x3]
    %v37 = vld [vmem:[#allocation4] sm:$0x3]
    %v38 = vld [vmem:[%s0] sm:$0x3]
    %vm39 = vcmask 261120
    %v41 = vsel %vm39, %v36, 0
    %43 = vmatprep.subr.mxu0 0.0
    %44 = vmatpush1.msra.mxu0 %v32
    %45 = vmatprep.subr.mxu0 0.0
    %46 = vmatpush1.msra.mxu0 %v33
    %47 = vmatprep.subr.mxu0 0.0
    %48 = vmatpush1.msra.mxu0 %v34
    %49 = vmatprep.subr.mxu0 0.0
    %50 = vmatpush1.msra.mxu0 %v35
    %51 = vmatprep.subr.mxu0 0.0
    %52 = vmatpush1.msra.mxu0 0.0
    %53 = vmatprep.subr.mxu0 0.0
    %54 = vmatpush1.msra.mxu0 0.0
    %55 = vmatprep.subr.mxu0 0.0
    %56 = vmatpush1.msra.mxu0 0.0
    %57 = vmatprep.subr.mxu0 0.0
    %58 = vmatpush1.msra.mxu0 0.0
    %59 = vmatprep.subr.mxu0 0.0
    %60 = vmatpush1.msra.mxu0 0.0
    %61 = vmatprep.subr.mxu0 0.0
    %62 = vmatpush1.msra.mxu0 0.0
    %63 = vmatprep.subr.mxu0 0.0
    %64 = vmatpush1.msra.mxu0 0.0
    %65 = vmatprep.subr.mxu0 0.0
    %66 = vmatpush1.msra.mxu0 0.0
    %67 = vmatprep.subr.mxu0 0.0
    %68 = vmatpush1.msra.mxu0 0.0
    %69 = vmatprep.subr.mxu0 0.0
    %70 = vmatpush1.msra.mxu0 0.0
    %71 = vmatprep.subr.mxu0 0.0
    %72 = vmatpush1.msra.mxu0 0.0
    %73 = vmatprep.subr.mxu0 0.0
    %74 = vmatpush1.msra.mxu0 0.0
    %75 = vmatprep.subr.mxu0 0.0
    %76 = vmatpush1.msra.mxu0 0.0
    %77 = vmatprep.subr.mxu0 0.0
    %78 = vmatpush1.msra.mxu0 0.0
    %79 = vmatprep.subr.mxu0 0.0
    %80 = vmatpush1.msra.mxu0 0.0
    %81 = vmatprep.subr.mxu0 0.0
    %82 = vmatpush1.msra.mxu0 0.0
    %83 = vmatprep.subr.mxu0 0.0
    %84 = vmatpush1.msra.mxu0 0.0
    %85 = vmatprep.subr.mxu0 0.0
    %86 = vmatpush1.msra.mxu0 0.0
    %87 = vmatprep.subr.mxu0 0.0
    %88 = vmatpush1.msra.mxu0 0.0
    %89 = vmatprep.subr.mxu0 0.0
    %90 = vmatpush1.msra.mxu0 0.0
    %91 = vmatprep.subr.mxu0 0.0
    %92 = vmatpush1.msra.mxu0 0.0
    %93 = vmatprep.subr.mxu0 0.0
    %94 = vmatpush1.msra.mxu0 0.0
    %95 = vmatprep.subr.mxu0 0.0
    %96 = vmatpush1.msra.mxu0 0.0
    %97 = vmatprep.subr.mxu0 0.0
    %98 = vmatpush1.msra.mxu0 0.0
    %99 = vmatprep.subr.mxu0 0.0
    %100 = vmatpush1.msra.mxu0 0.0
    %101 = vmatprep.subr.mxu0 0.0
    %102 = vmatpush1.msra.mxu0 0.0
    %103 = vmatprep.subr.mxu0 0.0
    %104 = vmatpush1.msra.mxu0 0.0
    %105 = vmatprep.subr.mxu0 0.0
    %106 = vmatpush1.msra.mxu0 0.0
    %107 = vmatprep.mubr.f32.mxu0 0.0
    %108 = vmatmul.mubr.f32.gmra.mrb[0].mxu0 %v41
    %v109 = vpop.f32.mrb[0].mxu0
    %v110 = vadd.f32 0.0, %v109
    %v111 = vpop.f32.mrb[0].mxu0
    %112 = vdwg.mxu0
    %v113 = vadd.f32 %v38, %v110
    %v114 = vtanh.pop %v113
    %v115 = vxor.u32 %v113, 2147483648
    %v116 = vmul.f32 %v115, 1.442695
    %v117 = vpow.pop %v116
    %v118 = vadd.f32 %v117, 1.0
    %v119 = vrcp.pop %v118
    %v120 = vmul.f32 1.0, %v119
    %v121 = vsel %vm28, %v114, %v120
    %123 = vrot.lane.b32.xlu0 %v37, 32
    %v124 = vpop.permute.xlu0 %123
    %v126 = vmul.f32 %v121, %v124
    %128 = vrot.lane.b32.xlu0 %v121, 64
    %v129 = vpop.permute.xlu0 %128
    %v131 = vmul.f32 %v121, %v129
    %133 = vrot.lane.b32.xlu0 %v131, 32
    %v134 = vpop.permute.xlu0 %133
    %v136 = vadd.f32 %v126, %v134
    %v137 = vtanh.pop %v136
    %139 = vrot.lane.b32.xlu0 %v137, 64
    %v140 = vpop.permute.xlu0 %139
    %v142 = vmul.f32 %v121, %v140
    %144 = vrot.lane.b32.xlu0 %v142, 32
    %v145 = vpop.permute.xlu0 %144
    %147 = vst.msk [vmem:[#allocation3] sm:$0x3] %vm29, %v145
    %149 = vrot.lane.b32.xlu0 %v136, 96
    %v150 = vpop.permute.xlu0 %149
    %152 = vst.msk [vmem:[#allocation4] sm:$0x3] %vm29, %v150
    %153 = vst.msk [vmem:[#allocation2] sm:$0x3] %vm29, %v145
    %v154 = vld [vmem:[#allocation3] sm:$0x3]
    %v155 = vld [vmem:[#allocation4] sm:$0x3]
    %s156 = scalar_lea.vmem %s0, 2
    %v157 = vld [vmem:[%s156] sm:$0x3]
    %v159 = vsel %vm39, %v154, 0
    %161 = vmatprep.subr.mxu0 0.0
    %162 = vmatpush1.msra.mxu0 %v32
    %163 = vmatprep.subr.mxu0 0.0
    %164 = vmatpush1.msra.mxu0 %v33
    %165 = vmatprep.subr.mxu0 0.0
    %166 = vmatpush1.msra.mxu0 %v34
    %167 = vmatprep.subr.mxu0 0.0
    %168 = vmatpush1.msra.mxu0 %v35
    %169 = vmatprep.subr.mxu0 0.0
    %170 = vmatpush1.msra.mxu0 0.0
    %171 = vmatprep.subr.mxu0 0.0
    %172 = vmatpush1.msra.mxu0 0.0
    %173 = vmatprep.subr.mxu0 0.0
    %174 = vmatpush1.msra.mxu0 0.0
    %175 = vmatprep.subr.mxu0 0.0
    %176 = vmatpush1.msra.mxu0 0.0
    %177 = vmatprep.subr.mxu0 0.0
    %178 = vmatpush1.msra.mxu0 0.0
    %179 = vmatprep.subr.mxu0 0.0
    %180 = vmatpush1.msra.mxu0 0.0
    %181 = vmatprep.subr.mxu0 0.0
    %182 = vmatpush1.msra.mxu0 0.0
    %183 = vmatprep.subr.mxu0 0.0
    %184 = vmatpush1.msra.mxu0 0.0
    %185 = vmatprep.subr.mxu0 0.0
    %186 = vmatpush1.msra.mxu0 0.0
    %187 = vmatprep.subr.mxu0 0.0
    %188 = vmatpush1.msra.mxu0 0.0
    %189 = vmatprep.subr.mxu0 0.0
    %190 = vmatpush1.msra.mxu0 0.0
    %191 = vmatprep.subr.mxu0 0.0
    %192 = vmatpush1.msra.mxu0 0.0
    %193 = vmatprep.subr.mxu0 0.0
    %194 = vmatpush1.msra.mxu0 0.0
    %195 = vmatprep.subr.mxu0 0.0
    %196 = vmatpush1.msra.mxu0 0.0
    %197 = vmatprep.subr.mxu0 0.0
    %198 = vmatpush1.msra.mxu0 0.0
    %199 = vmatprep.subr.mxu0 0.0
    %200 = vmatpush1.msra.mxu0 0.0
    %201 = vmatprep.subr.mxu0 0.0
    %202 = vmatpush1.msra.mxu0 0.0
    %203 = vmatprep.subr.mxu0 0.0
    %204 = vmatpush1.msra.mxu0 0.0
    %205 = vmatprep.subr.mxu0 0.0
    %206 = vmatpush1.msra.mxu0 0.0
    %207 = vmatprep.subr.mxu0 0.0
    %208 = vmatpush1.msra.mxu0 0.0
    %209 = vmatprep.subr.mxu0 0.0
    %210 = vmatpush1.msra.mxu0 0.0
    %211 = vmatprep.subr.mxu0 0.0
    %212 = vmatpush1.msra.mxu0 0.0
    %213 = vmatprep.subr.mxu0 0.0
    %214 = vmatpush1.msra.mxu0 0.0
    %215 = vmatprep.subr.mxu0 0.0
    %216 = vmatpush1.msra.mxu0 0.0
    %217 = vmatprep.subr.mxu0 0.0
    %218 = vmatpush1.msra.mxu0 0.0
    %219 = vmatprep.subr.mxu0 0.0
    %220 = vmatpush1.msra.mxu0 0.0
    %221 = vmatprep.subr.mxu0 0.0
    %222 = vmatpush1.msra.mxu0 0.0
    %223 = vmatprep.subr.mxu0 0.0
    %224 = vmatpush1.msra.mxu0 0.0
    %225 = vmatprep.mubr.f32.mxu0 0.0
    %226 = vmatmul.mubr.f32.gmra.mrb[0].mxu0 %v159
    %v227 = vpop.f32.mrb[0].mxu0
    %v228 = vadd.f32 0.0, %v227
    %v229 = vpop.f32.mrb[0].mxu0
    %230 = vdwg.mxu0
    %v231 = vadd.f32 %v157, %v228
    %v232 = vtanh.pop %v231
    %v233 = vxor.u32 %v231, 2147483648
    %v234 = vmul.f32 %v233, 1.442695
    %v235 = vpow.pop %v234
    %v236 = vadd.f32 %v235, 1.0
    %v237 = vrcp.pop %v236
    %v238 = vmul.f32 1.0, %v237
    %v239 = vsel %vm28, %v232, %v238
    %241 = vrot.lane.b32.xlu0 %v155, 32
    %v242 = vpop.permute.xlu0 %241
    %v244 = vmul.f32 %v239, %v242
    %246 = vrot.lane.b32.xlu0 %v239, 64
    %v247 = vpop.permute.xlu0 %246
    %v249 = vmul.f32 %v239, %v247
    %251 = vrot.lane.b32.xlu0 %v249, 32
    %v252 = vpop.permute.xlu0 %251
    %v254 = vadd.f32 %v244, %v252
    %v255 = vtanh.pop %v254
    %257 = vrot.lane.b32.xlu0 %v255, 64
    %v258 = vpop.permute.xlu0 %257
    %v260 = vmul.f32 %v239, %v258
    %262 = vrot.lane.b32.xlu0 %v260, 32
    %v263 = vpop.permute.xlu0 %262
    %265 = vst.msk [vmem:[#allocation3] sm:$0x3] %vm29, %v263
    %267 = vrot.lane.b32.xlu0 %v254, 96
    %v268 = vpop.permute.xlu0 %267
    %270 = vst.msk [vmem:[#allocation4] sm:$0x3] %vm29, %v268
    %s271 = scalar_lea.vmem [#allocation2], 2
    %272 = vst.msk [vmem:[%s271] sm:$0x3] %vm29, %v263
    %v273 = vld [vmem:[#allocation3] sm:$0x3]
    %v274 = vld [vmem:[#allocation4] sm:$0x3]
    %s275 = scalar_lea.vmem %s0, 4
    %v276 = vld [vmem:[%s275] sm:$0x3]
    %v278 = vsel %vm39, %v273, 0
    %280 = vmatprep.subr.mxu0 0.0
    %281 = vmatpush1.msra.mxu0 %v32
    %282 = vmatprep.subr.mxu0 0.0
    %283 = vmatpush1.msra.mxu0 %v33
    %284 = vmatprep.subr.mxu0 0.0
    %285 = vmatpush1.msra.mxu0 %v34
    %286 = vmatprep.subr.mxu0 0.0
    %287 = vmatpush1.msra.mxu0 %v35
    %288 = vmatprep.subr.mxu0 0.0
    %289 = vmatpush1.msra.mxu0 0.0
    %290 = vmatprep.subr.mxu0 0.0
    %291 = vmatpush1.msra.mxu0 0.0
    %292 = vmatprep.subr.mxu0 0.0
    %293 = vmatpush1.msra.mxu0 0.0
    %294 = vmatprep.subr.mxu0 0.0
    %295 = vmatpush1.msra.mxu0 0.0
    %296 = vmatprep.subr.mxu0 0.0
    %297 = vmatpush1.msra.mxu0 0.0
    %298 = vmatprep.subr.mxu0 0.0
    %299 = vmatpush1.msra.mxu0 0.0
    %300 = vmatprep.subr.mxu0 0.0
    %301 = vmatpush1.msra.mxu0 0.0
    %302 = vmatprep.subr.mxu0 0.0
    %303 = vmatpush1.msra.mxu0 0.0
    %304 = vmatprep.subr.mxu0 0.0
    %305 = vmatpush1.msra.mxu0 0.0
    %306 = vmatprep.subr.mxu0 0.0
    %307 = vmatpush1.msra.mxu0 0.0
    %308 = vmatprep.subr.mxu0 0.0
    %309 = vmatpush1.msra.mxu0 0.0
    %310 = vmatprep.subr.mxu0 0.0
    %311 = vmatpush1.msra.mxu0 0.0
    %312 = vmatprep.subr.mxu0 0.0
    %313 = vmatpush1.msra.mxu0 0.0
    %314 = vmatprep.subr.mxu0 0.0
    %315 = vmatpush1.msra.mxu0 0.0
    %316 = vmatprep.subr.mxu0 0.0
    %317 = vmatpush1.msra.mxu0 0.0
    %318 = vmatprep.subr.mxu0 0.0
    %319 = vmatpush1.msra.mxu0 0.0
    %320 = vmatprep.subr.mxu0 0.0
    %321 = vmatpush1.msra.mxu0 0.0
    %322 = vmatprep.subr.mxu0 0.0
    %323 = vmatpush1.msra.mxu0 0.0
    %324 = vmatprep.subr.mxu0 0.0
    %325 = vmatpush1.msra.mxu0 0.0
    %326 = vmatprep.subr.mxu0 0.0
    %327 = vmatpush1.msra.mxu0 0.0
    %328 = vmatprep.subr.mxu0 0.0
    %329 = vmatpush1.msra.mxu0 0.0
    %330 = vmatprep.subr.mxu0 0.0
    %331 = vmatpush1.msra.mxu0 0.0
    %332 = vmatprep.subr.mxu0 0.0
    %333 = vmatpush1.msra.mxu0 0.0
    %334 = vmatprep.subr.mxu0 0.0
    %335 = vmatpush1.msra.mxu0 0.0
    %336 = vmatprep.subr.mxu0 0.0
    %337 = vmatpush1.msra.mxu0 0.0
    %338 = vmatprep.subr.mxu0 0.0
    %339 = vmatpush1.msra.mxu0 0.0
    %340 = vmatprep.subr.mxu0 0.0
    %341 = vmatpush1.msra.mxu0 0.0
    %342 = vmatprep.subr.mxu0 0.0
    %343 = vmatpush1.msra.mxu0 0.0
    %344 = vmatprep.mubr.f32.mxu0 0.0
    %345 = vmatmul.mubr.f32.gmra.mrb[0].mxu0 %v278
    %v346 = vpop.f32.mrb[0].mxu0
    %v347 = vadd.f32 0.0, %v346
    %v348 = vpop.f32.mrb[0].mxu0
    %349 = vdwg.mxu0
    %v350 = vadd.f32 %v276, %v347
    %v351 = vtanh.pop %v350
    %v352 = vxor.u32 %v350, 2147483648
    %v353 = vmul.f32 %v352, 1.442695
    %v354 = vpow.pop %v353
    %v355 = vadd.f32 %v354, 1.0
    %v356 = vrcp.pop %v355
    %v357 = vmul.f32 1.0, %v356
    %v358 = vsel %vm28, %v351, %v357
    %360 = vrot.lane.b32.xlu0 %v274, 32
    %v361 = vpop.permute.xlu0 %360
    %v363 = vmul.f32 %v358, %v361
    %365 = vrot.lane.b32.xlu0 %v358, 64
    %v366 = vpop.permute.xlu0 %365
    %v368 = vmul.f32 %v358, %v366
    %370 = vrot.lane.b32.xlu0 %v368, 32
    %v371 = vpop.permute.xlu0 %370
    %v373 = vadd.f32 %v363, %v371
    %v374 = vtanh.pop %v373
    %376 = vrot.lane.b32.xlu0 %v374, 64
    %v377 = vpop.permute.xlu0 %376
    %v379 = vmul.f32 %v358, %v377
    %381 = vrot.lane.b32.xlu0 %v379, 32
    %v382 = vpop.permute.xlu0 %381
    %384 = vst.msk [vmem:[#allocation3] sm:$0x3] %vm29, %v382
    %386 = vrot.lane.b32.xlu0 %v373, 96
    %v387 = vpop.permute.xlu0 %386
    %389 = vst.msk [vmem:[#allocation4] sm:$0x3] %vm29, %v387
    %s390 = scalar_lea.vmem [#allocation2], 4
    %391 = vst.msk [vmem:[%s390] sm:$0x3] %vm29, %v382
    %v392 = vld [vmem:[#allocation3] sm:$0x3]
    %v393 = vld [vmem:[#allocation4] sm:$0x3]
    %s394 = scalar_lea.vmem %s0, 6
    %v395 = vld [vmem:[%s394] sm:$0x3]
    %v397 = vsel %vm39, %v392, 0
    %399 = vmatprep.subr.mxu0 0.0
    %400 = vmatpush1.msra.mxu0 %v32
    %401 = vmatprep.subr.mxu0 0.0
    %402 = vmatpush1.msra.mxu0 %v33
    %403 = vmatprep.subr.mxu0 0.0
    %404 = vmatpush1.msra.mxu0 %v34
    %405 = vmatprep.subr.mxu0 0.0
    %406 = vmatpush1.msra.mxu0 %v35
    %407 = vmatprep.subr.mxu0 0.0
    %408 = vmatpush1.msra.mxu0 0.0
    %409 = vmatprep.subr.mxu0 0.0
    %410 = vmatpush1.msra.mxu0 0.0
    %411 = vmatprep.subr.mxu0 0.0
    %412 = vmatpush1.msra.mxu0 0.0
    %413 = vmatprep.subr.mxu0 0.0
    %414 = vmatpush1.msra.mxu0 0.0
    %415 = vmatprep.subr.mxu0 0.0
    %416 = vmatpush1.msra.mxu0 0.0
    %417 = vmatprep.subr.mxu0 0.0
    %418 = vmatpush1.msra.mxu0 0.0
    %419 = vmatprep.subr.mxu0 0.0
    %420 = vmatpush1.msra.mxu0 0.0
    %421 = vmatprep.subr.mxu0 0.0
    %422 = vmatpush1.msra.mxu0 0.0
    %423 = vmatprep.subr.mxu0 0.0
    %424 = vmatpush1.msra.mxu0 0.0
    %425 = vmatprep.subr.mxu0 0.0
    %426 = vmatpush1.msra.mxu0 0.0
    %427 = vmatprep.subr.mxu0 0.0
    %428 = vmatpush1.msra.mxu0 0.0
    %429 = vmatprep.subr.mxu0 0.0
    %430 = vmatpush1.msra.mxu0 0.0
    %431 = vmatprep.subr.mxu0 0.0
    %432 = vmatpush1.msra.mxu0 0.0
    %433 = vmatprep.subr.mxu0 0.0
    %434 = vmatpush1.msra.mxu0 0.0
    %435 = vmatprep.subr.mxu0 0.0
    %436 = vmatpush1.msra.mxu0 0.0
    %437 = vmatprep.subr.mxu0 0.0
    %438 = vmatpush1.msra.mxu0 0.0
    %439 = vmatprep.subr.mxu0 0.0
    %440 = vmatpush1.msra.mxu0 0.0
    %441 = vmatprep.subr.mxu0 0.0
    %442 = vmatpush1.msra.mxu0 0.0
    %443 = vmatprep.subr.mxu0 0.0
    %444 = vmatpush1.msra.mxu0 0.0
    %445 = vmatprep.subr.mxu0 0.0
    %446 = vmatpush1.msra.mxu0 0.0
    %447 = vmatprep.subr.mxu0 0.0
    %448 = vmatpush1.msra.mxu0 0.0
    %449 = vmatprep.subr.mxu0 0.0
    %450 = vmatpush1.msra.mxu0 0.0
    %451 = vmatprep.subr.mxu0 0.0
    %452 = vmatpush1.msra.mxu0 0.0
    %453 = vmatprep.subr.mxu0 0.0
    %454 = vmatpush1.msra.mxu0 0.0
    %455 = vmatprep.subr.mxu0 0.0
    %456 = vmatpush1.msra.mxu0 0.0
    %457 = vmatprep.subr.mxu0 0.0
    %458 = vmatpush1.msra.mxu0 0.0
    %459 = vmatprep.subr.mxu0 0.0
    %460 = vmatpush1.msra.mxu0 0.0
    %461 = vmatprep.subr.mxu0 0.0
    %462 = vmatpush1.msra.mxu0 0.0
    %463 = vmatprep.mubr.f32.mxu0 0.0
    %464 = vmatmul.mubr.f32.gmra.mrb[0].mxu0 %v397
    %v465 = vpop.f32.mrb[0].mxu0
    %v466 = vadd.f32 0.0, %v465
    %v467 = vpop.f32.mrb[0].mxu0
    %468 = vdwg.mxu0
    %v469 = vadd.f32 %v395, %v466
    %v470 = vtanh.pop %v469
    %v471 = vxor.u32 %v469, 2147483648
    %v472 = vmul.f32 %v471, 1.442695
    %v473 = vpow.pop %v472
    %v474 = vadd.f32 %v473, 1.0
    %v475 = vrcp.pop %v474
    %v476 = vmul.f32 1.0, %v475
    %v477 = vsel %vm28, %v470, %v476
    %479 = vrot.lane.b32.xlu0 %v393, 32
    %v480 = vpop.permute.xlu0 %479
    %v482 = vmul.f32 %v477, %v480
    %484 = vrot.lane.b32.xlu0 %v477, 64
    %v485 = vpop.permute.xlu0 %484
    %v487 = vmul.f32 %v477, %v485
    %489 = vrot.lane.b32.xlu0 %v487, 32
    %v490 = vpop.permute.xlu0 %489
    %v492 = vadd.f32 %v482, %v490
    %v493 = vtanh.pop %v492
    %495 = vrot.lane.b32.xlu0 %v493, 64
    %v496 = vpop.permute.xlu0 %495
    %v498 = vmul.f32 %v477, %v496
    %500 = vrot.lane.b32.xlu0 %v498, 32
    %v501 = vpop.permute.xlu0 %500
    %503 = vst.msk [vmem:[#allocation3] sm:$0x3] %vm29, %v501
    %505 = vrot.lane.b32.xlu0 %v492, 96
    %v506 = vpop.permute.xlu0 %505
    %508 = vst.msk [vmem:[#allocation4] sm:$0x3] %vm29, %v506
    %s509 = scalar_lea.vmem [#allocation2], 6
    %510 = vst.msk [vmem:[%s509] sm:$0x3] %vm29, %v501
    %v511 = vld [vmem:[#allocation3] sm:$0x3]
    %v512 = vld [vmem:[#allocation4] sm:$0x3]
    %s513 = scalar_lea.vmem %s0, 8
    %v514 = vld [vmem:[%s513] sm:$0x3]
    %v516 = vsel %vm39, %v511, 0
    %518 = vmatprep.subr.mxu0 0.0
    %519 = vmatpush1.msra.mxu0 %v32
    %520 = vmatprep.subr.mxu0 0.0
    %521 = vmatpush1.msra.mxu0 %v33
    %522 = vmatprep.subr.mxu0 0.0
    %523 = vmatpush1.msra.mxu0 %v34
    %524 = vmatprep.subr.mxu0 0.0
    %525 = vmatpush1.msra.mxu0 %v35
    %526 = vmatprep.subr.mxu0 0.0
    %527 = vmatpush1.msra.mxu0 0.0
    %528 = vmatprep.subr.mxu0 0.0
    %529 = vmatpush1.msra.mxu0 0.0
    %530 = vmatprep.subr.mxu0 0.0
    %531 = vmatpush1.msra.mxu0 0.0
    %532 = vmatprep.subr.mxu0 0.0
    %533 = vmatpush1.msra.mxu0 0.0
    %534 = vmatprep.subr.mxu0 0.0
    %535 = vmatpush1.msra.mxu0 0.0
    %536 = vmatprep.subr.mxu0 0.0
    %537 = vmatpush1.msra.mxu0 0.0
    %538 = vmatprep.subr.mxu0 0.0
    %539 = vmatpush1.msra.mxu0 0.0
    %540 = vmatprep.subr.mxu0 0.0
    %541 = vmatpush1.msra.mxu0 0.0
    %542 = vmatprep.subr.mxu0 0.0
    %543 = vmatpush1.msra.mxu0 0.0
    %544 = vmatprep.subr.mxu0 0.0
    %545 = vmatpush1.msra.mxu0 0.0
    %546 = vmatprep.subr.mxu0 0.0
    %547 = vmatpush1.msra.mxu0 0.0
    %548 = vmatprep.subr.mxu0 0.0
    %549 = vmatpush1.msra.mxu0 0.0
    %550 = vmatprep.subr.mxu0 0.0
    %551 = vmatpush1.msra.mxu0 0.0
    %552 = vmatprep.subr.mxu0 0.0
    %553 = vmatpush1.msra.mxu0 0.0
    %554 = vmatprep.subr.mxu0 0.0
    %555 = vmatpush1.msra.mxu0 0.0
    %556 = vmatprep.subr.mxu0 0.0
    %557 = vmatpush1.msra.mxu0 0.0
    %558 = vmatprep.subr.mxu0 0.0
    %559 = vmatpush1.msra.mxu0 0.0
    %560 = vmatprep.subr.mxu0 0.0
    %561 = vmatpush1.msra.mxu0 0.0
    %562 = vmatprep.subr.mxu0 0.0
    %563 = vmatpush1.msra.mxu0 0.0
    %564 = vmatprep.subr.mxu0 0.0
    %565 = vmatpush1.msra.mxu0 0.0
    %566 = vmatprep.subr.mxu0 0.0
    %567 = vmatpush1.msra.mxu0 0.0
    %568 = vmatprep.subr.mxu0 0.0
    %569 = vmatpush1.msra.mxu0 0.0
    %570 = vmatprep.subr.mxu0 0.0
    %571 = vmatpush1.msra.mxu0 0.0
    %572 = vmatprep.subr.mxu0 0.0
    %573 = vmatpush1.msra.mxu0 0.0
    %574 = vmatprep.subr.mxu0 0.0
    %575 = vmatpush1.msra.mxu0 0.0
    %576 = vmatprep.subr.mxu0 0.0
    %577 = vmatpush1.msra.mxu0 0.0
    %578 = vmatprep.subr.mxu0 0.0
    %579 = vmatpush1.msra.mxu0 0.0
    %580 = vmatprep.subr.mxu0 0.0
    %581 = vmatpush1.msra.mxu0 0.0
    %582 = vmatprep.mubr.f32.mxu0 0.0
    %583 = vmatmul.mubr.f32.gmra.mrb[0].mxu0 %v516
    %v584 = vpop.f32.mrb[0].mxu0
    %v585 = vadd.f32 0.0, %v584
    %v586 = vpop.f32.mrb[0].mxu0
    %587 = vdwg.mxu0
    %v588 = vadd.f32 %v514, %v585
    %v589 = vtanh.pop %v588
    %v590 = vxor.u32 %v588, 2147483648
    %v591 = vmul.f32 %v590, 1.442695
    %v592 = vpow.pop %v591
    %v593 = vadd.f32 %v592, 1.0
    %v594 = vrcp.pop %v593
    %v595 = vmul.f32 1.0, %v594
    %v596 = vsel %vm28, %v589, %v595
    %598 = vrot.lane.b32.xlu0 %v512, 32
    %v599 = vpop.permute.xlu0 %598
    %v601 = vmul.f32 %v596, %v599
    %603 = vrot.lane.b32.xlu0 %v596, 64
    %v604 = vpop.permute.xlu0 %603
    %v606 = vmul.f32 %v596, %v604
    %608 = vrot.lane.b32.xlu0 %v606, 32
    %v609 = vpop.permute.xlu0 %608
    %v611 = vadd.f32 %v601, %v609
    %v612 = vtanh.pop %v611
    %614 = vrot.lane.b32.xlu0 %v612, 64
    %v615 = vpop.permute.xlu0 %614
    %v617 = vmul.f32 %v596, %v615
    %619 = vrot.lane.b32.xlu0 %v617, 32
    %v620 = vpop.permute.xlu0 %619
    %622 = vst.msk [vmem:[#allocation3] sm:$0x3] %vm29, %v620
    %624 = vrot.lane.b32.xlu0 %v611, 96
    %v625 = vpop.permute.xlu0 %624
    %627 = vst.msk [vmem:[#allocation4] sm:$0x3] %vm29, %v625
    %s628 = scalar_lea.vmem [#allocation2], 8
    %629 = vst.msk [vmem:[%s628] sm:$0x3] %vm29, %v620
    %v630 = vld [vmem:[#allocation3] sm:$0x3]
    %v631 = vld [vmem:[#allocation4] sm:$0x3]
    %s632 = scalar_lea.vmem %s0, 10
    %v633 = vld [vmem:[%s632] sm:$0x3]
    %v635 = vsel %vm39, %v630, 0
    %637 = vmatprep.subr.mxu0 0.0
    %638 = vmatpush1.msra.mxu0 %v32
    %639 = vmatprep.subr.mxu0 0.0
    %640 = vmatpush1.msra.mxu0 %v33
    %641 = vmatprep.subr.mxu0 0.0
    %642 = vmatpush1.msra.mxu0 %v34
    %643 = vmatprep.subr.mxu0 0.0
    %644 = vmatpush1.msra.mxu0 %v35
    %645 = vmatprep.subr.mxu0 0.0
    %646 = vmatpush1.msra.mxu0 0.0
    %647 = vmatprep.subr.mxu0 0.0
    %648 = vmatpush1.msra.mxu0 0.0
    %649 = vmatprep.subr.mxu0 0.0
    %650 = vmatpush1.msra.mxu0 0.0
    %651 = vmatprep.subr.mxu0 0.0
    %652 = vmatpush1.msra.mxu0 0.0
    %653 = vmatprep.subr.mxu0 0.0
    %654 = vmatpush1.msra.mxu0 0.0
    %655 = vmatprep.subr.mxu0 0.0
    %656 = vmatpush1.msra.mxu0 0.0
    %657 = vmatprep.subr.mxu0 0.0
    %658 = vmatpush1.msra.mxu0 0.0
    %659 = vmatprep.subr.mxu0 0.0
    %660 = vmatpush1.msra.mxu0 0.0
    %661 = vmatprep.subr.mxu0 0.0
    %662 = vmatpush1.msra.mxu0 0.0
    %663 = vmatprep.subr.mxu0 0.0
    %664 = vmatpush1.msra.mxu0 0.0
    %665 = vmatprep.subr.mxu0 0.0
    %666 = vmatpush1.msra.mxu0 0.0
    %667 = vmatprep.subr.mxu0 0.0
    %668 = vmatpush1.msra.mxu0 0.0
    %669 = vmatprep.subr.mxu0 0.0
    %670 = vmatpush1.msra.mxu0 0.0
    %671 = vmatprep.subr.mxu0 0.0
    %672 = vmatpush1.msra.mxu0 0.0
    %673 = vmatprep.subr.mxu0 0.0
    %674 = vmatpush1.msra.mxu0 0.0
    %675 = vmatprep.subr.mxu0 0.0
    %676 = vmatpush1.msra.mxu0 0.0
    %677 = vmatprep.subr.mxu0 0.0
    %678 = vmatpush1.msra.mxu0 0.0
    %679 = vmatprep.subr.mxu0 0.0
    %680 = vmatpush1.msra.mxu0 0.0
    %681 = vmatprep.subr.mxu0 0.0
    %682 = vmatpush1.msra.mxu0 0.0
    %683 = vmatprep.subr.mxu0 0.0
    %684 = vmatpush1.msra.mxu0 0.0
    %685 = vmatprep.subr.mxu0 0.0
    %686 = vmatpush1.msra.mxu0 0.0
    %687 = vmatprep.subr.mxu0 0.0
    %688 = vmatpush1.msra.mxu0 0.0
    %689 = vmatprep.subr.mxu0 0.0
    %690 = vmatpush1.msra.mxu0 0.0
    %691 = vmatprep.subr.mxu0 0.0
    %692 = vmatpush1.msra.mxu0 0.0
    %693 = vmatprep.subr.mxu0 0.0
    %694 = vmatpush1.msra.mxu0 0.0
    %695 = vmatprep.subr.mxu0 0.0
    %696 = vmatpush1.msra.mxu0 0.0
    %697 = vmatprep.subr.mxu0 0.0
    %698 = vmatpush1.msra.mxu0 0.0
    %699 = vmatprep.subr.mxu0 0.0
    %700 = vmatpush1.msra.mxu0 0.0
    %701 = vmatprep.mubr.f32.mxu0 0.0
    %702 = vmatmul.mubr.f32.gmra.mrb[0].mxu0 %v635
    %v703 = vpop.f32.mrb[0].mxu0
    %v704 = vadd.f32 0.0, %v703
    %v705 = vpop.f32.mrb[0].mxu0
    %706 = vdwg.mxu0
    %v707 = vadd.f32 %v633, %v704
    %v708 = vtanh.pop %v707
    %v709 = vxor.u32 %v707, 2147483648
    %v710 = vmul.f32 %v709, 1.442695
    %v711 = vpow.pop %v710
    %v712 = vadd.f32 %v711, 1.0
    %v713 = vrcp.pop %v712
    %v714 = vmul.f32 1.0, %v713
    %v715 = vsel %vm28, %v708, %v714
    %717 = vrot.lane.b32.xlu0 %v631, 32
    %v718 = vpop.permute.xlu0 %717
    %v720 = vmul.f32 %v715, %v718
    %722 = vrot.lane.b32.xlu0 %v715, 64
    %v723 = vpop.permute.xlu0 %722
    %v725 = vmul.f32 %v715, %v723
    %727 = vrot.lane.b32.xlu0 %v725, 32
    %v728 = vpop.permute.xlu0 %727
    %v730 = vadd.f32 %v720, %v728
    %v731 = vtanh.pop %v730
    %733 = vrot.lane.b32.xlu0 %v731, 64
    %v734 = vpop.permute.xlu0 %733
    %v736 = vmul.f32 %v715, %v734
    %738 = vrot.lane.b32.xlu0 %v736, 32
    %v739 = vpop.permute.xlu0 %738
    %741 = vst.msk [vmem:[#allocation3] sm:$0x3] %vm29, %v739
    %743 = vrot.lane.b32.xlu0 %v730, 96
    %v744 = vpop.permute.xlu0 %743
    %746 = vst.msk [vmem:[#allocation4] sm:$0x3] %vm29, %v744
    %s747 = scalar_lea.vmem [#allocation2], 10
    %748 = vst.msk [vmem:[%s747] sm:$0x3] %vm29, %v739
    %v749 = vld [vmem:[#allocation3] sm:$0x3]
    %v750 = vld [vmem:[#allocation4] sm:$0x3]
    %s751 = scalar_lea.vmem %s0, 12
    %v752 = vld [vmem:[%s751] sm:$0x3]
    %v754 = vsel %vm39, %v749, 0
    %756 = vmatprep.subr.mxu0 0.0
    %757 = vmatpush1.msra.mxu0 %v32
    %758 = vmatprep.subr.mxu0 0.0
    %759 = vmatpush1.msra.mxu0 %v33
    %760 = vmatprep.subr.mxu0 0.0
    %761 = vmatpush1.msra.mxu0 %v34
    %762 = vmatprep.subr.mxu0 0.0
    %763 = vmatpush1.msra.mxu0 %v35
    %764 = vmatprep.subr.mxu0 0.0
    %765 = vmatpush1.msra.mxu0 0.0
    %766 = vmatprep.subr.mxu0 0.0
    %767 = vmatpush1.msra.mxu0 0.0
    %768 = vmatprep.subr.mxu0 0.0
    %769 = vmatpush1.msra.mxu0 0.0
    %770 = vmatprep.subr.mxu0 0.0
    %771 = vmatpush1.msra.mxu0 0.0
    %772 = vmatprep.subr.mxu0 0.0
    %773 = vmatpush1.msra.mxu0 0.0
    %774 = vmatprep.subr.mxu0 0.0
    %775 = vmatpush1.msra.mxu0 0.0
    %776 = vmatprep.subr.mxu0 0.0
    %777 = vmatpush1.msra.mxu0 0.0
    %778 = vmatprep.subr.mxu0 0.0
    %779 = vmatpush1.msra.mxu0 0.0
    %780 = vmatprep.subr.mxu0 0.0
    %781 = vmatpush1.msra.mxu0 0.0
    %782 = vmatprep.subr.mxu0 0.0
    %783 = vmatpush1.msra.mxu0 0.0
    %784 = vmatprep.subr.mxu0 0.0
    %785 = vmatpush1.msra.mxu0 0.0
    %786 = vmatprep.subr.mxu0 0.0
    %787 = vmatpush1.msra.mxu0 0.0
    %788 = vmatprep.subr.mxu0 0.0
    %789 = vmatpush1.msra.mxu0 0.0
    %790 = vmatprep.subr.mxu0 0.0
    %791 = vmatpush1.msra.mxu0 0.0
    %792 = vmatprep.subr.mxu0 0.0
    %793 = vmatpush1.msra.mxu0 0.0
    %794 = vmatprep.subr.mxu0 0.0
    %795 = vmatpush1.msra.mxu0 0.0
    %796 = vmatprep.subr.mxu0 0.0
    %797 = vmatpush1.msra.mxu0 0.0
    %798 = vmatprep.subr.mxu0 0.0
    %799 = vmatpush1.msra.mxu0 0.0
    %800 = vmatprep.subr.mxu0 0.0
    %801 = vmatpush1.msra.mxu0 0.0
    %802 = vmatprep.subr.mxu0 0.0
    %803 = vmatpush1.msra.mxu0 0.0
    %804 = vmatprep.subr.mxu0 0.0
    %805 = vmatpush1.msra.mxu0 0.0
    %806 = vmatprep.subr.mxu0 0.0
    %807 = vmatpush1.msra.mxu0 0.0
    %808 = vmatprep.subr.mxu0 0.0
    %809 = vmatpush1.msra.mxu0 0.0
    %810 = vmatprep.subr.mxu0 0.0
    %811 = vmatpush1.msra.mxu0 0.0
    %812 = vmatprep.subr.mxu0 0.0
    %813 = vmatpush1.msra.mxu0 0.0
    %814 = vmatprep.subr.mxu0 0.0
    %815 = vmatpush1.msra.mxu0 0.0
    %816 = vmatprep.subr.mxu0 0.0
    %817 = vmatpush1.msra.mxu0 0.0
    %818 = vmatprep.subr.mxu0 0.0
    %819 = vmatpush1.msra.mxu0 0.0
    %820 = vmatprep.mubr.f32.mxu0 0.0
    %821 = vmatmul.mubr.f32.gmra.mrb[0].mxu0 %v754
    %v822 = vpop.f32.mrb[0].mxu0
    %v823 = vadd.f32 0.0, %v822
    %v824 = vpop.f32.mrb[0].mxu0
    %825 = vdwg.mxu0
    %v826 = vadd.f32 %v752, %v823
    %v827 = vtanh.pop %v826
    %v828 = vxor.u32 %v826, 2147483648
    %v829 = vmul.f32 %v828, 1.442695
    %v830 = vpow.pop %v829
    %v831 = vadd.f32 %v830, 1.0
    %v832 = vrcp.pop %v831
    %v833 = vmul.f32 1.0, %v832
    %v834 = vsel %vm28, %v827, %v833
    %836 = vrot.lane.b32.xlu0 %v750, 32
    %v837 = vpop.permute.xlu0 %836
    %v839 = vmul.f32 %v834, %v837
    %841 = vrot.lane.b32.xlu0 %v834, 64
    %v842 = vpop.permute.xlu0 %841
    %v844 = vmul.f32 %v834, %v842
    %846 = vrot.lane.b32.xlu0 %v844, 32
    %v847 = vpop.permute.xlu0 %846
    %v849 = vadd.f32 %v839, %v847
    %v850 = vtanh.pop %v849
    %852 = vrot.lane.b32.xlu0 %v850, 64
    %v853 = vpop.permute.xlu0 %852
    %v855 = vmul.f32 %v834, %v853
    %857 = vrot.lane.b32.xlu0 %v855, 32
    %v858 = vpop.permute.xlu0 %857
    %860 = vst.msk [vmem:[#allocation3] sm:$0x3] %vm29, %v858
    %862 = vrot.lane.b32.xlu0 %v849, 96
    %v863 = vpop.permute.xlu0 %862
    %865 = vst.msk [vmem:[#allocation4] sm:$0x3] %vm29, %v863
    %s866 = scalar_lea.vmem [#allocation2], 12
    %867 = vst.msk [vmem:[%s866] sm:$0x3] %vm29, %v858
    %v868 = vld [vmem:[#allocation3] sm:$0x3]
    %v869 = vld [vmem:[#allocation4] sm:$0x3]
    %s870 = scalar_lea.vmem %s0, 14
    %v871 = vld [vmem:[%s870] sm:$0x3]
    %v873 = vsel %vm39, %v868, 0
    %875 = vmatprep.subr.mxu0 0.0
    %876 = vmatpush1.msra.mxu0 %v32
    %877 = vmatprep.subr.mxu0 0.0
    %878 = vmatpush1.msra.mxu0 %v33
    %879 = vmatprep.subr.mxu0 0.0
    %880 = vmatpush1.msra.mxu0 %v34
    %881 = vmatprep.subr.mxu0 0.0
    %882 = vmatpush1.msra.mxu0 %v35
    %883 = vmatprep.subr.mxu0 0.0
    %884 = vmatpush1.msra.mxu0 0.0
    %885 = vmatprep.subr.mxu0 0.0
    %886 = vmatpush1.msra.mxu0 0.0
    %887 = vmatprep.subr.mxu0 0.0
    %888 = vmatpush1.msra.mxu0 0.0
    %889 = vmatprep.subr.mxu0 0.0
    %890 = vmatpush1.msra.mxu0 0.0
    %891 = vmatprep.subr.mxu0 0.0
    %892 = vmatpush1.msra.mxu0 0.0
    %893 = vmatprep.subr.mxu0 0.0
    %894 = vmatpush1.msra.mxu0 0.0
    %895 = vmatprep.subr.mxu0 0.0
    %896 = vmatpush1.msra.mxu0 0.0
    %897 = vmatprep.subr.mxu0 0.0
    %898 = vmatpush1.msra.mxu0 0.0
    %899 = vmatprep.subr.mxu0 0.0
    %900 = vmatpush1.msra.mxu0 0.0
    %901 = vmatprep.subr.mxu0 0.0
    %902 = vmatpush1.msra.mxu0 0.0
    %903 = vmatprep.subr.mxu0 0.0
    %904 = vmatpush1.msra.mxu0 0.0
    %905 = vmatprep.subr.mxu0 0.0
    %906 = vmatpush1.msra.mxu0 0.0
    %907 = vmatprep.subr.mxu0 0.0
    %908 = vmatpush1.msra.mxu0 0.0
    %909 = vmatprep.subr.mxu0 0.0
    %910 = vmatpush1.msra.mxu0 0.0
    %911 = vmatprep.subr.mxu0 0.0
    %912 = vmatpush1.msra.mxu0 0.0
    %913 = vmatprep.subr.mxu0 0.0
    %914 = vmatpush1.msra.mxu0 0.0
    %915 = vmatprep.subr.mxu0 0.0
    %916 = vmatpush1.msra.mxu0 0.0
    %917 = vmatprep.subr.mxu0 0.0
    %918 = vmatpush1.msra.mxu0 0.0
    %919 = vmatprep.subr.mxu0 0.0
    %920 = vmatpush1.msra.mxu0 0.0
    %921 = vmatprep.subr.mxu0 0.0
    %922 = vmatpush1.msra.mxu0 0.0
    %923 = vmatprep.subr.mxu0 0.0
    %924 = vmatpush1.msra.mxu0 0.0
    %925 = vmatprep.subr.mxu0 0.0
    %926 = vmatpush1.msra.mxu0 0.0
    %927 = vmatprep.subr.mxu0 0.0
    %928 = vmatpush1.msra.mxu0 0.0
    %929 = vmatprep.subr.mxu0 0.0
    %930 = vmatpush1.msra.mxu0 0.0
    %931 = vmatprep.subr.mxu0 0.0
    %932 = vmatpush1.msra.mxu0 0.0
    %933 = vmatprep.subr.mxu0 0.0
    %934 = vmatpush1.msra.mxu0 0.0
    %935 = vmatprep.subr.mxu0 0.0
    %936 = vmatpush1.msra.mxu0 0.0
    %937 = vmatprep.subr.mxu0 0.0
    %938 = vmatpush1.msra.mxu0 0.0
    %939 = vmatprep.mubr.f32.mxu0 0.0
    %940 = vmatmul.mubr.f32.gmra.mrb[0].mxu0 %v873
    %v941 = vpop.f32.mrb[0].mxu0
    %v942 = vadd.f32 0.0, %v941
    %v943 = vpop.f32.mrb[0].mxu0
    %944 = vdwg.mxu0
    %v945 = vadd.f32 %v871, %v942
    %v946 = vtanh.pop %v945
    %v947 = vxor.u32 %v945, 2147483648
    %v948 = vmul.f32 %v947, 1.442695
    %v949 = vpow.pop %v948
    %v950 = vadd.f32 %v949, 1.0
    %v951 = vrcp.pop %v950
    %v952 = vmul.f32 1.0, %v951
    %v953 = vsel %vm28, %v946, %v952
    %955 = vrot.lane.b32.xlu0 %v869, 32
    %v956 = vpop.permute.xlu0 %955
    %v958 = vmul.f32 %v953, %v956
    %960 = vrot.lane.b32.xlu0 %v953, 64
    %v961 = vpop.permute.xlu0 %960
    %v963 = vmul.f32 %v953, %v961
    %965 = vrot.lane.b32.xlu0 %v963, 32
    %v966 = vpop.permute.xlu0 %965
    %v968 = vadd.f32 %v958, %v966
    %v969 = vtanh.pop %v968
    %971 = vrot.lane.b32.xlu0 %v969, 64
    %v972 = vpop.permute.xlu0 %971
    %v974 = vmul.f32 %v953, %v972
    %976 = vrot.lane.b32.xlu0 %v974, 32
    %v977 = vpop.permute.xlu0 %976
    %979 = vst.msk [vmem:[#allocation3] sm:$0x3] %vm29, %v977
    %981 = vrot.lane.b32.xlu0 %v968, 96
    %v982 = vpop.permute.xlu0 %981
    %984 = vst.msk [vmem:[#allocation4] sm:$0x3] %vm29, %v982
    %s985 = scalar_lea.vmem [#allocation2], 14
    %986 = vst.msk [vmem:[%s985] sm:$0x3] %vm29, %v977
    %987 = vst.msk [vmem:[#allocation3] sm:$0x3] %vm29, 0.0
    %988 = vst.msk [vmem:[#allocation4] sm:$0x3] %vm29, 0.0
    %s989 = scalar_lea.vmem %s1, 32
    %v990 = vld [vmem:[%s989] sm:$0xff]
    %v991 = vld [vmem:[%s989 + $0x8] sm:$0xff]
    %v992 = vld [vmem:[%s989 + $0x10] sm:$0xff]
    %v993 = vld [vmem:[%s989 + $0x18] sm:$0xff]
    %v994 = vld [vmem:[%s2] sm:$0xff]
    %v995 = vld [vmem:[%s2 + $0x8] sm:$0xff]
    %v996 = vld [vmem:[%s2 + $0x10] sm:$0xff]
    %v997 = vld [vmem:[%s2 + $0x18] sm:$0xff]
    %v998 = vld [vmem:[%s3] sm:$0x1]
    %v999 = vld [vmem:[#allocation3] sm:$0x3]
    %v1000 = vld [vmem:[#allocation4] sm:$0x3]
    %v1001 = vld [vmem:[#allocation2] sm:$0x3]
    %v1003 = vlaneseq
    %v1004 = vshrl.u32 %v1003, 7
    %v1005 = vsub.s32 0, %v1004
    %v1006 = vrot.slane %v998, %v1005
    %v1009 = vsel %vm39, %v1001, 0
    %1011 = vmatprep.subr.mxu0 0.0
    %1012 = vmatpush1.msra.mxu0 %v994
    %1013 = vmatprep.subr.mxu0 0.0
    %1014 = vmatpush1.msra.mxu0 %v995
    %1015 = vmatprep.subr.mxu0 0.0
    %1016 = vmatpush1.msra.mxu0 %v996
    %1017 = vmatprep.subr.mxu0 0.0
    %1018 = vmatpush1.msra.mxu0 %v997
    %1019 = vmatprep.subr.mxu0 0.0
    %1020 = vmatpush1.msra.mxu0 0.0
    %1021 = vmatprep.subr.mxu0 0.0
    %1022 = vmatpush1.msra.mxu0 0.0
    %1023 = vmatprep.subr.mxu0 0.0
    %1024 = vmatpush1.msra.mxu0 0.0
    %1025 = vmatprep.subr.mxu0 0.0
    %1026 = vmatpush1.msra.mxu0 0.0
    %1027 = vmatprep.subr.mxu0 0.0
    %1028 = vmatpush1.msra.mxu0 0.0
    %1029 = vmatprep.subr.mxu0 0.0
    %1030 = vmatpush1.msra.mxu0 0.0
    %1031 = vmatprep.subr.mxu0 0.0
    %1032 = vmatpush1.msra.mxu0 0.0
    %1033 = vmatprep.subr.mxu0 0.0
    %1034 = vmatpush1.msra.mxu0 0.0
    %1035 = vmatprep.subr.mxu0 0.0
    %1036 = vmatpush1.msra.mxu0 0.0
    %1037 = vmatprep.subr.mxu0 0.0
    %1038 = vmatpush1.msra.mxu0 0.0
    %1039 = vmatprep.subr.mxu0 0.0
    %1040 = vmatpush1.msra.mxu0 0.0
    %1041 = vmatprep.subr.mxu0 0.0
    %1042 = vmatpush1.msra.mxu0 0.0
    %1043 = vmatprep.subr.mxu0 0.0
    %1044 = vmatpush1.msra.mxu0 0.0
    %1045 = vmatprep.subr.mxu0 0.0
    %1046 = vmatpush1.msra.mxu0 0.0
    %1047 = vmatprep.subr.mxu0 0.0
    %1048 = vmatpush1.msra.mxu0 0.0
    %1049 = vmatprep.subr.mxu0 0.0
    %1050 = vmatpush1.msra.mxu0 0.0
    %1051 = vmatprep.subr.mxu0 0.0
    %1052 = vmatpush1.msra.mxu0 0.0
    %1053 = vmatprep.subr.mxu0 0.0
    %1054 = vmatpush1.msra.mxu0 0.0
    %1055 = vmatprep.subr.mxu0 0.0
    %1056 = vmatpush1.msra.mxu0 0.0
    %1057 = vmatprep.subr.mxu0 0.0
    %1058 = vmatpush1.msra.mxu0 0.0
    %1059 = vmatprep.subr.mxu0 0.0
    %1060 = vmatpush1.msra.mxu0 0.0
    %1061 = vmatprep.subr.mxu0 0.0
    %1062 = vmatpush1.msra.mxu0 0.0
    %1063 = vmatprep.subr.mxu0 0.0
    %1064 = vmatpush1.msra.mxu0 0.0
    %1065 = vmatprep.subr.mxu0 0.0
    %1066 = vmatpush1.msra.mxu0 0.0
    %1067 = vmatprep.subr.mxu0 0.0
    %1068 = vmatpush1.msra.mxu0 0.0
    %1069 = vmatprep.subr.mxu0 0.0
    %1070 = vmatpush1.msra.mxu0 0.0
    %1071 = vmatprep.subr.mxu0 0.0
    %1072 = vmatpush1.msra.mxu0 0.0
    %1073 = vmatprep.subr.mxu0 0.0
    %1074 = vmatpush1.msra.mxu0 0.0
    %1075 = vmatprep.mubr.f32.mxu0 0.0
    %1076 = vmatmul.mubr.f32.gmra.mrb[0].mxu0 %v1009
    %v1077 = vpop.f32.mrb[0].mxu0
    %v1078 = vadd.f32 %v1006, %v1077
    %v1079 = vpop.f32.mrb[0].mxu0
    %1080 = vdwg.mxu0
    %v1082 = vsel %vm39, %v999, 0
    %1084 = vmatprep.subr.mxu0 0.0
    %1085 = vmatpush1.msra.mxu0 %v990
    %1086 = vmatprep.subr.mxu0 0.0
    %1087 = vmatpush1.msra.mxu0 %v991
    %1088 = vmatprep.subr.mxu0 0.0
    %1089 = vmatpush1.msra.mxu0 %v992
    %1090 = vmatprep.subr.mxu0 0.0
    %1091 = vmatpush1.msra.mxu0 %v993
    %1092 = vmatprep.subr.mxu0 0.0
    %1093 = vmatpush1.msra.mxu0 0.0
    %1094 = vmatprep.subr.mxu0 0.0
    %1095 = vmatpush1.msra.mxu0 0.0
    %1096 = vmatprep.subr.mxu0 0.0
    %1097 = vmatpush1.msra.mxu0 0.0
    %1098 = vmatprep.subr.mxu0 0.0
    %1099 = vmatpush1.msra.mxu0 0.0
    %1100 = vmatprep.subr.mxu0 0.0
    %1101 = vmatpush1.msra.mxu0 0.0
    %1102 = vmatprep.subr.mxu0 0.0
    %1103 = vmatpush1.msra.mxu0 0.0
    %1104 = vmatprep.subr.mxu0 0.0
    %1105 = vmatpush1.msra.mxu0 0.0
    %1106 = vmatprep.subr.mxu0 0.0
    %1107 = vmatpush1.msra.mxu0 0.0
    %1108 = vmatprep.subr.mxu0 0.0
    %1109 = vmatpush1.msra.mxu0 0.0
    %1110 = vmatprep.subr.mxu0 0.0
    %1111 = vmatpush1.msra.mxu0 0.0
    %1112 = vmatprep.subr.mxu0 0.0
    %1113 = vmatpush1.msra.mxu0 0.0
    %1114 = vmatprep.subr.mxu0 0.0
    %1115 = vmatpush1.msra.mxu0 0.0
    %1116 = vmatprep.subr.mxu0 0.0
    %1117 = vmatpush1.msra.mxu0 0.0
    %1118 = vmatprep.subr.mxu0 0.0
    %1119 = vmatpush1.msra.mxu0 0.0
    %1120 = vmatprep.subr.mxu0 0.0
    %1121 = vmatpush1.msra.mxu0 0.0
    %1122 = vmatprep.subr.mxu0 0.0
    %1123 = vmatpush1.msra.mxu0 0.0
    %1124 = vmatprep.subr.mxu0 0.0
    %1125 = vmatpush1.msra.mxu0 0.0
    %1126 = vmatprep.subr.mxu0 0.0
    %1127 = vmatpush1.msra.mxu0 0.0
    %1128 = vmatprep.subr.mxu0 0.0
    %1129 = vmatpush1.msra.mxu0 0.0
    %1130 = vmatprep.subr.mxu0 0.0
    %1131 = vmatpush1.msra.mxu0 0.0
    %1132 = vmatprep.subr.mxu0 0.0
    %1133 = vmatpush1.msra.mxu0 0.0
    %1134 = vmatprep.subr.mxu0 0.0
    %1135 = vmatpush1.msra.mxu0 0.0
    %1136 = vmatprep.subr.mxu0 0.0
    %1137 = vmatpush1.msra.mxu0 0.0
    %1138 = vmatprep.subr.mxu0 0.0
    %1139 = vmatpush1.msra.mxu0 0.0
    %1140 = vmatprep.subr.mxu0 0.0
    %1141 = vmatpush1.msra.mxu0 0.0
    %1142 = vmatprep.subr.mxu0 0.0
    %1143 = vmatpush1.msra.mxu0 0.0
    %1144 = vmatprep.subr.mxu0 0.0
    %1145 = vmatpush1.msra.mxu0 0.0
    %1146 = vmatprep.subr.mxu0 0.0
    %1147 = vmatpush1.msra.mxu0 0.0
    %1148 = vmatprep.mubr.f32.mxu0 0.0
    %1149 = vmatmul.mubr.f32.gmra.mrb[0].mxu0 %v1082
    %v1150 = vpop.f32.mrb[0].mxu0
    %v1151 = vadd.f32 0.0, %v1150
    %v1152 = vpop.f32.mrb[0].mxu0
    %1153 = vdwg.mxu0
    %v1154 = vadd.f32 %v1078, %v1151
    %v1155 = vtanh.pop %v1154
    %v1156 = vxor.u32 %v1154, 2147483648
    %v1157 = vmul.f32 %v1156, 1.442695
    %v1158 = vpow.pop %v1157
    %v1159 = vadd.f32 %v1158, 1.0
    %v1160 = vrcp.pop %v1159
    %v1161 = vmul.f32 1.0, %v1160
    %v1162 = vsel %vm28, %v1155, %v1161
    %1164 = vrot.lane.b32.xlu0 %v1000, 32
    %v1165 = vpop.permute.xlu0 %1164
    %v1167 = vmul.f32 %v1162, %v1165
    %1169 = vrot.lane.b32.xlu0 %v1162, 64
    %v1170 = vpop.permute.xlu0 %1169
    %v1172 = vmul.f32 %v1162, %v1170
    %1174 = vrot.lane.b32.xlu0 %v1172, 32
    %v1175 = vpop.permute.xlu0 %1174
    %v1177 = vadd.f32 %v1167, %v1175
    %v1178 = vtanh.pop %v1177
    %1180 = vrot.lane.b32.xlu0 %v1178, 64
    %v1181 = vpop.permute.xlu0 %1180
    %v1183 = vmul.f32 %v1162, %v1181
    %1185 = vrot.lane.b32.xlu0 %v1183, 32
    %v1186 = vpop.permute.xlu0 %1185
    %1188 = vst.msk [vmem:[#allocation3] sm:$0x3] %vm29, %v1186
    %1190 = vrot.lane.b32.xlu0 %v1177, 96
    %v1191 = vpop.permute.xlu0 %1190
    %1193 = vst.msk [vmem:[#allocation4] sm:$0x3] %vm29, %v1191
    %v1194 = vld [vmem:[#allocation3] sm:$0x3]
    %v1195 = vld [vmem:[#allocation4] sm:$0x3]
    %v1196 = vld [vmem:[%s271] sm:$0x3]
    %v1198 = vsel %vm39, %v1196, 0
    %1200 = vmatprep.subr.mxu0 0.0
    %1201 = vmatpush1.msra.mxu0 %v994
    %1202 = vmatprep.subr.mxu0 0.0
    %1203 = vmatpush1.msra.mxu0 %v995
    %1204 = vmatprep.subr.mxu0 0.0
    %1205 = vmatpush1.msra.mxu0 %v996
    %1206 = vmatprep.subr.mxu0 0.0
    %1207 = vmatpush1.msra.mxu0 %v997
    %1208 = vmatprep.subr.mxu0 0.0
    %1209 = vmatpush1.msra.mxu0 0.0
    %1210 = vmatprep.subr.mxu0 0.0
    %1211 = vmatpush1.msra.mxu0 0.0
    %1212 = vmatprep.subr.mxu0 0.0
    %1213 = vmatpush1.msra.mxu0 0.0
    %1214 = vmatprep.subr.mxu0 0.0
    %1215 = vmatpush1.msra.mxu0 0.0
    %1216 = vmatprep.subr.mxu0 0.0
    %1217 = vmatpush1.msra.mxu0 0.0
    %1218 = vmatprep.subr.mxu0 0.0
    %1219 = vmatpush1.msra.mxu0 0.0
    %1220 = vmatprep.subr.mxu0 0.0
    %1221 = vmatpush1.msra.mxu0 0.0
    %1222 = vmatprep.subr.mxu0 0.0
    %1223 = vmatpush1.msra.mxu0 0.0
    %1224 = vmatprep.subr.mxu0 0.0
    %1225 = vmatpush1.msra.mxu0 0.0
    %1226 = vmatprep.subr.mxu0 0.0
    %1227 = vmatpush1.msra.mxu0 0.0
    %1228 = vmatprep.subr.mxu0 0.0
    %1229 = vmatpush1.msra.mxu0 0.0
    %1230 = vmatprep.subr.mxu0 0.0
    %1231 = vmatpush1.msra.mxu0 0.0
    %1232 = vmatprep.subr.mxu0 0.0
    %1233 = vmatpush1.msra.mxu0 0.0
    %1234 = vmatprep.subr.mxu0 0.0
    %1235 = vmatpush1.msra.mxu0 0.0
    %1236 = vmatprep.subr.mxu0 0.0
    %1237 = vmatpush1.msra.mxu0 0.0
    %1238 = vmatprep.subr.mxu0 0.0
    %1239 = vmatpush1.msra.mxu0 0.0
    %1240 = vmatprep.subr.mxu0 0.0
    %1241 = vmatpush1.msra.mxu0 0.0
    %1242 = vmatprep.subr.mxu0 0.0
    %1243 = vmatpush1.msra.mxu0 0.0
    %1244 = vmatprep.subr.mxu0 0.0
    %1245 = vmatpush1.msra.mxu0 0.0
    %1246 = vmatprep.subr.mxu0 0.0
    %1247 = vmatpush1.msra.mxu0 0.0
    %1248 = vmatprep.subr.mxu0 0.0
    %1249 = vmatpush1.msra.mxu0 0.0
    %1250 = vmatprep.subr.mxu0 0.0
    %1251 = vmatpush1.msra.mxu0 0.0
    %1252 = vmatprep.subr.mxu0 0.0
    %1253 = vmatpush1.msra.mxu0 0.0
    %1254 = vmatprep.subr.mxu0 0.0
    %1255 = vmatpush1.msra.mxu0 0.0
    %1256 = vmatprep.subr.mxu0 0.0
    %1257 = vmatpush1.msra.mxu0 0.0
    %1258 = vmatprep.subr.mxu0 0.0
    %1259 = vmatpush1.msra.mxu0 0.0
    %1260 = vmatprep.subr.mxu0 0.0
    %1261 = vmatpush1.msra.mxu0 0.0
    %1262 = vmatprep.subr.mxu0 0.0
    %1263 = vmatpush1.msra.mxu0 0.0
    %1264 = vmatprep.mubr.f32.mxu0 0.0
    %1265 = vmatmul.mubr.f32.gmra.mrb[0].mxu0 %v1198
    %v1266 = vpop.f32.mrb[0].mxu0
    %v1267 = vadd.f32 %v1006, %v1266
    %v1268 = vpop.f32.mrb[0].mxu0
    %1269 = vdwg.mxu0
    %v1271 = vsel %vm39, %v1194, 0
    %1273 = vmatprep.subr.mxu0 0.0
    %1274 = vmatpush1.msra.mxu0 %v990
    %1275 = vmatprep.subr.mxu0 0.0
    %1276 = vmatpush1.msra.mxu0 %v991
    %1277 = vmatprep.subr.mxu0 0.0
    %1278 = vmatpush1.msra.mxu0 %v992
    %1279 = vmatprep.subr.mxu0 0.0
    %1280 = vmatpush1.msra.mxu0 %v993
    %1281 = vmatprep.subr.mxu0 0.0
    %1282 = vmatpush1.msra.mxu0 0.0
    %1283 = vmatprep.subr.mxu0 0.0
    %1284 = vmatpush1.msra.mxu0 0.0
    %1285 = vmatprep.subr.mxu0 0.0
    %1286 = vmatpush1.msra.mxu0 0.0
    %1287 = vmatprep.subr.mxu0 0.0
    %1288 = vmatpush1.msra.mxu0 0.0
    %1289 = vmatprep.subr.mxu0 0.0
    %1290 = vmatpush1.msra.mxu0 0.0
    %1291 = vmatprep.subr.mxu0 0.0
    %1292 = vmatpush1.msra.mxu0 0.0
    %1293 = vmatprep.subr.mxu0 0.0
    %1294 = vmatpush1.msra.mxu0 0.0
    %1295 = vmatprep.subr.mxu0 0.0
    %1296 = vmatpush1.msra.mxu0 0.0
    %1297 = vmatprep.subr.mxu0 0.0
    %1298 = vmatpush1.msra.mxu0 0.0
    %1299 = vmatprep.subr.mxu0 0.0
    %1300 = vmatpush1.msra.mxu0 0.0
    %1301 = vmatprep.subr.mxu0 0.0
    %1302 = vmatpush1.msra.mxu0 0.0
    %1303 = vmatprep.subr.mxu0 0.0
    %1304 = vmatpush1.msra.mxu0 0.0
    %1305 = vmatprep.subr.mxu0 0.0
    %1306 = vmatpush1.msra.mxu0 0.0
    %1307 = vmatprep.subr.mxu0 0.0
    %1308 = vmatpush1.msra.mxu0 0.0
    %1309 = vmatprep.subr.mxu0 0.0
    %1310 = vmatpush1.msra.mxu0 0.0
    %1311 = vmatprep.subr.mxu0 0.0
    %1312 = vmatpush1.msra.mxu0 0.0
    %1313 = vmatprep.subr.mxu0 0.0
    %1314 = vmatpush1.msra.mxu0 0.0
    %1315 = vmatprep.subr.mxu0 0.0
    %1316 = vmatpush1.msra.mxu0 0.0
    %1317 = vmatprep.subr.mxu0 0.0
    %1318 = vmatpush1.msra.mxu0 0.0
    %1319 = vmatprep.subr.mxu0 0.0
    %1320 = vmatpush1.msra.mxu0 0.0
    %1321 = vmatprep.subr.mxu0 0.0
    %1322 = vmatpush1.msra.mxu0 0.0
    %1323 = vmatprep.subr.mxu0 0.0
    %1324 = vmatpush1.msra.mxu0 0.0
    %1325 = vmatprep.subr.mxu0 0.0
    %1326 = vmatpush1.msra.mxu0 0.0
    %1327 = vmatprep.subr.mxu0 0.0
    %1328 = vmatpush1.msra.mxu0 0.0
    %1329 = vmatprep.subr.mxu0 0.0
    %1330 = vmatpush1.msra.mxu0 0.0
    %1331 = vmatprep.subr.mxu0 0.0
    %1332 = vmatpush1.msra.mxu0 0.0
    %1333 = vmatprep.subr.mxu0 0.0
    %1334 = vmatpush1.msra.mxu0 0.0
    %1335 = vmatprep.subr.mxu0 0.0
    %1336 = vmatpush1.msra.mxu0 0.0
    %1337 = vmatprep.mubr.f32.mxu0 0.0
    %1338 = vmatmul.mubr.f32.gmra.mrb[0].mxu0 %v1271
    %v1339 = vpop.f32.mrb[0].mxu0
    %v1340 = vadd.f32 0.0, %v1339
    %v1341 = vpop.f32.mrb[0].mxu0
    %1342 = vdwg.mxu0
    %v1343 = vadd.f32 %v1267, %v1340
    %v1344 = vtanh.pop %v1343
    %v1345 = vxor.u32 %v1343, 2147483648
    %v1346 = vmul.f32 %v1345, 1.442695
    %v1347 = vpow.pop %v1346
    %v1348 = vadd.f32 %v1347, 1.0
    %v1349 = vrcp.pop %v1348
    %v1350 = vmul.f32 1.0, %v1349
    %v1351 = vsel %vm28, %v1344, %v1350
    %1353 = vrot.lane.b32.xlu0 %v1195, 32
    %v1354 = vpop.permute.xlu0 %1353
    %v1356 = vmul.f32 %v1351, %v1354
    %1358 = vrot.lane.b32.xlu0 %v1351, 64
    %v1359 = vpop.permute.xlu0 %1358
    %v1361 = vmul.f32 %v1351, %v1359
    %1363 = vrot.lane.b32.xlu0 %v1361, 32
    %v1364 = vpop.permute.xlu0 %1363
    %v1366 = vadd.f32 %v1356, %v1364
    %v1367 = vtanh.pop %v1366
    %1369 = vrot.lane.b32.xlu0 %v1367, 64
    %v1370 = vpop.permute.xlu0 %1369
    %v1372 = vmul.f32 %v1351, %v1370
    %1374 = vrot.lane.b32.xlu0 %v1372, 32
    %v1375 = vpop.permute.xlu0 %1374
    %1377 = vst.msk [vmem:[#allocation3] sm:$0x3] %vm29, %v1375
    %1379 = vrot.lane.b32.xlu0 %v1366, 96
    %v1380 = vpop.permute.xlu0 %1379
    %1382 = vst.msk [vmem:[#allocation4] sm:$0x3] %vm29, %v1380
    %v1383 = vld [vmem:[#allocation3] sm:$0x3]
    %v1384 = vld [vmem:[#allocation4] sm:$0x3]
    %v1385 = vld [vmem:[%s390] sm:$0x3]
    %v1387 = vsel %vm39, %v1385, 0
    %1389 = vmatprep.subr.mxu0 0.0
    %1390 = vmatpush1.msra.mxu0 %v994
    %1391 = vmatprep.subr.mxu0 0.0
    %1392 = vmatpush1.msra.mxu0 %v995
    %1393 = vmatprep.subr.mxu0 0.0
    %1394 = vmatpush1.msra.mxu0 %v996
    %1395 = vmatprep.subr.mxu0 0.0
    %1396 = vmatpush1.msra.mxu0 %v997
    %1397 = vmatprep.subr.mxu0 0.0
    %1398 = vmatpush1.msra.mxu0 0.0
    %1399 = vmatprep.subr.mxu0 0.0
    %1400 = vmatpush1.msra.mxu0 0.0
    %1401 = vmatprep.subr.mxu0 0.0
    %1402 = vmatpush1.msra.mxu0 0.0
    %1403 = vmatprep.subr.mxu0 0.0
    %1404 = vmatpush1.msra.mxu0 0.0
    %1405 = vmatprep.subr.mxu0 0.0
    %1406 = vmatpush1.msra.mxu0 0.0
    %1407 = vmatprep.subr.mxu0 0.0
    %1408 = vmatpush1.msra.mxu0 0.0
    %1409 = vmatprep.subr.mxu0 0.0
    %1410 = vmatpush1.msra.mxu0 0.0
    %1411 = vmatprep.subr.mxu0 0.0
    %1412 = vmatpush1.msra.mxu0 0.0
    %1413 = vmatprep.subr.mxu0 0.0
    %1414 = vmatpush1.msra.mxu0 0.0
    %1415 = vmatprep.subr.mxu0 0.0
    %1416 = vmatpush1.msra.mxu0 0.0
    %1417 = vmatprep.subr.mxu0 0.0
    %1418 = vmatpush1.msra.mxu0 0.0
    %1419 = vmatprep.subr.mxu0 0.0
    %1420 = vmatpush1.msra.mxu0 0.0
    %1421 = vmatprep.subr.mxu0 0.0
    %1422 = vmatpush1.msra.mxu0 0.0
    %1423 = vmatprep.subr.mxu0 0.0
    %1424 = vmatpush1.msra.mxu0 0.0
    %1425 = vmatprep.subr.mxu0 0.0
    %1426 = vmatpush1.msra.mxu0 0.0
    %1427 = vmatprep.subr.mxu0 0.0
    %1428 = vmatpush1.msra.mxu0 0.0
    %1429 = vmatprep.subr.mxu0 0.0
    %1430 = vmatpush1.msra.mxu0 0.0
    %1431 = vmatprep.subr.mxu0 0.0
    %1432 = vmatpush1.msra.mxu0 0.0
    %1433 = vmatprep.subr.mxu0 0.0
    %1434 = vmatpush1.msra.mxu0 0.0
    %1435 = vmatprep.subr.mxu0 0.0
    %1436 = vmatpush1.msra.mxu0 0.0
    %1437 = vmatprep.subr.mxu0 0.0
    %1438 = vmatpush1.msra.mxu0 0.0
    %1439 = vmatprep.subr.mxu0 0.0
    %1440 = vmatpush1.msra.mxu0 0.0
    %1441 = vmatprep.subr.mxu0 0.0
    %1442 = vmatpush1.msra.mxu0 0.0
    %1443 = vmatprep.subr.mxu0 0.0
    %1444 = vmatpush1.msra.mxu0 0.0
    %1445 = vmatprep.subr.mxu0 0.0
    %1446 = vmatpush1.msra.mxu0 0.0
    %1447 = vmatprep.subr.mxu0 0.0
    %1448 = vmatpush1.msra.mxu0 0.0
    %1449 = vmatprep.subr.mxu0 0.0
    %1450 = vmatpush1.msra.mxu0 0.0
    %1451 = vmatprep.subr.mxu0 0.0
    %1452 = vmatpush1.msra.mxu0 0.0
    %1453 = vmatprep.mubr.f32.mxu0 0.0
    %1454 = vmatmul.mubr.f32.gmra.mrb[0].mxu0 %v1387
    %v1455 = vpop.f32.mrb[0].mxu0
    %v1456 = vadd.f32 %v1006, %v1455
    %v1457 = vpop.f32.mrb[0].mxu0
    %1458 = vdwg.mxu0
    %v1460 = vsel %vm39, %v1383, 0
    %1462 = vmatprep.subr.mxu0 0.0
    %1463 = vmatpush1.msra.mxu0 %v990
    %1464 = vmatprep.subr.mxu0 0.0
    %1465 = vmatpush1.msra.mxu0 %v991
    %1466 = vmatprep.subr.mxu0 0.0
    %1467 = vmatpush1.msra.mxu0 %v992
    %1468 = vmatprep.subr.mxu0 0.0
    %1469 = vmatpush1.msra.mxu0 %v993
    %1470 = vmatprep.subr.mxu0 0.0
    %1471 = vmatpush1.msra.mxu0 0.0
    %1472 = vmatprep.subr.mxu0 0.0
    %1473 = vmatpush1.msra.mxu0 0.0
    %1474 = vmatprep.subr.mxu0 0.0
    %1475 = vmatpush1.msra.mxu0 0.0
    %1476 = vmatprep.subr.mxu0 0.0
    %1477 = vmatpush1.msra.mxu0 0.0
    %1478 = vmatprep.subr.mxu0 0.0
    %1479 = vmatpush1.msra.mxu0 0.0
    %1480 = vmatprep.subr.mxu0 0.0
    %1481 = vmatpush1.msra.mxu0 0.0
    %1482 = vmatprep.subr.mxu0 0.0
    %1483 = vmatpush1.msra.mxu0 0.0
    %1484 = vmatprep.subr.mxu0 0.0
    %1485 = vmatpush1.msra.mxu0 0.0
    %1486 = vmatprep.subr.mxu0 0.0
    %1487 = vmatpush1.msra.mxu0 0.0
    %1488 = vmatprep.subr.mxu0 0.0
    %1489 = vmatpush1.msra.mxu0 0.0
    %1490 = vmatprep.subr.mxu0 0.0
    %1491 = vmatpush1.msra.mxu0 0.0
    %1492 = vmatprep.subr.mxu0 0.0
    %1493 = vmatpush1.msra.mxu0 0.0
    %1494 = vmatprep.subr.mxu0 0.0
    %1495 = vmatpush1.msra.mxu0 0.0
    %1496 = vmatprep.subr.mxu0 0.0
    %1497 = vmatpush1.msra.mxu0 0.0
    %1498 = vmatprep.subr.mxu0 0.0
    %1499 = vmatpush1.msra.mxu0 0.0
    %1500 = vmatprep.subr.mxu0 0.0
    %1501 = vmatpush1.msra.mxu0 0.0
    %1502 = vmatprep.subr.mxu0 0.0
    %1503 = vmatpush1.msra.mxu0 0.0
    %1504 = vmatprep.subr.mxu0 0.0
    %1505 = vmatpush1.msra.mxu0 0.0
    %1506 = vmatprep.subr.mxu0 0.0
    %1507 = vmatpush1.msra.mxu0 0.0
    %1508 = vmatprep.subr.mxu0 0.0
    %1509 = vmatpush1.msra.mxu0 0.0
    %1510 = vmatprep.subr.mxu0 0.0
    %1511 = vmatpush1.msra.mxu0 0.0
    %1512 = vmatprep.subr.mxu0 0.0
    %1513 = vmatpush1.msra.mxu0 0.0
    %1514 = vmatprep.subr.mxu0 0.0
    %1515 = vmatpush1.msra.mxu0 0.0
    %1516 = vmatprep.subr.mxu0 0.0
    %1517 = vmatpush1.msra.mxu0 0.0
    %1518 = vmatprep.subr.mxu0 0.0
    %1519 = vmatpush1.msra.mxu0 0.0
    %1520 = vmatprep.subr.mxu0 0.0
    %1521 = vmatpush1.msra.mxu0 0.0
    %1522 = vmatprep.subr.mxu0 0.0
    %1523 = vmatpush1.msra.mxu0 0.0
    %1524 = vmatprep.subr.mxu0 0.0
    %1525 = vmatpush1.msra.mxu0 0.0
    %1526 = vmatprep.mubr.f32.mxu0 0.0
    %1527 = vmatmul.mubr.f32.gmra.mrb[0].mxu0 %v1460
    %v1528 = vpop.f32.mrb[0].mxu0
    %v1529 = vadd.f32 0.0, %v1528
    %v1530 = vpop.f32.mrb[0].mxu0
    %1531 = vdwg.mxu0
    %v1532 = vadd.f32 %v1456, %v1529
    %v1533 = vtanh.pop %v1532
    %v1534 = vxor.u32 %v1532, 2147483648
    %v1535 = vmul.f32 %v1534, 1.442695
    %v1536 = vpow.pop %v1535
    %v1537 = vadd.f32 %v1536, 1.0
    %v1538 = vrcp.pop %v1537
    %v1539 = vmul.f32 1.0, %v1538
    %v1540 = vsel %vm28, %v1533, %v1539
    %1542 = vrot.lane.b32.xlu0 %v1384, 32
    %v1543 = vpop.permute.xlu0 %1542
    %v1545 = vmul.f32 %v1540, %v1543
    %1547 = vrot.lane.b32.xlu0 %v1540, 64
    %v1548 = vpop.permute.xlu0 %1547
    %v1550 = vmul.f32 %v1540, %v1548
    %1552 = vrot.lane.b32.xlu0 %v1550, 32
    %v1553 = vpop.permute.xlu0 %1552
    %v1555 = vadd.f32 %v1545, %v1553
    %v1556 = vtanh.pop %v1555
    %1558 = vrot.lane.b32.xlu0 %v1556, 64
    %v1559 = vpop.permute.xlu0 %1558
    %v1561 = vmul.f32 %v1540, %v1559
    %1563 = vrot.lane.b32.xlu0 %v1561, 32
    %v1564 = vpop.permute.xlu0 %1563
    %1566 = vst.msk [vmem:[#allocation3] sm:$0x3] %vm29, %v1564
    %1568 = vrot.lane.b32.xlu0 %v1555, 96
    %v1569 = vpop.permute.xlu0 %1568
    %1571 = vst.msk [vmem:[#allocation4] sm:$0x3] %vm29, %v1569
    %v1572 = vld [vmem:[#allocation3] sm:$0x3]
    %v1573 = vld [vmem:[#allocation4] sm:$0x3]
    %v1574 = vld [vmem:[%s509] sm:$0x3]
    %v1576 = vsel %vm39, %v1574, 0
    %1578 = vmatprep.subr.mxu0 0.0
    %1579 = vmatpush1.msra.mxu0 %v994
    %1580 = vmatprep.subr.mxu0 0.0
    %1581 = vmatpush1.msra.mxu0 %v995
    %1582 = vmatprep.subr.mxu0 0.0
    %1583 = vmatpush1.msra.mxu0 %v996
    %1584 = vmatprep.subr.mxu0 0.0
    %1585 = vmatpush1.msra.mxu0 %v997
    %1586 = vmatprep.subr.mxu0 0.0
    %1587 = vmatpush1.msra.mxu0 0.0
    %1588 = vmatprep.subr.mxu0 0.0
    %1589 = vmatpush1.msra.mxu0 0.0
    %1590 = vmatprep.subr.mxu0 0.0
    %1591 = vmatpush1.msra.mxu0 0.0
    %1592 = vmatprep.subr.mxu0 0.0
    %1593 = vmatpush1.msra.mxu0 0.0
    %1594 = vmatprep.subr.mxu0 0.0
    %1595 = vmatpush1.msra.mxu0 0.0
    %1596 = vmatprep.subr.mxu0 0.0
    %1597 = vmatpush1.msra.mxu0 0.0
    %1598 = vmatprep.subr.mxu0 0.0
    %1599 = vmatpush1.msra.mxu0 0.0
    %1600 = vmatprep.subr.mxu0 0.0
    %1601 = vmatpush1.msra.mxu0 0.0
    %1602 = vmatprep.subr.mxu0 0.0
    %1603 = vmatpush1.msra.mxu0 0.0
    %1604 = vmatprep.subr.mxu0 0.0
    %1605 = vmatpush1.msra.mxu0 0.0
    %1606 = vmatprep.subr.mxu0 0.0
    %1607 = vmatpush1.msra.mxu0 0.0
    %1608 = vmatprep.subr.mxu0 0.0
    %1609 = vmatpush1.msra.mxu0 0.0
    %1610 = vmatprep.subr.mxu0 0.0
    %1611 = vmatpush1.msra.mxu0 0.0
    %1612 = vmatprep.subr.mxu0 0.0
    %1613 = vmatpush1.msra.mxu0 0.0
    %1614 = vmatprep.subr.mxu0 0.0
    %1615 = vmatpush1.msra.mxu0 0.0
    %1616 = vmatprep.subr.mxu0 0.0
    %1617 = vmatpush1.msra.mxu0 0.0
    %1618 = vmatprep.subr.mxu0 0.0
    %1619 = vmatpush1.msra.mxu0 0.0
    %1620 = vmatprep.subr.mxu0 0.0
    %1621 = vmatpush1.msra.mxu0 0.0
    %1622 = vmatprep.subr.mxu0 0.0
    %1623 = vmatpush1.msra.mxu0 0.0
    %1624 = vmatprep.subr.mxu0 0.0
    %1625 = vmatpush1.msra.mxu0 0.0
    %1626 = vmatprep.subr.mxu0 0.0
    %1627 = vmatpush1.msra.mxu0 0.0
    %1628 = vmatprep.subr.mxu0 0.0
    %1629 = vmatpush1.msra.mxu0 0.0
    %1630 = vmatprep.subr.mxu0 0.0
    %1631 = vmatpush1.msra.mxu0 0.0
    %1632 = vmatprep.subr.mxu0 0.0
    %1633 = vmatpush1.msra.mxu0 0.0
    %1634 = vmatprep.subr.mxu0 0.0
    %1635 = vmatpush1.msra.mxu0 0.0
    %1636 = vmatprep.subr.mxu0 0.0
    %1637 = vmatpush1.msra.mxu0 0.0
    %1638 = vmatprep.subr.mxu0 0.0
    %1639 = vmatpush1.msra.mxu0 0.0
    %1640 = vmatprep.subr.mxu0 0.0
    %1641 = vmatpush1.msra.mxu0 0.0
    %1642 = vmatprep.mubr.f32.mxu0 0.0
    %1643 = vmatmul.mubr.f32.gmra.mrb[0].mxu0 %v1576
    %v1644 = vpop.f32.mrb[0].mxu0
    %v1645 = vadd.f32 %v1006, %v1644
    %v1646 = vpop.f32.mrb[0].mxu0
    %1647 = vdwg.mxu0
    %v1649 = vsel %vm39, %v1572, 0
    %1651 = vmatprep.subr.mxu0 0.0
    %1652 = vmatpush1.msra.mxu0 %v990
    %1653 = vmatprep.subr.mxu0 0.0
    %1654 = vmatpush1.msra.mxu0 %v991
    %1655 = vmatprep.subr.mxu0 0.0
    %1656 = vmatpush1.msra.mxu0 %v992
    %1657 = vmatprep.subr.mxu0 0.0
    %1658 = vmatpush1.msra.mxu0 %v993
    %1659 = vmatprep.subr.mxu0 0.0
    %1660 = vmatpush1.msra.mxu0 0.0
    %1661 = vmatprep.subr.mxu0 0.0
    %1662 = vmatpush1.msra.mxu0 0.0
    %1663 = vmatprep.subr.mxu0 0.0
    %1664 = vmatpush1.msra.mxu0 0.0
    %1665 = vmatprep.subr.mxu0 0.0
    %1666 = vmatpush1.msra.mxu0 0.0
    %1667 = vmatprep.subr.mxu0 0.0
    %1668 = vmatpush1.msra.mxu0 0.0
    %1669 = vmatprep.subr.mxu0 0.0
    %1670 = vmatpush1.msra.mxu0 0.0
    %1671 = vmatprep.subr.mxu0 0.0
    %1672 = vmatpush1.msra.mxu0 0.0
    %1673 = vmatprep.subr.mxu0 0.0
    %1674 = vmatpush1.msra.mxu0 0.0
    %1675 = vmatprep.subr.mxu0 0.0
    %1676 = vmatpush1.msra.mxu0 0.0
    %1677 = vmatprep.subr.mxu0 0.0
    %1678 = vmatpush1.msra.mxu0 0.0
    %1679 = vmatprep.subr.mxu0 0.0
    %1680 = vmatpush1.msra.mxu0 0.0
    %1681 = vmatprep.subr.mxu0 0.0
    %1682 = vmatpush1.msra.mxu0 0.0
    %1683 = vmatprep.subr.mxu0 0.0
    %1684 = vmatpush1.msra.mxu0 0.0
    %1685 = vmatprep.subr.mxu0 0.0
    %1686 = vmatpush1.msra.mxu0 0.0
    %1687 = vmatprep.subr.mxu0 0.0
    %1688 = vmatpush1.msra.mxu0 0.0
    %1689 = vmatprep.subr.mxu0 0.0
    %1690 = vmatpush1.msra.mxu0 0.0
    %1691 = vmatprep.subr.mxu0 0.0
    %1692 = vmatpush1.msra.mxu0 0.0
    %1693 = vmatprep.subr.mxu0 0.0
    %1694 = vmatpush1.msra.mxu0 0.0
    %1695 = vmatprep.subr.mxu0 0.0
    %1696 = vmatpush1.msra.mxu0 0.0
    %1697 = vmatprep.subr.mxu0 0.0
    %1698 = vmatpush1.msra.mxu0 0.0
    %1699 = vmatprep.subr.mxu0 0.0
    %1700 = vmatpush1.msra.mxu0 0.0
    %1701 = vmatprep.subr.mxu0 0.0
    %1702 = vmatpush1.msra.mxu0 0.0
    %1703 = vmatprep.subr.mxu0 0.0
    %1704 = vmatpush1.msra.mxu0 0.0
    %1705 = vmatprep.subr.mxu0 0.0
    %1706 = vmatpush1.msra.mxu0 0.0
    %1707 = vmatprep.subr.mxu0 0.0
    %1708 = vmatpush1.msra.mxu0 0.0
    %1709 = vmatprep.subr.mxu0 0.0
    %1710 = vmatpush1.msra.mxu0 0.0
    %1711 = vmatprep.subr.mxu0 0.0
    %1712 = vmatpush1.msra.mxu0 0.0
    %1713 = vmatprep.subr.mxu0 0.0
    %1714 = vmatpush1.msra.mxu0 0.0
    %1715 = vmatprep.mubr.f32.mxu0 0.0
    %1716 = vmatmul.mubr.f32.gmra.mrb[0].mxu0 %v1649
    %v1717 = vpop.f32.mrb[0].mxu0
    %v1718 = vadd.f32 0.0, %v1717
    %v1719 = vpop.f32.mrb[0].mxu0
    %1720 = vdwg.mxu0
    %v1721 = vadd.f32 %v1645, %v1718
    %v1722 = vtanh.pop %v1721
    %v1723 = vxor.u32 %v1721, 2147483648
    %v1724 = vmul.f32 %v1723, 1.442695
    %v1725 = vpow.pop %v1724
    %v1726 = vadd.f32 %v1725, 1.0
    %v1727 = vrcp.pop %v1726
    %v1728 = vmul.f32 1.0, %v1727
    %v1729 = vsel %vm28, %v1722, %v1728
    %1731 = vrot.lane.b32.xlu0 %v1573, 32
    %v1732 = vpop.permute.xlu0 %1731
    %v1734 = vmul.f32 %v1729, %v1732
    %1736 = vrot.lane.b32.xlu0 %v1729, 64
    %v1737 = vpop.permute.xlu0 %1736
    %v1739 = vmul.f32 %v1729, %v1737
    %1741 = vrot.lane.b32.xlu0 %v1739, 32
    %v1742 = vpop.permute.xlu0 %1741
    %v1744 = vadd.f32 %v1734, %v1742
    %v1745 = vtanh.pop %v1744
    %1747 = vrot.lane.b32.xlu0 %v1745, 64
    %v1748 = vpop.permute.xlu0 %1747
    %v1750 = vmul.f32 %v1729, %v1748
    %1752 = vrot.lane.b32.xlu0 %v1750, 32
    %v1753 = vpop.permute.xlu0 %1752
    %1755 = vst.msk [vmem:[#allocation3] sm:$0x3] %vm29, %v1753
    %1757 = vrot.lane.b32.xlu0 %v1744, 96
    %v1758 = vpop.permute.xlu0 %1757
    %1760 = vst.msk [vmem:[#allocation4] sm:$0x3] %vm29, %v1758
    %v1761 = vld [vmem:[#allocation3] sm:$0x3]
    %v1762 = vld [vmem:[#allocation4] sm:$0x3]
    %v1763 = vld [vmem:[%s628] sm:$0x3]
    %v1765 = vsel %vm39, %v1763, 0
    %1767 = vmatprep.subr.mxu0 0.0
    %1768 = vmatpush1.msra.mxu0 %v994
    %1769 = vmatprep.subr.mxu0 0.0
    %1770 = vmatpush1.msra.mxu0 %v995
    %1771 = vmatprep.subr.mxu0 0.0
    %1772 = vmatpush1.msra.mxu0 %v996
    %1773 = vmatprep.subr.mxu0 0.0
    %1774 = vmatpush1.msra.mxu0 %v997
    %1775 = vmatprep.subr.mxu0 0.0
    %1776 = vmatpush1.msra.mxu0 0.0
    %1777 = vmatprep.subr.mxu0 0.0
    %1778 = vmatpush1.msra.mxu0 0.0
    %1779 = vmatprep.subr.mxu0 0.0
    %1780 = vmatpush1.msra.mxu0 0.0
    %1781 = vmatprep.subr.mxu0 0.0
    %1782 = vmatpush1.msra.mxu0 0.0
    %1783 = vmatprep.subr.mxu0 0.0
    %1784 = vmatpush1.msra.mxu0 0.0
    %1785 = vmatprep.subr.mxu0 0.0
    %1786 = vmatpush1.msra.mxu0 0.0
    %1787 = vmatprep.subr.mxu0 0.0
    %1788 = vmatpush1.msra.mxu0 0.0
    %1789 = vmatprep.subr.mxu0 0.0
    %1790 = vmatpush1.msra.mxu0 0.0
    %1791 = vmatprep.subr.mxu0 0.0
    %1792 = vmatpush1.msra.mxu0 0.0
    %1793 = vmatprep.subr.mxu0 0.0
    %1794 = vmatpush1.msra.mxu0 0.0
    %1795 = vmatprep.subr.mxu0 0.0
    %1796 = vmatpush1.msra.mxu0 0.0
    %1797 = vmatprep.subr.mxu0 0.0
    %1798 = vmatpush1.msra.mxu0 0.0
    %1799 = vmatprep.subr.mxu0 0.0
    %1800 = vmatpush1.msra.mxu0 0.0
    %1801 = vmatprep.subr.mxu0 0.0
    %1802 = vmatpush1.msra.mxu0 0.0
    %1803 = vmatprep.subr.mxu0 0.0
    %1804 = vmatpush1.msra.mxu0 0.0
    %1805 = vmatprep.subr.mxu0 0.0
    %1806 = vmatpush1.msra.mxu0 0.0
    %1807 = vmatprep.subr.mxu0 0.0
    %1808 = vmatpush1.msra.mxu0 0.0
    %1809 = vmatprep.subr.mxu0 0.0
    %1810 = vmatpush1.msra.mxu0 0.0
    %1811 = vmatprep.subr.mxu0 0.0
    %1812 = vmatpush1.msra.mxu0 0.0
    %1813 = vmatprep.subr.mxu0 0.0
    %1814 = vmatpush1.msra.mxu0 0.0
    %1815 = vmatprep.subr.mxu0 0.0
    %1816 = vmatpush1.msra.mxu0 0.0
    %1817 = vmatprep.subr.mxu0 0.0
    %1818 = vmatpush1.msra.mxu0 0.0
    %1819 = vmatprep.subr.mxu0 0.0
    %1820 = vmatpush1.msra.mxu0 0.0
    %1821 = vmatprep.subr.mxu0 0.0
    %1822 = vmatpush1.msra.mxu0 0.0
    %1823 = vmatprep.subr.mxu0 0.0
    %1824 = vmatpush1.msra.mxu0 0.0
    %1825 = vmatprep.subr.mxu0 0.0
    %1826 = vmatpush1.msra.mxu0 0.0
    %1827 = vmatprep.subr.mxu0 0.0
    %1828 = vmatpush1.msra.mxu0 0.0
    %1829 = vmatprep.subr.mxu0 0.0
    %1830 = vmatpush1.msra.mxu0 0.0
    %1831 = vmatprep.mubr.f32.mxu0 0.0
    %1832 = vmatmul.mubr.f32.gmra.mrb[0].mxu0 %v1765
    %v1833 = vpop.f32.mrb[0].mxu0
    %v1834 = vadd.f32 %v1006, %v1833
    %v1835 = vpop.f32.mrb[0].mxu0
    %1836 = vdwg.mxu0
    %v1838 = vsel %vm39, %v1761, 0
    %1840 = vmatprep.subr.mxu0 0.0
    %1841 = vmatpush1.msra.mxu0 %v990
    %1842 = vmatprep.subr.mxu0 0.0
    %1843 = vmatpush1.msra.mxu0 %v991
    %1844 = vmatprep.subr.mxu0 0.0
    %1845 = vmatpush1.msra.mxu0 %v992
    %1846 = vmatprep.subr.mxu0 0.0
    %1847 = vmatpush1.msra.mxu0 %v993
    %1848 = vmatprep.subr.mxu0 0.0
    %1849 = vmatpush1.msra.mxu0 0.0
    %1850 = vmatprep.subr.mxu0 0.0
    %1851 = vmatpush1.msra.mxu0 0.0
    %1852 = vmatprep.subr.mxu0 0.0
    %1853 = vmatpush1.msra.mxu0 0.0
    %1854 = vmatprep.subr.mxu0 0.0
    %1855 = vmatpush1.msra.mxu0 0.0
    %1856 = vmatprep.subr.mxu0 0.0
    %1857 = vmatpush1.msra.mxu0 0.0
    %1858 = vmatprep.subr.mxu0 0.0
    %1859 = vmatpush1.msra.mxu0 0.0
    %1860 = vmatprep.subr.mxu0 0.0
    %1861 = vmatpush1.msra.mxu0 0.0
    %1862 = vmatprep.subr.mxu0 0.0
    %1863 = vmatpush1.msra.mxu0 0.0
    %1864 = vmatprep.subr.mxu0 0.0
    %1865 = vmatpush1.msra.mxu0 0.0
    %1866 = vmatprep.subr.mxu0 0.0
    %1867 = vmatpush1.msra.mxu0 0.0
    %1868 = vmatprep.subr.mxu0 0.0
    %1869 = vmatpush1.msra.mxu0 0.0
    %1870 = vmatprep.subr.mxu0 0.0
    %1871 = vmatpush1.msra.mxu0 0.0
    %1872 = vmatprep.subr.mxu0 0.0
    %1873 = vmatpush1.msra.mxu0 0.0
    %1874 = vmatprep.subr.mxu0 0.0
    %1875 = vmatpush1.msra.mxu0 0.0
    %1876 = vmatprep.subr.mxu0 0.0
    %1877 = vmatpush1.msra.mxu0 0.0
    %1878 = vmatprep.subr.mxu0 0.0
    %1879 = vmatpush1.msra.mxu0 0.0
    %1880 = vmatprep.subr.mxu0 0.0
    %1881 = vmatpush1.msra.mxu0 0.0
    %1882 = vmatprep.subr.mxu0 0.0
    %1883 = vmatpush1.msra.mxu0 0.0
    %1884 = vmatprep.subr.mxu0 0.0
    %1885 = vmatpush1.msra.mxu0 0.0
    %1886 = vmatprep.subr.mxu0 0.0
    %1887 = vmatpush1.msra.mxu0 0.0
    %1888 = vmatprep.subr.mxu0 0.0
    %1889 = vmatpush1.msra.mxu0 0.0
    %1890 = vmatprep.subr.mxu0 0.0
    %1891 = vmatpush1.msra.mxu0 0.0
    %1892 = vmatprep.subr.mxu0 0.0
    %1893 = vmatpush1.msra.mxu0 0.0
    %1894 = vmatprep.subr.mxu0 0.0
    %1895 = vmatpush1.msra.mxu0 0.0
    %1896 = vmatprep.subr.mxu0 0.0
    %1897 = vmatpush1.msra.mxu0 0.0
    %1898 = vmatprep.subr.mxu0 0.0
    %1899 = vmatpush1.msra.mxu0 0.0
    %1900 = vmatprep.subr.mxu0 0.0
    %1901 = vmatpush1.msra.mxu0 0.0
    %1902 = vmatprep.subr.mxu0 0.0
    %1903 = vmatpush1.msra.mxu0 0.0
    %1904 = vmatprep.mubr.f32.mxu0 0.0
    %1905 = vmatmul.mubr.f32.gmra.mrb[0].mxu0 %v1838
    %v1906 = vpop.f32.mrb[0].mxu0
    %v1907 = vadd.f32 0.0, %v1906
    %v1908 = vpop.f32.mrb[0].mxu0
    %1909 = vdwg.mxu0
    %v1910 = vadd.f32 %v1834, %v1907
    %v1911 = vtanh.pop %v1910
    %v1912 = vxor.u32 %v1910, 2147483648
    %v1913 = vmul.f32 %v1912, 1.442695
    %v1914 = vpow.pop %v1913
    %v1915 = vadd.f32 %v1914, 1.0
    %v1916 = vrcp.pop %v1915
    %v1917 = vmul.f32 1.0, %v1916
    %v1918 = vsel %vm28, %v1911, %v1917
    %1920 = vrot.lane.b32.xlu0 %v1762, 32
    %v1921 = vpop.permute.xlu0 %1920
    %v1923 = vmul.f32 %v1918, %v1921
    %1925 = vrot.lane.b32.xlu0 %v1918, 64
    %v1926 = vpop.permute.xlu0 %1925
    %v1928 = vmul.f32 %v1918, %v1926
    %1930 = vrot.lane.b32.xlu0 %v1928, 32
    %v1931 = vpop.permute.xlu0 %1930
    %v1933 = vadd.f32 %v1923, %v1931
    %v1934 = vtanh.pop %v1933
    %1936 = vrot.lane.b32.xlu0 %v1934, 64
    %v1937 = vpop.permute.xlu0 %1936
    %v1939 = vmul.f32 %v1918, %v1937
    %1941 = vrot.lane.b32.xlu0 %v1939, 32
    %v1942 = vpop.permute.xlu0 %1941
    %1944 = vst.msk [vmem:[#allocation3] sm:$0x3] %vm29, %v1942
    %1946 = vrot.lane.b32.xlu0 %v1933, 96
    %v1947 = vpop.permute.xlu0 %1946
    %1949 = vst.msk [vmem:[#allocation4] sm:$0x3] %vm29, %v1947
    %v1950 = vld [vmem:[#allocation3] sm:$0x3]
    %v1951 = vld [vmem:[#allocation4] sm:$0x3]
    %v1952 = vld [vmem:[%s747] sm:$0x3]
    %v1954 = vsel %vm39, %v1952, 0
    %1956 = vmatprep.subr.mxu0 0.0
    %1957 = vmatpush1.msra.mxu0 %v994
    %1958 = vmatprep.subr.mxu0 0.0
    %1959 = vmatpush1.msra.mxu0 %v995
    %1960 = vmatprep.subr.mxu0 0.0
    %1961 = vmatpush1.msra.mxu0 %v996
    %1962 = vmatprep.subr.mxu0 0.0
    %1963 = vmatpush1.msra.mxu0 %v997
    %1964 = vmatprep.subr.mxu0 0.0
    %1965 = vmatpush1.msra.mxu0 0.0
    %1966 = vmatprep.subr.mxu0 0.0
    %1967 = vmatpush1.msra.mxu0 0.0
    %1968 = vmatprep.subr.mxu0 0.0
    %1969 = vmatpush1.msra.mxu0 0.0
    %1970 = vmatprep.subr.mxu0 0.0
    %1971 = vmatpush1.msra.mxu0 0.0
    %1972 = vmatprep.subr.mxu0 0.0
    %1973 = vmatpush1.msra.mxu0 0.0
    %1974 = vmatprep.subr.mxu0 0.0
    %1975 = vmatpush1.msra.mxu0 0.0
    %1976 = vmatprep.subr.mxu0 0.0
    %1977 = vmatpush1.msra.mxu0 0.0
    %1978 = vmatprep.subr.mxu0 0.0
    %1979 = vmatpush1.msra.mxu0 0.0
    %1980 = vmatprep.subr.mxu0 0.0
    %1981 = vmatpush1.msra.mxu0 0.0
    %1982 = vmatprep.subr.mxu0 0.0
    %1983 = vmatpush1.msra.mxu0 0.0
    %1984 = vmatprep.subr.mxu0 0.0
    %1985 = vmatpush1.msra.mxu0 0.0
    %1986 = vmatprep.subr.mxu0 0.0
    %1987 = vmatpush1.msra.mxu0 0.0
    %1988 = vmatprep.subr.mxu0 0.0
    %1989 = vmatpush1.msra.mxu0 0.0
    %1990 = vmatprep.subr.mxu0 0.0
    %1991 = vmatpush1.msra.mxu0 0.0
    %1992 = vmatprep.subr.mxu0 0.0
    %1993 = vmatpush1.msra.mxu0 0.0
    %1994 = vmatprep.subr.mxu0 0.0
    %1995 = vmatpush1.msra.mxu0 0.0
    %1996 = vmatprep.subr.mxu0 0.0
    %1997 = vmatpush1.msra.mxu0 0.0
    %1998 = vmatprep.subr.mxu0 0.0
    %1999 = vmatpush1.msra.mxu0 0.0
    %2000 = vmatprep.subr.mxu0 0.0
    %2001 = vmatpush1.msra.mxu0 0.0
    %2002 = vmatprep.subr.mxu0 0.0
    %2003 = vmatpush1.msra.mxu0 0.0
    %2004 = vmatprep.subr.mxu0 0.0
    %2005 = vmatpush1.msra.mxu0 0.0
    %2006 = vmatprep.subr.mxu0 0.0
    %2007 = vmatpush1.msra.mxu0 0.0
    %2008 = vmatprep.subr.mxu0 0.0
    %2009 = vmatpush1.msra.mxu0 0.0
    %2010 = vmatprep.subr.mxu0 0.0
    %2011 = vmatpush1.msra.mxu0 0.0
    %2012 = vmatprep.subr.mxu0 0.0
    %2013 = vmatpush1.msra.mxu0 0.0
    %2014 = vmatprep.subr.mxu0 0.0
    %2015 = vmatpush1.msra.mxu0 0.0
    %2016 = vmatprep.subr.mxu0 0.0
    %2017 = vmatpush1.msra.mxu0 0.0
    %2018 = vmatprep.subr.mxu0 0.0
    %2019 = vmatpush1.msra.mxu0 0.0
    %2020 = vmatprep.mubr.f32.mxu0 0.0
    %2021 = vmatmul.mubr.f32.gmra.mrb[0].mxu0 %v1954
    %v2022 = vpop.f32.mrb[0].mxu0
    %v2023 = vadd.f32 %v1006, %v2022
    %v2024 = vpop.f32.mrb[0].mxu0
    %2025 = vdwg.mxu0
    %v2027 = vsel %vm39, %v1950, 0
    %2029 = vmatprep.subr.mxu0 0.0
    %2030 = vmatpush1.msra.mxu0 %v990
    %2031 = vmatprep.subr.mxu0 0.0
    %2032 = vmatpush1.msra.mxu0 %v991
    %2033 = vmatprep.subr.mxu0 0.0
    %2034 = vmatpush1.msra.mxu0 %v992
    %2035 = vmatprep.subr.mxu0 0.0
    %2036 = vmatpush1.msra.mxu0 %v993
    %2037 = vmatprep.subr.mxu0 0.0
    %2038 = vmatpush1.msra.mxu0 0.0
    %2039 = vmatprep.subr.mxu0 0.0
    %2040 = vmatpush1.msra.mxu0 0.0
    %2041 = vmatprep.subr.mxu0 0.0
    %2042 = vmatpush1.msra.mxu0 0.0
    %2043 = vmatprep.subr.mxu0 0.0
    %2044 = vmatpush1.msra.mxu0 0.0
    %2045 = vmatprep.subr.mxu0 0.0
    %2046 = vmatpush1.msra.mxu0 0.0
    %2047 = vmatprep.subr.mxu0 0.0
    %2048 = vmatpush1.msra.mxu0 0.0
    %2049 = vmatprep.subr.mxu0 0.0
    %2050 = vmatpush1.msra.mxu0 0.0
    %2051 = vmatprep.subr.mxu0 0.0
    %2052 = vmatpush1.msra.mxu0 0.0
    %2053 = vmatprep.subr.mxu0 0.0
    %2054 = vmatpush1.msra.mxu0 0.0
    %2055 = vmatprep.subr.mxu0 0.0
    %2056 = vmatpush1.msra.mxu0 0.0
    %2057 = vmatprep.subr.mxu0 0.0
    %2058 = vmatpush1.msra.mxu0 0.0
    %2059 = vmatprep.subr.mxu0 0.0
    %2060 = vmatpush1.msra.mxu0 0.0
    %2061 = vmatprep.subr.mxu0 0.0
    %2062 = vmatpush1.msra.mxu0 0.0
    %2063 = vmatprep.subr.mxu0 0.0
    %2064 = vmatpush1.msra.mxu0 0.0
    %2065 = vmatprep.subr.mxu0 0.0
    %2066 = vmatpush1.msra.mxu0 0.0
    %2067 = vmatprep.subr.mxu0 0.0
    %2068 = vmatpush1.msra.mxu0 0.0
    %2069 = vmatprep.subr.mxu0 0.0
    %2070 = vmatpush1.msra.mxu0 0.0
    %2071 = vmatprep.subr.mxu0 0.0
    %2072 = vmatpush1.msra.mxu0 0.0
    %2073 = vmatprep.subr.mxu0 0.0
    %2074 = vmatpush1.msra.mxu0 0.0
    %2075 = vmatprep.subr.mxu0 0.0
    %2076 = vmatpush1.msra.mxu0 0.0
    %2077 = vmatprep.subr.mxu0 0.0
    %2078 = vmatpush1.msra.mxu0 0.0
    %2079 = vmatprep.subr.mxu0 0.0
    %2080 = vmatpush1.msra.mxu0 0.0
    %2081 = vmatprep.subr.mxu0 0.0
    %2082 = vmatpush1.msra.mxu0 0.0
    %2083 = vmatprep.subr.mxu0 0.0
    %2084 = vmatpush1.msra.mxu0 0.0
    %2085 = vmatprep.subr.mxu0 0.0
    %2086 = vmatpush1.msra.mxu0 0.0
    %2087 = vmatprep.subr.mxu0 0.0
    %2088 = vmatpush1.msra.mxu0 0.0
    %2089 = vmatprep.subr.mxu0 0.0
    %2090 = vmatpush1.msra.mxu0 0.0
    %2091 = vmatprep.subr.mxu0 0.0
    %2092 = vmatpush1.msra.mxu0 0.0
    %2093 = vmatprep.mubr.f32.mxu0 0.0
    %2094 = vmatmul.mubr.f32.gmra.mrb[0].mxu0 %v2027
    %v2095 = vpop.f32.mrb[0].mxu0
    %v2096 = vadd.f32 0.0, %v2095
    %v2097 = vpop.f32.mrb[0].mxu0
    %2098 = vdwg.mxu0
    %v2099 = vadd.f32 %v2023, %v2096
    %v2100 = vtanh.pop %v2099
    %v2101 = vxor.u32 %v2099, 2147483648
    %v2102 = vmul.f32 %v2101, 1.442695
    %v2103 = vpow.pop %v2102
    %v2104 = vadd.f32 %v2103, 1.0
    %v2105 = vrcp.pop %v2104
    %v2106 = vmul.f32 1.0, %v2105
    %v2107 = vsel %vm28, %v2100, %v2106
    %2109 = vrot.lane.b32.xlu0 %v1951, 32
    %v2110 = vpop.permute.xlu0 %2109
    %v2112 = vmul.f32 %v2107, %v2110
    %2114 = vrot.lane.b32.xlu0 %v2107, 64
    %v2115 = vpop.permute.xlu0 %2114
    %v2117 = vmul.f32 %v2107, %v2115
    %2119 = vrot.lane.b32.xlu0 %v2117, 32
    %v2120 = vpop.permute.xlu0 %2119
    %v2122 = vadd.f32 %v2112, %v2120
    %v2123 = vtanh.pop %v2122
    %2125 = vrot.lane.b32.xlu0 %v2123, 64
    %v2126 = vpop.permute.xlu0 %2125
    %v2128 = vmul.f32 %v2107, %v2126
    %2130 = vrot.lane.b32.xlu0 %v2128, 32
    %v2131 = vpop.permute.xlu0 %2130
    %2133 = vst.msk [vmem:[#allocation3] sm:$0x3] %vm29, %v2131
    %2135 = vrot.lane.b32.xlu0 %v2122, 96
    %v2136 = vpop.permute.xlu0 %2135
    %2138 = vst.msk [vmem:[#allocation4] sm:$0x3] %vm29, %v2136
    %v2139 = vld [vmem:[#allocation3] sm:$0x3]
    %v2140 = vld [vmem:[#allocation4] sm:$0x3]
    %v2141 = vld [vmem:[%s866] sm:$0x3]
    %v2143 = vsel %vm39, %v2141, 0
    %2145 = vmatprep.subr.mxu0 0.0
    %2146 = vmatpush1.msra.mxu0 %v994
    %2147 = vmatprep.subr.mxu0 0.0
    %2148 = vmatpush1.msra.mxu0 %v995
    %2149 = vmatprep.subr.mxu0 0.0
    %2150 = vmatpush1.msra.mxu0 %v996
    %2151 = vmatprep.subr.mxu0 0.0
    %2152 = vmatpush1.msra.mxu0 %v997
    %2153 = vmatprep.subr.mxu0 0.0
    %2154 = vmatpush1.msra.mxu0 0.0
    %2155 = vmatprep.subr.mxu0 0.0
    %2156 = vmatpush1.msra.mxu0 0.0
    %2157 = vmatprep.subr.mxu0 0.0
    %2158 = vmatpush1.msra.mxu0 0.0
    %2159 = vmatprep.subr.mxu0 0.0
    %2160 = vmatpush1.msra.mxu0 0.0
    %2161 = vmatprep.subr.mxu0 0.0
    %2162 = vmatpush1.msra.mxu0 0.0
    %2163 = vmatprep.subr.mxu0 0.0
    %2164 = vmatpush1.msra.mxu0 0.0
    %2165 = vmatprep.subr.mxu0 0.0
    %2166 = vmatpush1.msra.mxu0 0.0
    %2167 = vmatprep.subr.mxu0 0.0
    %2168 = vmatpush1.msra.mxu0 0.0
    %2169 = vmatprep.subr.mxu0 0.0
    %2170 = vmatpush1.msra.mxu0 0.0
    %2171 = vmatprep.subr.mxu0 0.0
    %2172 = vmatpush1.msra.mxu0 0.0
    %2173 = vmatprep.subr.mxu0 0.0
    %2174 = vmatpush1.msra.mxu0 0.0
    %2175 = vmatprep.subr.mxu0 0.0
    %2176 = vmatpush1.msra.mxu0 0.0
    %2177 = vmatprep.subr.mxu0 0.0
    %2178 = vmatpush1.msra.mxu0 0.0
    %2179 = vmatprep.subr.mxu0 0.0
    %2180 = vmatpush1.msra.mxu0 0.0
    %2181 = vmatprep.subr.mxu0 0.0
    %2182 = vmatpush1.msra.mxu0 0.0
    %2183 = vmatprep.subr.mxu0 0.0
    %2184 = vmatpush1.msra.mxu0 0.0
    %2185 = vmatprep.subr.mxu0 0.0
    %2186 = vmatpush1.msra.mxu0 0.0
    %2187 = vmatprep.subr.mxu0 0.0
    %2188 = vmatpush1.msra.mxu0 0.0
    %2189 = vmatprep.subr.mxu0 0.0
    %2190 = vmatpush1.msra.mxu0 0.0
    %2191 = vmatprep.subr.mxu0 0.0
    %2192 = vmatpush1.msra.mxu0 0.0
    %2193 = vmatprep.subr.mxu0 0.0
    %2194 = vmatpush1.msra.mxu0 0.0
    %2195 = vmatprep.subr.mxu0 0.0
    %2196 = vmatpush1.msra.mxu0 0.0
    %2197 = vmatprep.subr.mxu0 0.0
    %2198 = vmatpush1.msra.mxu0 0.0
    %2199 = vmatprep.subr.mxu0 0.0
    %2200 = vmatpush1.msra.mxu0 0.0
    %2201 = vmatprep.subr.mxu0 0.0
    %2202 = vmatpush1.msra.mxu0 0.0
    %2203 = vmatprep.subr.mxu0 0.0
    %2204 = vmatpush1.msra.mxu0 0.0
    %2205 = vmatprep.subr.mxu0 0.0
    %2206 = vmatpush1.msra.mxu0 0.0
    %2207 = vmatprep.subr.mxu0 0.0
    %2208 = vmatpush1.msra.mxu0 0.0
    %2209 = vmatprep.mubr.f32.mxu0 0.0
    %2210 = vmatmul.mubr.f32.gmra.mrb[0].mxu0 %v2143
    %v2211 = vpop.f32.mrb[0].mxu0
    %v2212 = vadd.f32 %v1006, %v2211
    %v2213 = vpop.f32.mrb[0].mxu0
    %2214 = vdwg.mxu0
    %v2216 = vsel %vm39, %v2139, 0
    %2218 = vmatprep.subr.mxu0 0.0
    %2219 = vmatpush1.msra.mxu0 %v990
    %2220 = vmatprep.subr.mxu0 0.0
    %2221 = vmatpush1.msra.mxu0 %v991
    %2222 = vmatprep.subr.mxu0 0.0
    %2223 = vmatpush1.msra.mxu0 %v992
    %2224 = vmatprep.subr.mxu0 0.0
    %2225 = vmatpush1.msra.mxu0 %v993
    %2226 = vmatprep.subr.mxu0 0.0
    %2227 = vmatpush1.msra.mxu0 0.0
    %2228 = vmatprep.subr.mxu0 0.0
    %2229 = vmatpush1.msra.mxu0 0.0
    %2230 = vmatprep.subr.mxu0 0.0
    %2231 = vmatpush1.msra.mxu0 0.0
    %2232 = vmatprep.subr.mxu0 0.0
    %2233 = vmatpush1.msra.mxu0 0.0
    %2234 = vmatprep.subr.mxu0 0.0
    %2235 = vmatpush1.msra.mxu0 0.0
    %2236 = vmatprep.subr.mxu0 0.0
    %2237 = vmatpush1.msra.mxu0 0.0
    %2238 = vmatprep.subr.mxu0 0.0
    %2239 = vmatpush1.msra.mxu0 0.0
    %2240 = vmatprep.subr.mxu0 0.0
    %2241 = vmatpush1.msra.mxu0 0.0
    %2242 = vmatprep.subr.mxu0 0.0
    %2243 = vmatpush1.msra.mxu0 0.0
    %2244 = vmatprep.subr.mxu0 0.0
    %2245 = vmatpush1.msra.mxu0 0.0
    %2246 = vmatprep.subr.mxu0 0.0
    %2247 = vmatpush1.msra.mxu0 0.0
    %2248 = vmatprep.subr.mxu0 0.0
    %2249 = vmatpush1.msra.mxu0 0.0
    %2250 = vmatprep.subr.mxu0 0.0
    %2251 = vmatpush1.msra.mxu0 0.0
    %2252 = vmatprep.subr.mxu0 0.0
    %2253 = vmatpush1.msra.mxu0 0.0
    %2254 = vmatprep.subr.mxu0 0.0
    %2255 = vmatpush1.msra.mxu0 0.0
    %2256 = vmatprep.subr.mxu0 0.0
    %2257 = vmatpush1.msra.mxu0 0.0
    %2258 = vmatprep.subr.mxu0 0.0
    %2259 = vmatpush1.msra.mxu0 0.0
    %2260 = vmatprep.subr.mxu0 0.0
    %2261 = vmatpush1.msra.mxu0 0.0
    %2262 = vmatprep.subr.mxu0 0.0
    %2263 = vmatpush1.msra.mxu0 0.0
    %2264 = vmatprep.subr.mxu0 0.0
    %2265 = vmatpush1.msra.mxu0 0.0
    %2266 = vmatprep.subr.mxu0 0.0
    %2267 = vmatpush1.msra.mxu0 0.0
    %2268 = vmatprep.subr.mxu0 0.0
    %2269 = vmatpush1.msra.mxu0 0.0
    %2270 = vmatprep.subr.mxu0 0.0
    %2271 = vmatpush1.msra.mxu0 0.0
    %2272 = vmatprep.subr.mxu0 0.0
    %2273 = vmatpush1.msra.mxu0 0.0
    %2274 = vmatprep.subr.mxu0 0.0
    %2275 = vmatpush1.msra.mxu0 0.0
    %2276 = vmatprep.subr.mxu0 0.0
    %2277 = vmatpush1.msra.mxu0 0.0
    %2278 = vmatprep.subr.mxu0 0.0
    %2279 = vmatpush1.msra.mxu0 0.0
    %2280 = vmatprep.subr.mxu0 0.0
    %2281 = vmatpush1.msra.mxu0 0.0
    %2282 = vmatprep.mubr.f32.mxu0 0.0
    %2283 = vmatmul.mubr.f32.gmra.mrb[0].mxu0 %v2216
    %v2284 = vpop.f32.mrb[0].mxu0
    %v2285 = vadd.f32 0.0, %v2284
    %v2286 = vpop.f32.mrb[0].mxu0
    %2287 = vdwg.mxu0
    %v2288 = vadd.f32 %v2212, %v2285
    %v2289 = vtanh.pop %v2288
    %v2290 = vxor.u32 %v2288, 2147483648
    %v2291 = vmul.f32 %v2290, 1.442695
    %v2292 = vpow.pop %v2291
    %v2293 = vadd.f32 %v2292, 1.0
    %v2294 = vrcp.pop %v2293
    %v2295 = vmul.f32 1.0, %v2294
    %v2296 = vsel %vm28, %v2289, %v2295
    %2298 = vrot.lane.b32.xlu0 %v2140, 32
    %v2299 = vpop.permute.xlu0 %2298
    %v2301 = vmul.f32 %v2296, %v2299
    %2303 = vrot.lane.b32.xlu0 %v2296, 64
    %v2304 = vpop.permute.xlu0 %2303
    %v2306 = vmul.f32 %v2296, %v2304
    %2308 = vrot.lane.b32.xlu0 %v2306, 32
    %v2309 = vpop.permute.xlu0 %2308
    %v2311 = vadd.f32 %v2301, %v2309
    %v2312 = vtanh.pop %v2311
    %2314 = vrot.lane.b32.xlu0 %v2312, 64
    %v2315 = vpop.permute.xlu0 %2314
    %v2317 = vmul.f32 %v2296, %v2315
    %2319 = vrot.lane.b32.xlu0 %v2317, 32
    %v2320 = vpop.permute.xlu0 %2319
    %2322 = vst.msk [vmem:[#allocation3] sm:$0x3] %vm29, %v2320
    %2324 = vrot.lane.b32.xlu0 %v2311, 96
    %v2325 = vpop.permute.xlu0 %2324
    %2327 = vst.msk [vmem:[#allocation4] sm:$0x3] %vm29, %v2325
    %v2328 = vld [vmem:[#allocation3] sm:$0x3]
    %v2329 = vld [vmem:[#allocation4] sm:$0x3]
    %v2330 = vld [vmem:[%s985] sm:$0x3]
    %v2332 = vsel %vm39, %v2330, 0
    %2334 = vmatprep.subr.mxu0 0.0
    %2335 = vmatpush1.msra.mxu0 %v994
    %2336 = vmatprep.subr.mxu0 0.0
    %2337 = vmatpush1.msra.mxu0 %v995
    %2338 = vmatprep.subr.mxu0 0.0
    %2339 = vmatpush1.msra.mxu0 %v996
    %2340 = vmatprep.subr.mxu0 0.0
    %2341 = vmatpush1.msra.mxu0 %v997
    %2342 = vmatprep.subr.mxu0 0.0
    %2343 = vmatpush1.msra.mxu0 0.0
    %2344 = vmatprep.subr.mxu0 0.0
    %2345 = vmatpush1.msra.mxu0 0.0
    %2346 = vmatprep.subr.mxu0 0.0
    %2347 = vmatpush1.msra.mxu0 0.0
    %2348 = vmatprep.subr.mxu0 0.0
    %2349 = vmatpush1.msra.mxu0 0.0
    %2350 = vmatprep.subr.mxu0 0.0
    %2351 = vmatpush1.msra.mxu0 0.0
    %2352 = vmatprep.subr.mxu0 0.0
    %2353 = vmatpush1.msra.mxu0 0.0
    %2354 = vmatprep.subr.mxu0 0.0
    %2355 = vmatpush1.msra.mxu0 0.0
    %2356 = vmatprep.subr.mxu0 0.0
    %2357 = vmatpush1.msra.mxu0 0.0
    %2358 = vmatprep.subr.mxu0 0.0
    %2359 = vmatpush1.msra.mxu0 0.0
    %2360 = vmatprep.subr.mxu0 0.0
    %2361 = vmatpush1.msra.mxu0 0.0
    %2362 = vmatprep.subr.mxu0 0.0
    %2363 = vmatpush1.msra.mxu0 0.0
    %2364 = vmatprep.subr.mxu0 0.0
    %2365 = vmatpush1.msra.mxu0 0.0
    %2366 = vmatprep.subr.mxu0 0.0
    %2367 = vmatpush1.msra.mxu0 0.0
    %2368 = vmatprep.subr.mxu0 0.0
    %2369 = vmatpush1.msra.mxu0 0.0
    %2370 = vmatprep.subr.mxu0 0.0
    %2371 = vmatpush1.msra.mxu0 0.0
    %2372 = vmatprep.subr.mxu0 0.0
    %2373 = vmatpush1.msra.mxu0 0.0
    %2374 = vmatprep.subr.mxu0 0.0
    %2375 = vmatpush1.msra.mxu0 0.0
    %2376 = vmatprep.subr.mxu0 0.0
    %2377 = vmatpush1.msra.mxu0 0.0
    %2378 = vmatprep.subr.mxu0 0.0
    %2379 = vmatpush1.msra.mxu0 0.0
    %2380 = vmatprep.subr.mxu0 0.0
    %2381 = vmatpush1.msra.mxu0 0.0
    %2382 = vmatprep.subr.mxu0 0.0
    %2383 = vmatpush1.msra.mxu0 0.0
    %2384 = vmatprep.subr.mxu0 0.0
    %2385 = vmatpush1.msra.mxu0 0.0
    %2386 = vmatprep.subr.mxu0 0.0
    %2387 = vmatpush1.msra.mxu0 0.0
    %2388 = vmatprep.subr.mxu0 0.0
    %2389 = vmatpush1.msra.mxu0 0.0
    %2390 = vmatprep.subr.mxu0 0.0
    %2391 = vmatpush1.msra.mxu0 0.0
    %2392 = vmatprep.subr.mxu0 0.0
    %2393 = vmatpush1.msra.mxu0 0.0
    %2394 = vmatprep.subr.mxu0 0.0
    %2395 = vmatpush1.msra.mxu0 0.0
    %2396 = vmatprep.subr.mxu0 0.0
    %2397 = vmatpush1.msra.mxu0 0.0
    %2398 = vmatprep.mubr.f32.mxu0 0.0
    %2399 = vmatmul.mubr.f32.gmra.mrb[0].mxu0 %v2332
    %v2400 = vpop.f32.mrb[0].mxu0
    %v2401 = vadd.f32 %v1006, %v2400
    %v2402 = vpop.f32.mrb[0].mxu0
    %2403 = vdwg.mxu0
    %v2405 = vsel %vm39, %v2328, 0
    %2407 = vmatprep.subr.mxu0 0.0
    %2408 = vmatpush1.msra.mxu0 %v990
    %2409 = vmatprep.subr.mxu0 0.0
    %2410 = vmatpush1.msra.mxu0 %v991
    %2411 = vmatprep.subr.mxu0 0.0
    %2412 = vmatpush1.msra.mxu0 %v992
    %2413 = vmatprep.subr.mxu0 0.0
    %2414 = vmatpush1.msra.mxu0 %v993
    %2415 = vmatprep.subr.mxu0 0.0
    %2416 = vmatpush1.msra.mxu0 0.0
    %2417 = vmatprep.subr.mxu0 0.0
    %2418 = vmatpush1.msra.mxu0 0.0
    %2419 = vmatprep.subr.mxu0 0.0
    %2420 = vmatpush1.msra.mxu0 0.0
    %2421 = vmatprep.subr.mxu0 0.0
    %2422 = vmatpush1.msra.mxu0 0.0
    %2423 = vmatprep.subr.mxu0 0.0
    %2424 = vmatpush1.msra.mxu0 0.0
    %2425 = vmatprep.subr.mxu0 0.0
    %2426 = vmatpush1.msra.mxu0 0.0
    %2427 = vmatprep.subr.mxu0 0.0
    %2428 = vmatpush1.msra.mxu0 0.0
    %2429 = vmatprep.subr.mxu0 0.0
    %2430 = vmatpush1.msra.mxu0 0.0
    %2431 = vmatprep.subr.mxu0 0.0
    %2432 = vmatpush1.msra.mxu0 0.0
    %2433 = vmatprep.subr.mxu0 0.0
    %2434 = vmatpush1.msra.mxu0 0.0
    %2435 = vmatprep.subr.mxu0 0.0
    %2436 = vmatpush1.msra.mxu0 0.0
    %2437 = vmatprep.subr.mxu0 0.0
    %2438 = vmatpush1.msra.mxu0 0.0
    %2439 = vmatprep.subr.mxu0 0.0
    %2440 = vmatpush1.msra.mxu0 0.0
    %2441 = vmatprep.subr.mxu0 0.0
    %2442 = vmatpush1.msra.mxu0 0.0
    %2443 = vmatprep.subr.mxu0 0.0
    %2444 = vmatpush1.msra.mxu0 0.0
    %2445 = vmatprep.subr.mxu0 0.0
    %2446 = vmatpush1.msra.mxu0 0.0
    %2447 = vmatprep.subr.mxu0 0.0
    %2448 = vmatpush1.msra.mxu0 0.0
    %2449 = vmatprep.subr.mxu0 0.0
    %2450 = vmatpush1.msra.mxu0 0.0
    %2451 = vmatprep.subr.mxu0 0.0
    %2452 = vmatpush1.msra.mxu0 0.0
    %2453 = vmatprep.subr.mxu0 0.0
    %2454 = vmatpush1.msra.mxu0 0.0
    %2455 = vmatprep.subr.mxu0 0.0
    %2456 = vmatpush1.msra.mxu0 0.0
    %2457 = vmatprep.subr.mxu0 0.0
    %2458 = vmatpush1.msra.mxu0 0.0
    %2459 = vmatprep.subr.mxu0 0.0
    %2460 = vmatpush1.msra.mxu0 0.0
    %2461 = vmatprep.subr.mxu0 0.0
    %2462 = vmatpush1.msra.mxu0 0.0
    %2463 = vmatprep.subr.mxu0 0.0
    %2464 = vmatpush1.msra.mxu0 0.0
    %2465 = vmatprep.subr.mxu0 0.0
    %2466 = vmatpush1.msra.mxu0 0.0
    %2467 = vmatprep.subr.mxu0 0.0
    %2468 = vmatpush1.msra.mxu0 0.0
    %2469 = vmatprep.subr.mxu0 0.0
    %2470 = vmatpush1.msra.mxu0 0.0
    %2471 = vmatprep.mubr.f32.mxu0 0.0
    %2472 = vmatmul.mubr.f32.gmra.mrb[0].mxu0 %v2405
    %v2473 = vpop.f32.mrb[0].mxu0
    %v2474 = vadd.f32 0.0, %v2473
    %v2475 = vpop.f32.mrb[0].mxu0
    %2476 = vdwg.mxu0
    %v2477 = vadd.f32 %v2401, %v2474
    %v2478 = vtanh.pop %v2477
    %v2479 = vxor.u32 %v2477, 2147483648
    %v2480 = vmul.f32 %v2479, 1.442695
    %v2481 = vpow.pop %v2480
    %v2482 = vadd.f32 %v2481, 1.0
    %v2483 = vrcp.pop %v2482
    %v2484 = vmul.f32 1.0, %v2483
    %v2485 = vsel %vm28, %v2478, %v2484
    %2487 = vrot.lane.b32.xlu0 %v2329, 32
    %v2488 = vpop.permute.xlu0 %2487
    %v2490 = vmul.f32 %v2485, %v2488
    %2492 = vrot.lane.b32.xlu0 %v2485, 64
    %v2493 = vpop.permute.xlu0 %2492
    %v2495 = vmul.f32 %v2485, %v2493
    %2497 = vrot.lane.b32.xlu0 %v2495, 32
    %v2498 = vpop.permute.xlu0 %2497
    %v2500 = vadd.f32 %v2490, %v2498
    %v2501 = vtanh.pop %v2500
    %2503 = vrot.lane.b32.xlu0 %v2501, 64
    %v2504 = vpop.permute.xlu0 %2503
    %v2506 = vmul.f32 %v2485, %v2504
    %2508 = vrot.lane.b32.xlu0 %v2506, 32
    %v2509 = vpop.permute.xlu0 %2508
    %2511 = vst.msk [vmem:[#allocation3] sm:$0x3] %vm29, %v2509
    %2513 = vrot.lane.b32.xlu0 %v2500, 96
    %v2514 = vpop.permute.xlu0 %2513
    %2516 = vst.msk [vmem:[#allocation4] sm:$0x3] %vm29, %v2514
    %v2517 = vld [vmem:[#allocation3] sm:$0x3]
    %v2518 = vld [vmem:[%s4] sm:$0xff]
    %v2519 = vld [vmem:[%s4 + $0x8] sm:$0xff]
    %v2520 = vld [vmem:[%s4 + $0x10] sm:$0xff]
    %v2521 = vld [vmem:[%s4 + $0x18] sm:$0xff]
    %v2522 = vld [vmem:[%s5] sm:$0x1]
    %v2524 = vlaneseq
    %v2525 = vshrl.u32 %v2524, 7
    %v2526 = vsub.s32 0, %v2525
    %v2527 = vrot.slane %v2522, %v2526
    %v2530 = vsel %vm39, %v2517, 0
    %2532 = vmatprep.subr.mxu0 0.0
    %2533 = vmatpush1.msra.mxu0 %v2518
    %2534 = vmatprep.subr.mxu0 0.0
    %2535 = vmatpush1.msra.mxu0 %v2519
    %2536 = vmatprep.subr.mxu0 0.0
    %2537 = vmatpush1.msra.mxu0 %v2520
    %2538 = vmatprep.subr.mxu0 0.0
    %2539 = vmatpush1.msra.mxu0 %v2521
    %2540 = vmatprep.subr.mxu0 0.0
    %2541 = vmatpush1.msra.mxu0 0.0
    %2542 = vmatprep.subr.mxu0 0.0
    %2543 = vmatpush1.msra.mxu0 0.0
    %2544 = vmatprep.subr.mxu0 0.0
    %2545 = vmatpush1.msra.mxu0 0.0
    %2546 = vmatprep.subr.mxu0 0.0
    %2547 = vmatpush1.msra.mxu0 0.0
    %2548 = vmatprep.subr.mxu0 0.0
    %2549 = vmatpush1.msra.mxu0 0.0
    %2550 = vmatprep.subr.mxu0 0.0
    %2551 = vmatpush1.msra.mxu0 0.0
    %2552 = vmatprep.subr.mxu0 0.0
    %2553 = vmatpush1.msra.mxu0 0.0
    %2554 = vmatprep.subr.mxu0 0.0
    %2555 = vmatpush1.msra.mxu0 0.0
    %2556 = vmatprep.subr.mxu0 0.0
    %2557 = vmatpush1.msra.mxu0 0.0
    %2558 = vmatprep.subr.mxu0 0.0
    %2559 = vmatpush1.msra.mxu0 0.0
    %2560 = vmatprep.subr.mxu0 0.0
    %2561 = vmatpush1.msra.mxu0 0.0
    %2562 = vmatprep.subr.mxu0 0.0
    %2563 = vmatpush1.msra.mxu0 0.0
    %2564 = vmatprep.subr.mxu0 0.0
    %2565 = vmatpush1.msra.mxu0 0.0
    %2566 = vmatprep.subr.mxu0 0.0
    %2567 = vmatpush1.msra.mxu0 0.0
    %2568 = vmatprep.subr.mxu0 0.0
    %2569 = vmatpush1.msra.mxu0 0.0
    %2570 = vmatprep.subr.mxu0 0.0
    %2571 = vmatpush1.msra.mxu0 0.0
    %2572 = vmatprep.subr.mxu0 0.0
    %2573 = vmatpush1.msra.mxu0 0.0
    %2574 = vmatprep.subr.mxu0 0.0
    %2575 = vmatpush1.msra.mxu0 0.0
    %2576 = vmatprep.subr.mxu0 0.0
    %2577 = vmatpush1.msra.mxu0 0.0
    %2578 = vmatprep.subr.mxu0 0.0
    %2579 = vmatpush1.msra.mxu0 0.0
    %2580 = vmatprep.subr.mxu0 0.0
    %2581 = vmatpush1.msra.mxu0 0.0
    %2582 = vmatprep.subr.mxu0 0.0
    %2583 = vmatpush1.msra.mxu0 0.0
    %2584 = vmatprep.subr.mxu0 0.0
    %2585 = vmatpush1.msra.mxu0 0.0
    %2586 = vmatprep.subr.mxu0 0.0
    %2587 = vmatpush1.msra.mxu0 0.0
    %2588 = vmatprep.subr.mxu0 0.0
    %2589 = vmatpush1.msra.mxu0 0.0
    %2590 = vmatprep.subr.mxu0 0.0
    %2591 = vmatpush1.msra.mxu0 0.0
    %2592 = vmatprep.subr.mxu0 0.0
    %2593 = vmatpush1.msra.mxu0 0.0
    %2594 = vmatprep.subr.mxu0 0.0
    %2595 = vmatpush1.msra.mxu0 0.0
    %2596 = vmatprep.mubr.f32.mxu0 0.0
    %2597 = vmatmul.mubr.f32.gmra.mrb[0].mxu0 %v2530
    %v2598 = vpop.f32.mrb[0].mxu0
    %v2599 = vadd.f32 %v2527, %v2598
    %v2600 = vpop.f32.mrb[0].mxu0
    %2601 = vdwg.mxu0
    %vm2602 = vcmask 25600
    %2603 = vst.msk [vmem:[#allocation5] sm:$0x3] %vm2602, %v2599
    // Predicated region
    $region26: #{rnn_forward.1} parent=1 // pred_check
      _
    $region27: #{rnn_forward.1} parent=1 // pred_check_branch
      %2605 = sbr.rel (0) target = $region29
    $region28: #{rnn_forward.1} parent=1 // pred_region
      %s2607 = ssub.s32 32, 32
      %2608 = vsyncadd [#allocation6], %s2607
      %s2610 = sshll.u32 [#allocation5], 4
      %s2611 = int_to_ptr.vmem [resolvable:$true] %s2610
      %2613 = dma.vmem_to_hbm [thread:$0]  %s2611, 32, %s6, [#allocation6]
    $region29: #{rnn_forward.1} parent=1 // pred_fallthru
      _
    // Predicated region
    $region30: #{rnn_forward.1} parent=1 // pred_check
      _
    $region31: #{rnn_forward.1} parent=1 // pred_check_branch
      %2615 = sbr.rel (0) target = $region33
    $region32: #{rnn_forward.1} parent=1 // pred_region
      %2616 = dma.done [#allocation6], 32
    $region33: #{rnn_forward.1} parent=1 // pred_fallthru
      _
    %2617 = vsyncpa [#allocation6], 1

</llo_original>
